<compile_context>
chip_gen: v6e
topology: v6e:2x2x1
jax: 0.10.0
libtpu: 0.0.40
codegen_flags: <defaults>
</compile_context>

<pallas_src>
import functools

import jax
import jax.numpy as jnp
from jax.experimental import pallas as pl
from jax.experimental.pallas import tpu as pltpu


def _round_up(n, m):
    return ((n + m - 1) // m) * m


def _mlp_kernel(x_ref, w1_ref, b1_ref, w2_ref, b2_ref, o_ref):
    # x_ref:  (tb, D)  f32       w1_ref: (D, H)   bf16    b1_ref: (1, H)    f32
    # w2_ref: (H, Op)  bf16      b2_ref: (1, Op)  f32     o_ref:  (tb, Op)  f32
    x = x_ref[...].astype(w1_ref.dtype)            # f32 -> bf16 cast on the VPU
    h = jnp.dot(x, w1_ref[...], preferred_element_type=jnp.float32)
    h = jnp.maximum(h + b1_ref[...], 0.0)          # f32 bias add + ReLU (VPU)
    h = h.astype(w2_ref.dtype)                     # bf16 for the 2nd MXU pass
    y = jnp.dot(h, w2_ref[...], preferred_element_type=jnp.float32) + b2_ref[...]
    o_ref[...] = y.astype(o_ref.dtype)


def prepare_params(w1, b1, w2, b2):
    """One-time parameter preparation (call once, outside the hot path).

    w1: (D, H), b1: (H,) or (1, H), w2: (H, O), b2: (O,) or (1, O)
    Returns (w1_bf16, b1_f32, w2_padded_bf16, b2_padded_f32) where the output
    dim of W2/b2 is zero-padded up to a full 128-lane tile.
    """
    H = w1.shape[1]
    O = w2.shape[1]
    O_pad = _round_up(O, 128)
    w1_b = w1.astype(jnp.bfloat16)
    b1_f = b1.astype(jnp.float32).reshape(1, H)
    w2_p = jnp.zeros((H, O_pad), jnp.bfloat16).at[:, :O].set(w2.astype(jnp.bfloat16))
    b2_p = jnp.zeros((1, O_pad), jnp.float32).at[:, :O].set(
        b2.astype(jnp.float32).reshape(1, O))
    return w1_b, b1_f, w2_p, b2_p


@functools.partial(jax.jit, static_argnames=("out_dim", "block_b"))
def diversifying_mlp_forward(x, w1_b, b1_f, w2_p, b2_p, *, out_dim, block_b=256):
    """Fused MLP forward.

    x: (B, D) float32; params come from prepare_params().
    Returns (B, out_dim) float32.
    """
    assert block_b % 128 == 0, "block_b must be MXU-aligned (multiple of 128)"
    B, D = x.shape
    H = w1_b.shape[1]
    O_pad = w2_p.shape[1]
    assert O_pad % 128 == 0, "params must be pre-padded via prepare_params()"

    # Batch tile: MXU-aligned, never larger than the (padded) batch; prefer
    # >= 4 grid steps (>= 2 per v7x TensorCore) so the x DMA pipeline has a
    # steady state on both cores.
    tb = min(block_b, _round_up(B, 128))
    while tb > 128 and _round_up(B, tb) // tb < 4:
        tb -= 128
    B_pad = _round_up(B, tb)

    # Only materialize a padded copy of x when the batch is not a tile
    # multiple; otherwise feed x straight through (f32, cast in-kernel).
    if B_pad != B:
        x_in = jnp.zeros((B_pad, D), x.dtype).at[:B].set(x)
    else:
        x_in = x

    grid = (B_pad // tb,)

    cost = pl.CostEstimate(
        flops=2 * B_pad * D * H + 2 * B_pad * H * O_pad,
        transcendentals=0,
        bytes_accessed=(B_pad * D * 4          # x (f32)
                        + D * H * 2            # W1 (bf16)
                        + H * 4                # b1 (f32)
                        + H * O_pad * 2        # W2 (bf16)
                        + O_pad * 4            # b2 (f32)
                        + B_pad * O_pad * 4))  # out (f32)

    out = pl.pallas_call(
        _mlp_kernel,
        out_shape=jax.ShapeDtypeStruct((B_pad, O_pad), jnp.float32),
        grid_spec=pltpu.PrefetchScalarGridSpec(
            num_scalar_prefetch=0,
            grid=grid,
            in_specs=[
                # x tile: streamed, default double-buffered.
                pl.BlockSpec((tb, D), lambda i: (i, 0)),
                # Resident weights/biases: constant index map + single buffer.
                pl.BlockSpec((D, H), lambda i: (0, 0),
                             pipeline_mode=pl.Buffered(buffer_count=1)),
                pl.BlockSpec((1, H), lambda i: (0, 0),
                             pipeline_mode=pl.Buffered(buffer_count=1)),
                pl.BlockSpec((H, O_pad), lambda i: (0, 0),
                             pipeline_mode=pl.Buffered(buffer_count=1)),
                pl.BlockSpec((1, O_pad), lambda i: (0, 0),
                             pipeline_mode=pl.Buffered(buffer_count=1)),
            ],
            out_specs=pl.BlockSpec((tb, O_pad), lambda i: (i, 0)),
        ),
        compiler_params=pltpu.CompilerParams(
            dimension_semantics=("parallel",),
            vmem_limit_bytes=32 * 1024 * 1024,   # raise v5e's 16 MiB default
        ),
        cost_estimate=cost,
    )(x_in, w1_b, b1_f, w2_p, b2_p)

    return out[:B, :out_dim]


def init_params(key, input_dim=2048, hidden_dim=512, output_dim=10,
                dtype=jnp.float32):
    """Deterministic init matching the PyTorch module's __init__ semantics:
    kaiming_normal_(mode='fan_out', nonlinearity='relu') for weights,
    default uniform(-1/sqrt(fan_in), 1/sqrt(fan_in)) for biases.
    Weights are returned already transposed to (in, out)."""
    k1, k2, k3, k4 = jax.random.split(key, 4)

    # Layer 1: PyTorch weight shape (512, input_dim); fan_out = 512.
    std1 = (2.0 / hidden_dim) ** 0.5
    w1 = std1 * jax.random.normal(k1, (input_dim, hidden_dim), dtype)
    bound1 = 1.0 / (input_dim ** 0.5)
    b1 = jax.random.uniform(k2, (1, hidden_dim), dtype, -bound1, bound1)

    # Layer 2: PyTorch weight shape (output_dim, 512); fan_out = output_dim.
    std2 = (2.0 / output_dim) ** 0.5
    w2 = std2 * jax.random.normal(k3, (hidden_dim, output_dim), dtype)
    bound2 = 1.0 / (hidden_dim ** 0.5)
    b2 = jax.random.uniform(k4, (1, output_dim), dtype, -bound2, bound2)

    return w1, b1, w2, b2


if __name__ == "__main__":
    key = jax.random.PRNGKey(0)
    k_x, k_p = jax.random.split(key)

    # Module's natural dims; batch chosen small but large enough that the grid
    # gets 4 tiles of 128 rows (>= 2 per v7x TensorCore).
    B, D, H, O = 512, 2048, 512, 10
    x = jax.random.normal(k_x, (B, D), jnp.float32)
    w1, b1, w2, b2 = init_params(k_p, input_dim=D, hidden_dim=H, output_dim=O)

    # One-time weight prep (bf16 cast + lane-dense padding) outside the hot path.
    w1_b, b1_f, w2_p, b2_p = prepare_params(w1, b1, w2, b2)

    out = diversifying_mlp_forward(x, w1_b, b1_f, w2_p, b2_p,
                                   out_dim=O, block_b=256)
    out = jax.block_until_ready(out)

    # Pure-JAX reference mirroring the kernel's numerics (bf16 MXU operands,
    # f32 accumulation). NOTE: vs a true fp32 PyTorch forward, expect ~1e-2
    # relative error from the bf16 casts — this is intentional.
    f32 = jnp.float32
    hi = jax.lax.Precision.HIGHEST
    xb = x.astype(jnp.bfloat16).astype(f32)
    w1r = w1.astype(jnp.bfloat16).astype(f32)
    w2r = w2.astype(jnp.bfloat16).astype(f32)
    h_ref = jnp.maximum(jnp.dot(xb, w1r, precision=hi) + b1, 0.0)
    hb = h_ref.astype(jnp.bfloat16).astype(f32)
    ref = jnp.dot(hb, w2r, precision=hi) + b2

    assert out.shape == (B, O)
    assert jnp.allclose(out, ref, atol=5e-2, rtol=5e-2), float(
        jnp.max(jnp.abs(out - ref)))

    print("KERNEL_OK")
</pallas_src>

<mosaic_0001>
module attributes {stable_mosaic.version = 11 : i64} {
  func.func @_mlp_kernel(%arg0: i32, %arg1: memref<128x2048xf32, #tpu.memory_space<vmem>>, %arg2: memref<2048x512xbf16, #tpu.memory_space<vmem>>, %arg3: memref<1x512xf32, #tpu.memory_space<vmem>>, %arg4: memref<512x128xbf16, #tpu.memory_space<vmem>>, %arg5: memref<1x128xf32, #tpu.memory_space<vmem>>, %arg6: memref<128x128xf32, #tpu.memory_space<vmem>>) attributes {dimension_semantics = [#tpu.dimension_semantics<parallel>], iteration_bounds = array<i64: 4>, scalar_prefetch = 0 : i64, scratch_operands = 0 : i64, tpu.core_type = #tpu.core_type<tc>, window_params = [{transform_indices = @transform_0, window_bounds = array<i64: 128, 2048>}, {pipeline_mode = #tpu.pipeline_mode<synchronous>, transform_indices = @transform_1, window_bounds = array<i64: 2048, 512>}, {pipeline_mode = #tpu.pipeline_mode<synchronous>, transform_indices = @transform_2, window_bounds = array<i64: 1, 512>}, {pipeline_mode = #tpu.pipeline_mode<synchronous>, transform_indices = @transform_3, window_bounds = array<i64: 512, 128>}, {pipeline_mode = #tpu.pipeline_mode<synchronous>, transform_indices = @transform_4, window_bounds = array<i64: 1, 128>}, {transform_indices = @transform_5, window_bounds = array<i64: 128, 128>}]} {
    %c0 = arith.constant 0 : index
    %c0_0 = arith.constant 0 : index
    %0 = vector.load %arg1[%c0, %c0_0] : memref<128x2048xf32, #tpu.memory_space<vmem>>, vector<128x2048xf32>
    %1 = arith.truncf %0 : vector<128x2048xf32> to vector<128x2048xbf16>
    %c0_1 = arith.constant 0 : index
    %c0_2 = arith.constant 0 : index
    %2 = vector.load %arg2[%c0_1, %c0_2] : memref<2048x512xbf16, #tpu.memory_space<vmem>>, vector<2048x512xbf16>
    %cst = arith.constant dense<0.000000e+00> : vector<128x512xf32>
    %3 = tpu.matmul %1, %2, %cst {dimension_numbers = #tpu.dot_dimension_numbers<[1], [0], [0], [1], [0, 0, 1, 1], [], []>} : vector<128x2048xbf16>, vector<2048x512xbf16>, vector<128x512xf32> -> vector<128x512xf32>
    %c0_3 = arith.constant 0 : index
    %c0_4 = arith.constant 0 : index
    %4 = vector.load %arg3[%c0_3, %c0_4] : memref<1x512xf32, #tpu.memory_space<vmem>>, vector<1x512xf32>
    %5 = vector.broadcast %4 : vector<1x512xf32> to vector<128x512xf32>
    %6 = arith.addf %3, %5 : vector<128x512xf32>
    %cst_5 = arith.constant 0.000000e+00 : f32
    %7 = vector.broadcast %cst_5 : f32 to vector<128x512xf32>
    %8 = arith.maximumf %6, %7 : vector<128x512xf32>
    %9 = arith.truncf %8 : vector<128x512xf32> to vector<128x512xbf16>
    %c0_6 = arith.constant 0 : index
    %c0_7 = arith.constant 0 : index
    %10 = vector.load %arg4[%c0_6, %c0_7] : memref<512x128xbf16, #tpu.memory_space<vmem>>, vector<512x128xbf16>
    %cst_8 = arith.constant dense<0.000000e+00> : vector<128x128xf32>
    %11 = tpu.matmul %9, %10, %cst_8 {dimension_numbers = #tpu.dot_dimension_numbers<[1], [0], [0], [1], [0, 0, 1, 1], [], []>} : vector<128x512xbf16>, vector<512x128xbf16>, vector<128x128xf32> -> vector<128x128xf32>
    %c0_9 = arith.constant 0 : index
    %c0_10 = arith.constant 0 : index
    %12 = vector.load %arg5[%c0_9, %c0_10] : memref<1x128xf32, #tpu.memory_space<vmem>>, vector<1x128xf32>
    %13 = vector.broadcast %12 : vector<1x128xf32> to vector<128x128xf32>
    %14 = arith.addf %11, %13 : vector<128x128xf32>
    %c0_11 = arith.constant 0 : index
    %c0_12 = arith.constant 0 : index
    %15 = vector.load %arg6[%c0_11, %c0_12] : memref<128x128xf32, #tpu.memory_space<vmem>>, vector<128x128xf32>
    tpu.vector_store %arg6[%c0_11, %c0_12], %14 {strides = array<i32>} : memref<128x128xf32, #tpu.memory_space<vmem>>, vector<128x128xf32>,
    return
  }
  func.func @transform_0(%arg0: i32) -> (i32, i32) {
    %c0_i32 = arith.constant 0 : i32
    %c0_i32_0 = arith.constant 0 : i32
    return %arg0, %c0_i32 : i32, i32
  }
  func.func @transform_1(%arg0: i32) -> (i32, i32) {
    %c0_i32 = arith.constant 0 : i32
    %c0_i32_0 = arith.constant 0 : i32
    %c0_i32_1 = arith.constant 0 : i32
    return %c0_i32, %c0_i32_0 : i32, i32
  }
  func.func @transform_2(%arg0: i32) -> (i32, i32) {
    %c0_i32 = arith.constant 0 : i32
    %c0_i32_0 = arith.constant 0 : i32
    %c0_i32_1 = arith.constant 0 : i32
    return %c0_i32, %c0_i32_0 : i32, i32
  }
  func.func @transform_3(%arg0: i32) -> (i32, i32) {
    %c0_i32 = arith.constant 0 : i32
    %c0_i32_0 = arith.constant 0 : i32
    %c0_i32_1 = arith.constant 0 : i32
    return %c0_i32, %c0_i32_0 : i32, i32
  }
  func.func @transform_4(%arg0: i32) -> (i32, i32) {
    %c0_i32 = arith.constant 0 : i32
    %c0_i32_0 = arith.constant 0 : i32
    %c0_i32_1 = arith.constant 0 : i32
    return %c0_i32, %c0_i32_0 : i32, i32
  }
  func.func @transform_5(%arg0: i32) -> (i32, i32) {
    %c0_i32 = arith.constant 0 : i32
    %c0_i32_0 = arith.constant 0 : i32
    return %arg0, %c0_i32 : i32, i32
  }
}

</mosaic_0001>

<llo_original>
// kernel: diversifying_mlp_forward.1
$region0: #{diversifying_mlp_forward.1}
  #allocation0 [shape = 'u32[]', space=smem, size = 0x4, offset = 0x4, fixed_abs, tag = 'smem constant byte address 0x4 - core index']
  #allocation1 [shape = 'u32[144,128]{1,0:T(1,128)}', space=vmem, size = 0x12000, scoped, tag = 'internal scratch']
  %s0 = inlined_call_operand.hbm [shape: f32[512,2048], index: 0, kind: input, shape index: {}]
  %s1 = inlined_call_operand.hbm [shape: bf16[2048,512], index: 1, kind: input, shape index: {}]
  %s2 = inlined_call_operand.hbm [shape: f32[1,512], index: 2, kind: input, shape index: {}]
  %s3 = inlined_call_operand.hbm [shape: bf16[512,128], index: 3, kind: input, shape index: {}]
  %s4 = inlined_call_operand.hbm [shape: f32[1,128], index: 4, kind: input, shape index: {}]
  %s5 = inlined_call_operand.vmem [shape: f32[512,128], index: 5, kind: output, shape index: {}]
  %s6 = sld [smem:[#allocation0]]
  $region73: #{diversifying_mlp_forward.1} parent=0
    _
  %s8 = ssub.s32 1, %s6
  %s9 = scalar_select 0, %s8, %s6
  $region1: #{diversifying_mlp_forward.1} parent=0
    #allocation2 [shape = 'u8[2097152]{0}', space=vmem, size = 0x200000, scoped, tag = 'input window, operand 0']
    #allocation3 [shape = 's32[2]{0}', space=sflag, size = 0x8, scoped, tag = 'scoped memory for diversifying_mlp_forward.1']
    #allocation4 [shape = 'u8[2097152]{0}', space=vmem, size = 0x200000, scoped, tag = 'input window, operand 1, single buffered']
    #allocation5 [shape = 's32[1]{0}', space=sflag, size = 0x4, scoped, tag = 'scoped memory for diversifying_mlp_forward.1']
    #allocation6 [shape = 'u8[2048]{0}', space=vmem, size = 0x800, scoped, tag = 'input window, operand 2, single buffered']
    #allocation7 [shape = 'u8[131072]{0}', space=vmem, size = 0x20000, scoped, tag = 'input window, operand 3, single buffered']
    #allocation8 [shape = 's32[1]{0}', space=sflag, size = 0x4, scoped, tag = 'scoped memory for diversifying_mlp_forward.1']
    #allocation9 [shape = 'u8[512]{0}', space=vmem, size = 0x400, scoped, tag = 'input window, operand 4, single buffered']
    %10 = vsyncpa [#allocation3], 0
    %s11 = scalar_lea.sflag [#allocation3], 1
    %12 = vsyncpa %s11, 0
    %13 = vsyncpa [#allocation5], 0
    %14 = vsyncpa [#allocation8], 0
    loop: start=0, step=1, limit=6
    $region2: #{diversifying_mlp_forward.1} parent=1 // loop_pre_header
      _
    $region3: #{diversifying_mlp_forward.1} parent=1 // loop_header
      %s16 = sphi 0, %s20
      %p17 = scmp.ge.s32.totalorder %s16, 6
      %s26 = sphi 0, %s28
      %s29 = sphi 0, %s26
      %s30 = sphi 0, %s29
      %s46 = sphi 0, %s30
      %s50 = sphi 0, %s50
      %s52 = sphi 0, %s50
      %s53 = sphi 0, %s52
      %s67 = sphi 0, %s53
      %s71 = sphi 0, %s71
      %s73 = sphi 0, %s71
      %s74 = sphi 0, %s73
      %s88 = sphi 0, %s74
      %s92 = sphi 0, %s92
      %s94 = sphi 0, %s92
      %s95 = sphi 0, %s94
      %s109 = sphi 0, %s95
      %s113 = sphi 0, %s113
      %s115 = sphi 0, %s113
      %s116 = sphi 0, %s115
      %s130 = sphi 0, %s116
      %s136 = sphi 0, %s138
      %s139 = sphi 0, %s136
      %s140 = sphi 0, %s139
      %s156 = sphi 0, %s140
    $region4: #{diversifying_mlp_forward.1} parent=1 // loop_header_branch
      %19 = sbr.rel (%p17) target = $region8
    $region5: #{diversifying_mlp_forward.1} parent=1 // loop_body
      %s21 = ssub.s32 %s16, 1
      %s22 = ssub.s32 %s16, 2
      %s23 = sadd.s32 %s16, 1
      %s24 = ssub.s32 %s16, %s23
      %p25 = scmp.eq.s32.totalorder %s24, 0
      %s27 = sadd.s32 %s26, 1
      %s28 = scalar_select %p25, %s26, %s27
      %p31 = pneg %p25
      %p32 = scmp.eq.s32.totalorder %s16, 3
      %p33 = por %p31, %p32
      %p34 = scmp.ne.s32.totalorder %s26, %s29
      %p35 = scmp.eq.s32.totalorder %s16, 0
      %p36 = por %p34, %p35
      %p37 = scmp.ne.s32.totalorder %s26, %s29
      %p38 = scmp.eq.s32.totalorder %s21, 3
      %p39 = por %p37, %p38
      %p40 = scmp.ne.s32.totalorder %s29, %s30
      %p41 = scmp.eq.s32.totalorder %s21, 0
      %p42 = por %p40, %p41
      %p43 = scmp.ne.s32.totalorder %s29, %s30
      %p44 = scmp.eq.s32.totalorder %s22, 3
      %p45 = por %p43, %p44
      %p47 = scmp.ne.s32.totalorder %s30, %s46
      %p48 = scmp.eq.s32.totalorder %s22, 0
      %p49 = por %p47, %p48
      %s51 = sadd.s32 %s50, 1
      %p54 = scmp.eq.s32.totalorder %s16, 3
      %p55 = scmp.ne.s32.totalorder %s50, %s52
      %p56 = scmp.eq.s32.totalorder %s16, 0
      %p57 = por %p55, %p56
      %p58 = scmp.ne.s32.totalorder %s50, %s52
      %p59 = scmp.eq.s32.totalorder %s21, 3
      %p60 = por %p58, %p59
      %p61 = scmp.ne.s32.totalorder %s52, %s53
      %p62 = scmp.eq.s32.totalorder %s21, 0
      %p63 = por %p61, %p62
      %p64 = scmp.ne.s32.totalorder %s52, %s53
      %p65 = scmp.eq.s32.totalorder %s22, 3
      %p66 = por %p64, %p65
      %p68 = scmp.ne.s32.totalorder %s53, %s67
      %p69 = scmp.eq.s32.totalorder %s22, 0
      %p70 = por %p68, %p69
      %s72 = sadd.s32 %s71, 1
      %p75 = scmp.eq.s32.totalorder %s16, 3
      %p76 = scmp.ne.s32.totalorder %s71, %s73
      %p77 = scmp.eq.s32.totalorder %s16, 0
      %p78 = por %p76, %p77
      %p79 = scmp.ne.s32.totalorder %s71, %s73
      %p80 = scmp.eq.s32.totalorder %s21, 3
      %p81 = por %p79, %p80
      %p82 = scmp.ne.s32.totalorder %s73, %s74
      %p83 = scmp.eq.s32.totalorder %s21, 0
      %p84 = por %p82, %p83
      %p85 = scmp.ne.s32.totalorder %s73, %s74
      %p86 = scmp.eq.s32.totalorder %s22, 3
      %p87 = por %p85, %p86
      %p89 = scmp.ne.s32.totalorder %s74, %s88
      %p90 = scmp.eq.s32.totalorder %s22, 0
      %p91 = por %p89, %p90
      %s93 = sadd.s32 %s92, 1
      %p96 = scmp.eq.s32.totalorder %s16, 3
      %p97 = scmp.ne.s32.totalorder %s92, %s94
      %p98 = scmp.eq.s32.totalorder %s16, 0
      %p99 = por %p97, %p98
      %p100 = scmp.ne.s32.totalorder %s92, %s94
      %p101 = scmp.eq.s32.totalorder %s21, 3
      %p102 = por %p100, %p101
      %p103 = scmp.ne.s32.totalorder %s94, %s95
      %p104 = scmp.eq.s32.totalorder %s21, 0
      %p105 = por %p103, %p104
      %p106 = scmp.ne.s32.totalorder %s94, %s95
      %p107 = scmp.eq.s32.totalorder %s22, 3
      %p108 = por %p106, %p107
      %p110 = scmp.ne.s32.totalorder %s95, %s109
      %p111 = scmp.eq.s32.totalorder %s22, 0
      %p112 = por %p110, %p111
      %s114 = sadd.s32 %s113, 1
      %p117 = scmp.eq.s32.totalorder %s16, 3
      %p118 = scmp.ne.s32.totalorder %s113, %s115
      %p119 = scmp.eq.s32.totalorder %s16, 0
      %p120 = por %p118, %p119
      %p121 = scmp.ne.s32.totalorder %s113, %s115
      %p122 = scmp.eq.s32.totalorder %s21, 3
      %p123 = por %p121, %p122
      %p124 = scmp.ne.s32.totalorder %s115, %s116
      %p125 = scmp.eq.s32.totalorder %s21, 0
      %p126 = por %p124, %p125
      %p127 = scmp.ne.s32.totalorder %s115, %s116
      %p128 = scmp.eq.s32.totalorder %s22, 3
      %p129 = por %p127, %p128
      %p131 = scmp.ne.s32.totalorder %s116, %s130
      %p132 = scmp.eq.s32.totalorder %s22, 0
      %p133 = por %p131, %p132
      %s134 = ssub.s32 %s16, %s23
      %p135 = scmp.eq.s32.totalorder %s134, 0
      %s137 = sadd.s32 %s136, 1
      %s138 = scalar_select %p135, %s136, %s137
      %p141 = pneg %p135
      %p142 = scmp.eq.s32.totalorder %s16, 3
      %p143 = por %p141, %p142
      %p144 = scmp.ne.s32.totalorder %s136, %s139
      %p145 = scmp.eq.s32.totalorder %s16, 0
      %p146 = por %p144, %p145
      %p147 = scmp.ne.s32.totalorder %s136, %s139
      %p148 = scmp.eq.s32.totalorder %s21, 3
      %p149 = por %p147, %p148
      %p150 = scmp.ne.s32.totalorder %s139, %s140
      %p151 = scmp.eq.s32.totalorder %s21, 0
      %p152 = por %p150, %p151
      %p153 = scmp.ne.s32.totalorder %s139, %s140
      %p154 = scmp.eq.s32.totalorder %s22, 3
      %p155 = por %p153, %p154
      %p157 = scmp.ne.s32.totalorder %s140, %s156
      %p158 = scmp.eq.s32.totalorder %s22, 0
      %p159 = por %p157, %p158
      %p160 = scmp.le.s32.totalorder 1, %s16
      %p161 = scmp.lt.s32.totalorder %s16, 5
      %p162 = pnand %p160, %p161
      %p163 = pneg %p162
      // Predicated region
      $region9: #{diversifying_mlp_forward.1} parent=5 // pred_check
        _
      $region10: #{diversifying_mlp_forward.1} parent=5 // pred_check_branch
        %165 = sbr.rel (%p162) target = $region12
      $region11: #{diversifying_mlp_forward.1} parent=5 // pred_region
        %s166 = ssub.s32 %s16, 1
        // Predicated region
        $region13: #{diversifying_mlp_forward.1} parent=11 // pred_check
          %p167 = pneg %p63
        $region14: #{diversifying_mlp_forward.1} parent=11 // pred_check_branch
          %169 = sbr.rel (%p167) target = $region16
        $region15: #{diversifying_mlp_forward.1} parent=11 // pred_region
          %s171 = ssub.s32 65536, 65536
          %172 = vsyncadd [#allocation5], %s171
          %s173 = sshll.u32 [#allocation4], 4
          %s174 = int_to_ptr.vmem [resolvable:$true] %s173
          %179 = dma.hbm_to_vmem [thread:$0]  %s1, 65536, %s174, [#allocation5], 256, 256, 16
        $region16: #{diversifying_mlp_forward.1} parent=11 // pred_fallthru
          _
        // Predicated region
        $region17: #{diversifying_mlp_forward.1} parent=11 // pred_check
          %p180 = pneg %p84
        $region18: #{diversifying_mlp_forward.1} parent=11 // pred_check_branch
          %182 = sbr.rel (%p180) target = $region20
        $region19: #{diversifying_mlp_forward.1} parent=11 // pred_region
          %s184 = ssub.s32 64, 64
          %185 = vsyncadd [#allocation5], %s184
          %s187 = sshll.u32 [#allocation6], 4
          %s188 = int_to_ptr.vmem [resolvable:$true] %s187
          %190 = dma.hbm_to_vmem [thread:$0]  %s2, 64, %s188, [#allocation5]
        $region20: #{diversifying_mlp_forward.1} parent=11 // pred_fallthru
          _
        // Predicated region
        $region21: #{diversifying_mlp_forward.1} parent=11 // pred_check
          %p191 = pneg %p105
        $region22: #{diversifying_mlp_forward.1} parent=11 // pred_check_branch
          %193 = sbr.rel (%p191) target = $region24
        $region23: #{diversifying_mlp_forward.1} parent=11 // pred_region
          %s195 = ssub.s32 4096, 4096
          %196 = vsyncadd [#allocation8], %s195
          %s197 = sshll.u32 [#allocation7], 4
          %s198 = int_to_ptr.vmem [resolvable:$true] %s197
          %203 = dma.hbm_to_vmem [thread:$0]  %s3, 4096, %s198, [#allocation8], 64, 64, 4
        $region24: #{diversifying_mlp_forward.1} parent=11 // pred_fallthru
          _
        // Predicated region
        $region25: #{diversifying_mlp_forward.1} parent=11 // pred_check
          %p204 = pneg %p126
        $region26: #{diversifying_mlp_forward.1} parent=11 // pred_check_branch
          %206 = sbr.rel (%p204) target = $region28
        $region27: #{diversifying_mlp_forward.1} parent=11 // pred_region
          %s208 = ssub.s32 16, 16
          %209 = vsyncadd [#allocation8], %s208
          %s211 = sshll.u32 [#allocation9], 4
          %s212 = int_to_ptr.vmem [resolvable:$true] %s211
          %214 = dma.hbm_to_vmem [thread:$0]  %s4, 16, %s212, [#allocation8]
        $region28: #{diversifying_mlp_forward.1} parent=11 // pred_fallthru
          _
      $region12: #{diversifying_mlp_forward.1} parent=5 // pred_fallthru
        _
      %p215 = scmp.lt.s32.totalorder %s16, 4
      // Predicated region
      $region29: #{diversifying_mlp_forward.1} parent=5 // pred_check
        %p216 = pneg %p215
      $region30: #{diversifying_mlp_forward.1} parent=5 // pred_check_branch
        %218 = sbr.rel (%p216) target = $region32
      $region31: #{diversifying_mlp_forward.1} parent=5 // pred_region
        // Predicated region
        $region33: #{diversifying_mlp_forward.1} parent=31 // pred_check
          %p219 = pneg %p36
        $region34: #{diversifying_mlp_forward.1} parent=31 // pred_check_branch
          %221 = sbr.rel (%p219) target = $region36
        $region35: #{diversifying_mlp_forward.1} parent=31 // pred_region
          %s222 = sand.u32 %s26, 1
          %s223 = scalar_lea.sflag [#allocation3], %s222
          %s224 = sand.u32 %s26, 1
          %s225 = smul.addr %s224, 2048
          %s226 = scalar_lea.vmem [#allocation2], %s225
          %s227 = smul.u32 16, %s16
          %s229 = ssub.s32 32768, 32768
          %230 = vsyncadd %s223, %s229
          %s231 = smul.addr %s227, 16
          %s232 = smul.addr %s231, 128
          %s233 = scalar_lea.hbm %s0, %s232
          %s234 = sshll.u32 %s226, 4
          %s235 = int_to_ptr.vmem [resolvable:$true] %s234
          %240 = dma.hbm_to_vmem [thread:$0]  %s233, 32768, %s235, %s223, 2048, 2048, 128
        $region36: #{diversifying_mlp_forward.1} parent=31 // pred_fallthru
          _
      $region32: #{diversifying_mlp_forward.1} parent=5 // pred_fallthru
        _
      %p241 = scmp.le.s32.totalorder 1, %s16
      %p242 = scmp.lt.s32.totalorder %s16, 5
      %p243 = pnand %p241, %p242
      %p244 = pneg %p243
      // Predicated region
      $region37: #{diversifying_mlp_forward.1} parent=5 // pred_check
        _
      $region38: #{diversifying_mlp_forward.1} parent=5 // pred_check_branch
        %246 = sbr.rel (%p243) target = $region40
      $region39: #{diversifying_mlp_forward.1} parent=5 // pred_region
        %s247 = ssub.s32 %s16, 1
        %s248 = sand.u32 %s29, 1
        %s249 = scalar_lea.sflag [#allocation3], %s248
        %s250 = sand.u32 %s29, 1
        %s251 = smul.addr %s250, 2048
        %s252 = scalar_lea.vmem [#allocation2], %s251
        // Predicated region
        $region41: #{diversifying_mlp_forward.1} parent=39 // pred_check
          %p253 = pneg %p42
        $region42: #{diversifying_mlp_forward.1} parent=39 // pred_check_branch
          %255 = sbr.rel (%p253) target = $region44
        $region43: #{diversifying_mlp_forward.1} parent=39 // pred_region
          %256 = dma.done %s249, 32768
        $region44: #{diversifying_mlp_forward.1} parent=39 // pred_fallthru
          _
        // Predicated region
        $region45: #{diversifying_mlp_forward.1} parent=39 // pred_check
          %p257 = pneg %p63
        $region46: #{diversifying_mlp_forward.1} parent=39 // pred_check_branch
          %259 = sbr.rel (%p257) target = $region48
        $region47: #{diversifying_mlp_forward.1} parent=39 // pred_region
          %260 = dma.done [#allocation5], 65536
        $region48: #{diversifying_mlp_forward.1} parent=39 // pred_fallthru
          _
        // Predicated region
        $region49: #{diversifying_mlp_forward.1} parent=39 // pred_check
          %p261 = pneg %p84
        $region50: #{diversifying_mlp_forward.1} parent=39 // pred_check_branch
          %263 = sbr.rel (%p261) target = $region52
        $region51: #{diversifying_mlp_forward.1} parent=39 // pred_region
          %264 = dma.done [#allocation5], 64
        $region52: #{diversifying_mlp_forward.1} parent=39 // pred_fallthru
          _
        // Predicated region
        $region53: #{diversifying_mlp_forward.1} parent=39 // pred_check
          %p265 = pneg %p105
        $region54: #{diversifying_mlp_forward.1} parent=39 // pred_check_branch
          %267 = sbr.rel (%p265) target = $region56
        $region55: #{diversifying_mlp_forward.1} parent=39 // pred_region
          %268 = dma.done [#allocation8], 4096
        $region56: #{diversifying_mlp_forward.1} parent=39 // pred_fallthru
          _
        // Predicated region
        $region57: #{diversifying_mlp_forward.1} parent=39 // pred_check
          %p269 = pneg %p126
        $region58: #{diversifying_mlp_forward.1} parent=39 // pred_check_branch
          %271 = sbr.rel (%p269) target = $region60
        $region59: #{diversifying_mlp_forward.1} parent=39 // pred_region
          %272 = dma.done [#allocation8], 16
        $region60: #{diversifying_mlp_forward.1} parent=39 // pred_fallthru
          _
        %s273 = sand.u32 %s29, 1
        %s274 = scalar_lea.sflag [#allocation3], %s273
        %s275 = sand.u32 %s29, 1
        %s276 = smul.addr %s275, 2048
        %s277 = scalar_lea.vmem [#allocation2], %s276
        %p278 = pneg %p42
        %p279 = pneg %p39
        %p280 = pneg %p63
        %p281 = pneg %p60
        %p282 = pneg %p84
        %p283 = pneg %p81
        %p284 = pneg %p105
        %p285 = pneg %p102
        %p286 = pneg %p126
        %p287 = pneg %p123
        %p288 = pneg %p152
        %p289 = pneg %p149
        %s290 = smul.u32 16, %s21
        %p291 = scmp.lt.s32.totalorder %s290, 63
        %s292 = scalar_select %p291, %s290, 63
        %s293 = smul.addr %s292, 8
        %s294 = scalar_lea.vmem %s5, %s293
        %s295 = smul.u32 16, %s21
        %s296 = smul.u32 16, %s21
        %p297 = scmp.lt.s32.totalorder %s296, 63
        %s298 = scalar_select %p297, %s296, 63
        %s299 = smul.addr %s298, 8
        %s300 = scalar_lea.vmem %s5, %s299
        %s301 = smul.u32 16, %s21
        %v303 = vld [vmem:[%s252] sm:$0xff]
        %v304 = vld [vmem:[%s252 + $0x8] sm:$0xff]
        %v305 = vld [vmem:[%s252 + $0x10] sm:$0xff]
        %v306 = vld [vmem:[%s252 + $0x18] sm:$0xff]
        %v307 = vld [vmem:[%s252 + $0x20] sm:$0xff]
        %v308 = vld [vmem:[%s252 + $0x28] sm:$0xff]
        %v309 = vld [vmem:[%s252 + $0x30] sm:$0xff]
        %v310 = vld [vmem:[%s252 + $0x38] sm:$0xff]
        %v311 = vld [vmem:[%s252 + $0x40] sm:$0xff]
        %v312 = vld [vmem:[%s252 + $0x48] sm:$0xff]
        %v313 = vld [vmem:[%s252 + $0x50] sm:$0xff]
        %v314 = vld [vmem:[%s252 + $0x58] sm:$0xff]
        %v315 = vld [vmem:[%s252 + $0x60] sm:$0xff]
        %v316 = vld [vmem:[%s252 + $0x68] sm:$0xff]
        %v317 = vld [vmem:[%s252 + $0x70] sm:$0xff]
        %v318 = vld [vmem:[%s252 + $0x78] sm:$0xff]
        %v319 = vld [vmem:[%s252 + $0x80] sm:$0xff]
        %v320 = vld [vmem:[%s252 + $0x88] sm:$0xff]
        %v321 = vld [vmem:[%s252 + $0x90] sm:$0xff]
        %v322 = vld [vmem:[%s252 + $0x98] sm:$0xff]
        %v323 = vld [vmem:[%s252 + $0xa0] sm:$0xff]
        %v324 = vld [vmem:[%s252 + $0xa8] sm:$0xff]
        %v325 = vld [vmem:[%s252 + $0xb0] sm:$0xff]
        %v326 = vld [vmem:[%s252 + $0xb8] sm:$0xff]
        %v327 = vld [vmem:[%s252 + $0xc0] sm:$0xff]
        %v328 = vld [vmem:[%s252 + $0xc8] sm:$0xff]
        %v329 = vld [vmem:[%s252 + $0xd0] sm:$0xff]
        %v330 = vld [vmem:[%s252 + $0xd8] sm:$0xff]
        %v331 = vld [vmem:[%s252 + $0xe0] sm:$0xff]
        %v332 = vld [vmem:[%s252 + $0xe8] sm:$0xff]
        %v333 = vld [vmem:[%s252 + $0xf0] sm:$0xff]
        %v334 = vld [vmem:[%s252 + $0xf8] sm:$0xff]
        %v335 = vld [vmem:[%s252 + $0x100] sm:$0xff]
        %v336 = vld [vmem:[%s252 + $0x108] sm:$0xff]
        %v337 = vld [vmem:[%s252 + $0x110] sm:$0xff]
        %v338 = vld [vmem:[%s252 + $0x118] sm:$0xff]
        %v339 = vld [vmem:[%s252 + $0x120] sm:$0xff]
        %v340 = vld [vmem:[%s252 + $0x128] sm:$0xff]
        %v341 = vld [vmem:[%s252 + $0x130] sm:$0xff]
        %v342 = vld [vmem:[%s252 + $0x138] sm:$0xff]
        %v343 = vld [vmem:[%s252 + $0x140] sm:$0xff]
        %v344 = vld [vmem:[%s252 + $0x148] sm:$0xff]
        %v345 = vld [vmem:[%s252 + $0x150] sm:$0xff]
        %v346 = vld [vmem:[%s252 + $0x158] sm:$0xff]
        %v347 = vld [vmem:[%s252 + $0x160] sm:$0xff]
        %v348 = vld [vmem:[%s252 + $0x168] sm:$0xff]
        %v349 = vld [vmem:[%s252 + $0x170] sm:$0xff]
        %v350 = vld [vmem:[%s252 + $0x178] sm:$0xff]
        %v351 = vld [vmem:[%s252 + $0x180] sm:$0xff]
        %v352 = vld [vmem:[%s252 + $0x188] sm:$0xff]
        %v353 = vld [vmem:[%s252 + $0x190] sm:$0xff]
        %v354 = vld [vmem:[%s252 + $0x198] sm:$0xff]
        %v355 = vld [vmem:[%s252 + $0x1a0] sm:$0xff]
        %v356 = vld [vmem:[%s252 + $0x1a8] sm:$0xff]
        %v357 = vld [vmem:[%s252 + $0x1b0] sm:$0xff]
        %v358 = vld [vmem:[%s252 + $0x1b8] sm:$0xff]
        %v359 = vld [vmem:[%s252 + $0x1c0] sm:$0xff]
        %v360 = vld [vmem:[%s252 + $0x1c8] sm:$0xff]
        %v361 = vld [vmem:[%s252 + $0x1d0] sm:$0xff]
        %v362 = vld [vmem:[%s252 + $0x1d8] sm:$0xff]
        %v363 = vld [vmem:[%s252 + $0x1e0] sm:$0xff]
        %v364 = vld [vmem:[%s252 + $0x1e8] sm:$0xff]
        %v365 = vld [vmem:[%s252 + $0x1f0] sm:$0xff]
        %v366 = vld [vmem:[%s252 + $0x1f8] sm:$0xff]
        %v367 = vld [vmem:[%s252 + $0x200] sm:$0xff]
        %v368 = vld [vmem:[%s252 + $0x208] sm:$0xff]
        %v369 = vld [vmem:[%s252 + $0x210] sm:$0xff]
        %v370 = vld [vmem:[%s252 + $0x218] sm:$0xff]
        %v371 = vld [vmem:[%s252 + $0x220] sm:$0xff]
        %v372 = vld [vmem:[%s252 + $0x228] sm:$0xff]
        %v373 = vld [vmem:[%s252 + $0x230] sm:$0xff]
        %v374 = vld [vmem:[%s252 + $0x238] sm:$0xff]
        %v375 = vld [vmem:[%s252 + $0x240] sm:$0xff]
        %v376 = vld [vmem:[%s252 + $0x248] sm:$0xff]
        %v377 = vld [vmem:[%s252 + $0x250] sm:$0xff]
        %v378 = vld [vmem:[%s252 + $0x258] sm:$0xff]
        %v379 = vld [vmem:[%s252 + $0x260] sm:$0xff]
        %v380 = vld [vmem:[%s252 + $0x268] sm:$0xff]
        %v381 = vld [vmem:[%s252 + $0x270] sm:$0xff]
        %v382 = vld [vmem:[%s252 + $0x278] sm:$0xff]
        %v383 = vld [vmem:[%s252 + $0x280] sm:$0xff]
        %v384 = vld [vmem:[%s252 + $0x288] sm:$0xff]
        %v385 = vld [vmem:[%s252 + $0x290] sm:$0xff]
        %v386 = vld [vmem:[%s252 + $0x298] sm:$0xff]
        %v387 = vld [vmem:[%s252 + $0x2a0] sm:$0xff]
        %v388 = vld [vmem:[%s252 + $0x2a8] sm:$0xff]
        %v389 = vld [vmem:[%s252 + $0x2b0] sm:$0xff]
        %v390 = vld [vmem:[%s252 + $0x2b8] sm:$0xff]
        %v391 = vld [vmem:[%s252 + $0x2c0] sm:$0xff]
        %v392 = vld [vmem:[%s252 + $0x2c8] sm:$0xff]
        %v393 = vld [vmem:[%s252 + $0x2d0] sm:$0xff]
        %v394 = vld [vmem:[%s252 + $0x2d8] sm:$0xff]
        %v395 = vld [vmem:[%s252 + $0x2e0] sm:$0xff]
        %v396 = vld [vmem:[%s252 + $0x2e8] sm:$0xff]
        %v397 = vld [vmem:[%s252 + $0x2f0] sm:$0xff]
        %v398 = vld [vmem:[%s252 + $0x2f8] sm:$0xff]
        %v399 = vld [vmem:[%s252 + $0x300] sm:$0xff]
        %v400 = vld [vmem:[%s252 + $0x308] sm:$0xff]
        %v401 = vld [vmem:[%s252 + $0x310] sm:$0xff]
        %v402 = vld [vmem:[%s252 + $0x318] sm:$0xff]
        %v403 = vld [vmem:[%s252 + $0x320] sm:$0xff]
        %v404 = vld [vmem:[%s252 + $0x328] sm:$0xff]
        %v405 = vld [vmem:[%s252 + $0x330] sm:$0xff]
        %v406 = vld [vmem:[%s252 + $0x338] sm:$0xff]
        %v407 = vld [vmem:[%s252 + $0x340] sm:$0xff]
        %v408 = vld [vmem:[%s252 + $0x348] sm:$0xff]
        %v409 = vld [vmem:[%s252 + $0x350] sm:$0xff]
        %v410 = vld [vmem:[%s252 + $0x358] sm:$0xff]
        %v411 = vld [vmem:[%s252 + $0x360] sm:$0xff]
        %v412 = vld [vmem:[%s252 + $0x368] sm:$0xff]
        %v413 = vld [vmem:[%s252 + $0x370] sm:$0xff]
        %v414 = vld [vmem:[%s252 + $0x378] sm:$0xff]
        %v415 = vld [vmem:[%s252 + $0x380] sm:$0xff]
        %v416 = vld [vmem:[%s252 + $0x388] sm:$0xff]
        %v417 = vld [vmem:[%s252 + $0x390] sm:$0xff]
        %v418 = vld [vmem:[%s252 + $0x398] sm:$0xff]
        %v419 = vld [vmem:[%s252 + $0x3a0] sm:$0xff]
        %v420 = vld [vmem:[%s252 + $0x3a8] sm:$0xff]
        %v421 = vld [vmem:[%s252 + $0x3b0] sm:$0xff]
        %v422 = vld [vmem:[%s252 + $0x3b8] sm:$0xff]
        %v423 = vld [vmem:[%s252 + $0x3c0] sm:$0xff]
        %v424 = vld [vmem:[%s252 + $0x3c8] sm:$0xff]
        %v425 = vld [vmem:[%s252 + $0x3d0] sm:$0xff]
        %v426 = vld [vmem:[%s252 + $0x3d8] sm:$0xff]
        %v427 = vld [vmem:[%s252 + $0x3e0] sm:$0xff]
        %v428 = vld [vmem:[%s252 + $0x3e8] sm:$0xff]
        %v429 = vld [vmem:[%s252 + $0x3f0] sm:$0xff]
        %v430 = vld [vmem:[%s252 + $0x3f8] sm:$0xff]
        %v431 = vld [vmem:[%s252 + $0x400] sm:$0xff]
        %v432 = vld [vmem:[%s252 + $0x408] sm:$0xff]
        %v433 = vld [vmem:[%s252 + $0x410] sm:$0xff]
        %v434 = vld [vmem:[%s252 + $0x418] sm:$0xff]
        %v435 = vld [vmem:[%s252 + $0x420] sm:$0xff]
        %v436 = vld [vmem:[%s252 + $0x428] sm:$0xff]
        %v437 = vld [vmem:[%s252 + $0x430] sm:$0xff]
        %v438 = vld [vmem:[%s252 + $0x438] sm:$0xff]
        %v439 = vld [vmem:[%s252 + $0x440] sm:$0xff]
        %v440 = vld [vmem:[%s252 + $0x448] sm:$0xff]
        %v441 = vld [vmem:[%s252 + $0x450] sm:$0xff]
        %v442 = vld [vmem:[%s252 + $0x458] sm:$0xff]
        %v443 = vld [vmem:[%s252 + $0x460] sm:$0xff]
        %v444 = vld [vmem:[%s252 + $0x468] sm:$0xff]
        %v445 = vld [vmem:[%s252 + $0x470] sm:$0xff]
        %v446 = vld [vmem:[%s252 + $0x478] sm:$0xff]
        %v447 = vld [vmem:[%s252 + $0x480] sm:$0xff]
        %v448 = vld [vmem:[%s252 + $0x488] sm:$0xff]
        %v449 = vld [vmem:[%s252 + $0x490] sm:$0xff]
        %v450 = vld [vmem:[%s252 + $0x498] sm:$0xff]
        %v451 = vld [vmem:[%s252 + $0x4a0] sm:$0xff]
        %v452 = vld [vmem:[%s252 + $0x4a8] sm:$0xff]
        %v453 = vld [vmem:[%s252 + $0x4b0] sm:$0xff]
        %v454 = vld [vmem:[%s252 + $0x4b8] sm:$0xff]
        %v455 = vld [vmem:[%s252 + $0x4c0] sm:$0xff]
        %v456 = vld [vmem:[%s252 + $0x4c8] sm:$0xff]
        %v457 = vld [vmem:[%s252 + $0x4d0] sm:$0xff]
        %v458 = vld [vmem:[%s252 + $0x4d8] sm:$0xff]
        %v459 = vld [vmem:[%s252 + $0x4e0] sm:$0xff]
        %v460 = vld [vmem:[%s252 + $0x4e8] sm:$0xff]
        %v461 = vld [vmem:[%s252 + $0x4f0] sm:$0xff]
        %v462 = vld [vmem:[%s252 + $0x4f8] sm:$0xff]
        %v463 = vld [vmem:[%s252 + $0x500] sm:$0xff]
        %v464 = vld [vmem:[%s252 + $0x508] sm:$0xff]
        %v465 = vld [vmem:[%s252 + $0x510] sm:$0xff]
        %v466 = vld [vmem:[%s252 + $0x518] sm:$0xff]
        %v467 = vld [vmem:[%s252 + $0x520] sm:$0xff]
        %v468 = vld [vmem:[%s252 + $0x528] sm:$0xff]
        %v469 = vld [vmem:[%s252 + $0x530] sm:$0xff]
        %v470 = vld [vmem:[%s252 + $0x538] sm:$0xff]
        %v471 = vld [vmem:[%s252 + $0x540] sm:$0xff]
        %v472 = vld [vmem:[%s252 + $0x548] sm:$0xff]
        %v473 = vld [vmem:[%s252 + $0x550] sm:$0xff]
        %v474 = vld [vmem:[%s252 + $0x558] sm:$0xff]
        %v475 = vld [vmem:[%s252 + $0x560] sm:$0xff]
        %v476 = vld [vmem:[%s252 + $0x568] sm:$0xff]
        %v477 = vld [vmem:[%s252 + $0x570] sm:$0xff]
        %v478 = vld [vmem:[%s252 + $0x578] sm:$0xff]
        %v479 = vld [vmem:[%s252 + $0x580] sm:$0xff]
        %v480 = vld [vmem:[%s252 + $0x588] sm:$0xff]
        %v481 = vld [vmem:[%s252 + $0x590] sm:$0xff]
        %v482 = vld [vmem:[%s252 + $0x598] sm:$0xff]
        %v483 = vld [vmem:[%s252 + $0x5a0] sm:$0xff]
        %v484 = vld [vmem:[%s252 + $0x5a8] sm:$0xff]
        %v485 = vld [vmem:[%s252 + $0x5b0] sm:$0xff]
        %v486 = vld [vmem:[%s252 + $0x5b8] sm:$0xff]
        %v487 = vld [vmem:[%s252 + $0x5c0] sm:$0xff]
        %v488 = vld [vmem:[%s252 + $0x5c8] sm:$0xff]
        %v489 = vld [vmem:[%s252 + $0x5d0] sm:$0xff]
        %v490 = vld [vmem:[%s252 + $0x5d8] sm:$0xff]
        %v491 = vld [vmem:[%s252 + $0x5e0] sm:$0xff]
        %v492 = vld [vmem:[%s252 + $0x5e8] sm:$0xff]
        %v493 = vld [vmem:[%s252 + $0x5f0] sm:$0xff]
        %v494 = vld [vmem:[%s252 + $0x5f8] sm:$0xff]
        %v495 = vld [vmem:[%s252 + $0x600] sm:$0xff]
        %v496 = vld [vmem:[%s252 + $0x608] sm:$0xff]
        %v497 = vld [vmem:[%s252 + $0x610] sm:$0xff]
        %v498 = vld [vmem:[%s252 + $0x618] sm:$0xff]
        %v499 = vld [vmem:[%s252 + $0x620] sm:$0xff]
        %v500 = vld [vmem:[%s252 + $0x628] sm:$0xff]
        %v501 = vld [vmem:[%s252 + $0x630] sm:$0xff]
        %v502 = vld [vmem:[%s252 + $0x638] sm:$0xff]
        %v503 = vld [vmem:[%s252 + $0x640] sm:$0xff]
        %v504 = vld [vmem:[%s252 + $0x648] sm:$0xff]
        %v505 = vld [vmem:[%s252 + $0x650] sm:$0xff]
        %v506 = vld [vmem:[%s252 + $0x658] sm:$0xff]
        %v507 = vld [vmem:[%s252 + $0x660] sm:$0xff]
        %v508 = vld [vmem:[%s252 + $0x668] sm:$0xff]
        %v509 = vld [vmem:[%s252 + $0x670] sm:$0xff]
        %v510 = vld [vmem:[%s252 + $0x678] sm:$0xff]
        %v511 = vld [vmem:[%s252 + $0x680] sm:$0xff]
        %v512 = vld [vmem:[%s252 + $0x688] sm:$0xff]
        %v513 = vld [vmem:[%s252 + $0x690] sm:$0xff]
        %v514 = vld [vmem:[%s252 + $0x698] sm:$0xff]
        %v515 = vld [vmem:[%s252 + $0x6a0] sm:$0xff]
        %v516 = vld [vmem:[%s252 + $0x6a8] sm:$0xff]
        %v517 = vld [vmem:[%s252 + $0x6b0] sm:$0xff]
        %v518 = vld [vmem:[%s252 + $0x6b8] sm:$0xff]
        %v519 = vld [vmem:[%s252 + $0x6c0] sm:$0xff]
        %v520 = vld [vmem:[%s252 + $0x6c8] sm:$0xff]
        %v521 = vld [vmem:[%s252 + $0x6d0] sm:$0xff]
        %v522 = vld [vmem:[%s252 + $0x6d8] sm:$0xff]
        %v523 = vld [vmem:[%s252 + $0x6e0] sm:$0xff]
        %v524 = vld [vmem:[%s252 + $0x6e8] sm:$0xff]
        %v525 = vld [vmem:[%s252 + $0x6f0] sm:$0xff]
        %v526 = vld [vmem:[%s252 + $0x6f8] sm:$0xff]
        %v527 = vld [vmem:[%s252 + $0x700] sm:$0xff]
        %v528 = vld [vmem:[%s252 + $0x708] sm:$0xff]
        %v529 = vld [vmem:[%s252 + $0x710] sm:$0xff]
        %v530 = vld [vmem:[%s252 + $0x718] sm:$0xff]
        %v531 = vld [vmem:[%s252 + $0x720] sm:$0xff]
        %v532 = vld [vmem:[%s252 + $0x728] sm:$0xff]
        %v533 = vld [vmem:[%s252 + $0x730] sm:$0xff]
        %v534 = vld [vmem:[%s252 + $0x738] sm:$0xff]
        %v535 = vld [vmem:[%s252 + $0x740] sm:$0xff]
        %v536 = vld [vmem:[%s252 + $0x748] sm:$0xff]
        %v537 = vld [vmem:[%s252 + $0x750] sm:$0xff]
        %v538 = vld [vmem:[%s252 + $0x758] sm:$0xff]
        %v539 = vld [vmem:[%s252 + $0x760] sm:$0xff]
        %v540 = vld [vmem:[%s252 + $0x768] sm:$0xff]
        %v541 = vld [vmem:[%s252 + $0x770] sm:$0xff]
        %v542 = vld [vmem:[%s252 + $0x778] sm:$0xff]
        %v543 = vld [vmem:[%s252 + $0x780] sm:$0xff]
        %v544 = vld [vmem:[%s252 + $0x788] sm:$0xff]
        %v545 = vld [vmem:[%s252 + $0x790] sm:$0xff]
        %v546 = vld [vmem:[%s252 + $0x798] sm:$0xff]
        %v547 = vld [vmem:[%s252 + $0x7a0] sm:$0xff]
        %v548 = vld [vmem:[%s252 + $0x7a8] sm:$0xff]
        %v549 = vld [vmem:[%s252 + $0x7b0] sm:$0xff]
        %v550 = vld [vmem:[%s252 + $0x7b8] sm:$0xff]
        %v551 = vld [vmem:[%s252 + $0x7c0] sm:$0xff]
        %v552 = vld [vmem:[%s252 + $0x7c8] sm:$0xff]
        %v553 = vld [vmem:[%s252 + $0x7d0] sm:$0xff]
        %v554 = vld [vmem:[%s252 + $0x7d8] sm:$0xff]
        %v555 = vld [vmem:[%s252 + $0x7e0] sm:$0xff]
        %v556 = vld [vmem:[%s252 + $0x7e8] sm:$0xff]
        %v557 = vld [vmem:[%s252 + $0x7f0] sm:$0xff]
        %v558 = vld [vmem:[%s252 + $0x7f8] sm:$0xff]
        %v559 = vpack.c.bf16 %v319, %v303
        %v560 = vpack.c.bf16 %v320, %v304
        %v561 = vpack.c.bf16 %v321, %v305
        %v562 = vpack.c.bf16 %v322, %v306
        %v563 = vpack.c.bf16 %v323, %v307
        %v564 = vpack.c.bf16 %v324, %v308
        %v565 = vpack.c.bf16 %v325, %v309
        %v566 = vpack.c.bf16 %v326, %v310
        %v567 = vpack.c.bf16 %v327, %v311
        %v568 = vpack.c.bf16 %v328, %v312
        %v569 = vpack.c.bf16 %v329, %v313
        %v570 = vpack.c.bf16 %v330, %v314
        %v571 = vpack.c.bf16 %v331, %v315
        %v572 = vpack.c.bf16 %v332, %v316
        %v573 = vpack.c.bf16 %v333, %v317
        %v574 = vpack.c.bf16 %v334, %v318
        %v575 = vpack.c.bf16 %v351, %v335
        %v576 = vpack.c.bf16 %v352, %v336
        %v577 = vpack.c.bf16 %v353, %v337
        %v578 = vpack.c.bf16 %v354, %v338
        %v579 = vpack.c.bf16 %v355, %v339
        %v580 = vpack.c.bf16 %v356, %v340
        %v581 = vpack.c.bf16 %v357, %v341
        %v582 = vpack.c.bf16 %v358, %v342
        %v583 = vpack.c.bf16 %v359, %v343
        %v584 = vpack.c.bf16 %v360, %v344
        %v585 = vpack.c.bf16 %v361, %v345
        %v586 = vpack.c.bf16 %v362, %v346
        %v587 = vpack.c.bf16 %v363, %v347
        %v588 = vpack.c.bf16 %v364, %v348
        %v589 = vpack.c.bf16 %v365, %v349
        %v590 = vpack.c.bf16 %v366, %v350
        %v591 = vpack.c.bf16 %v383, %v367
        %v592 = vpack.c.bf16 %v384, %v368
        %v593 = vpack.c.bf16 %v385, %v369
        %v594 = vpack.c.bf16 %v386, %v370
        %v595 = vpack.c.bf16 %v387, %v371
        %v596 = vpack.c.bf16 %v388, %v372
        %v597 = vpack.c.bf16 %v389, %v373
        %v598 = vpack.c.bf16 %v390, %v374
        %v599 = vpack.c.bf16 %v391, %v375
        %v600 = vpack.c.bf16 %v392, %v376
        %v601 = vpack.c.bf16 %v393, %v377
        %v602 = vpack.c.bf16 %v394, %v378
        %v603 = vpack.c.bf16 %v395, %v379
        %v604 = vpack.c.bf16 %v396, %v380
        %v605 = vpack.c.bf16 %v397, %v381
        %v606 = vpack.c.bf16 %v398, %v382
        %v607 = vpack.c.bf16 %v415, %v399
        %v608 = vpack.c.bf16 %v416, %v400
        %v609 = vpack.c.bf16 %v417, %v401
        %v610 = vpack.c.bf16 %v418, %v402
        %v611 = vpack.c.bf16 %v419, %v403
        %v612 = vpack.c.bf16 %v420, %v404
        %v613 = vpack.c.bf16 %v421, %v405
        %v614 = vpack.c.bf16 %v422, %v406
        %v615 = vpack.c.bf16 %v423, %v407
        %v616 = vpack.c.bf16 %v424, %v408
        %v617 = vpack.c.bf16 %v425, %v409
        %v618 = vpack.c.bf16 %v426, %v410
        %v619 = vpack.c.bf16 %v427, %v411
        %v620 = vpack.c.bf16 %v428, %v412
        %v621 = vpack.c.bf16 %v429, %v413
        %v622 = vpack.c.bf16 %v430, %v414
        %v623 = vpack.c.bf16 %v447, %v431
        %v624 = vpack.c.bf16 %v448, %v432
        %v625 = vpack.c.bf16 %v449, %v433
        %v626 = vpack.c.bf16 %v450, %v434
        %v627 = vpack.c.bf16 %v451, %v435
        %v628 = vpack.c.bf16 %v452, %v436
        %v629 = vpack.c.bf16 %v453, %v437
        %v630 = vpack.c.bf16 %v454, %v438
        %v631 = vpack.c.bf16 %v455, %v439
        %v632 = vpack.c.bf16 %v456, %v440
        %v633 = vpack.c.bf16 %v457, %v441
        %v634 = vpack.c.bf16 %v458, %v442
        %v635 = vpack.c.bf16 %v459, %v443
        %v636 = vpack.c.bf16 %v460, %v444
        %v637 = vpack.c.bf16 %v461, %v445
        %v638 = vpack.c.bf16 %v462, %v446
        %v639 = vpack.c.bf16 %v479, %v463
        %v640 = vpack.c.bf16 %v480, %v464
        %v641 = vpack.c.bf16 %v481, %v465
        %v642 = vpack.c.bf16 %v482, %v466
        %v643 = vpack.c.bf16 %v483, %v467
        %v644 = vpack.c.bf16 %v484, %v468
        %v645 = vpack.c.bf16 %v485, %v469
        %v646 = vpack.c.bf16 %v486, %v470
        %v647 = vpack.c.bf16 %v487, %v471
        %v648 = vpack.c.bf16 %v488, %v472
        %v649 = vpack.c.bf16 %v489, %v473
        %v650 = vpack.c.bf16 %v490, %v474
        %v651 = vpack.c.bf16 %v491, %v475
        %v652 = vpack.c.bf16 %v492, %v476
        %v653 = vpack.c.bf16 %v493, %v477
        %v654 = vpack.c.bf16 %v494, %v478
        %v655 = vpack.c.bf16 %v511, %v495
        %v656 = vpack.c.bf16 %v512, %v496
        %v657 = vpack.c.bf16 %v513, %v497
        %v658 = vpack.c.bf16 %v514, %v498
        %v659 = vpack.c.bf16 %v515, %v499
        %v660 = vpack.c.bf16 %v516, %v500
        %v661 = vpack.c.bf16 %v517, %v501
        %v662 = vpack.c.bf16 %v518, %v502
        %v663 = vpack.c.bf16 %v519, %v503
        %v664 = vpack.c.bf16 %v520, %v504
        %v665 = vpack.c.bf16 %v521, %v505
        %v666 = vpack.c.bf16 %v522, %v506
        %v667 = vpack.c.bf16 %v523, %v507
        %v668 = vpack.c.bf16 %v524, %v508
        %v669 = vpack.c.bf16 %v525, %v509
        %v670 = vpack.c.bf16 %v526, %v510
        %v671 = vpack.c.bf16 %v543, %v527
        %v672 = vpack.c.bf16 %v544, %v528
        %v673 = vpack.c.bf16 %v545, %v529
        %v674 = vpack.c.bf16 %v546, %v530
        %v675 = vpack.c.bf16 %v547, %v531
        %v676 = vpack.c.bf16 %v548, %v532
        %v677 = vpack.c.bf16 %v549, %v533
        %v678 = vpack.c.bf16 %v550, %v534
        %v679 = vpack.c.bf16 %v551, %v535
        %v680 = vpack.c.bf16 %v552, %v536
        %v681 = vpack.c.bf16 %v553, %v537
        %v682 = vpack.c.bf16 %v554, %v538
        %v683 = vpack.c.bf16 %v555, %v539
        %v684 = vpack.c.bf16 %v556, %v540
        %v685 = vpack.c.bf16 %v557, %v541
        %v686 = vpack.c.bf16 %v558, %v542
        %v687 = vld [vmem:[#allocation4] sm:$0xff]
        %v688 = vld [vmem:[#allocation4 + $0x8] sm:$0xff]
        %v689 = vld [vmem:[#allocation4 + $0x10] sm:$0xff]
        %v690 = vld [vmem:[#allocation4 + $0x18] sm:$0xff]
        %v691 = vld [vmem:[#allocation4 + $0x20] sm:$0xff]
        %v692 = vld [vmem:[#allocation4 + $0x28] sm:$0xff]
        %v693 = vld [vmem:[#allocation4 + $0x30] sm:$0xff]
        %v694 = vld [vmem:[#allocation4 + $0x38] sm:$0xff]
        %v695 = vld [vmem:[#allocation4 + $0x40] sm:$0xff]
        %v696 = vld [vmem:[#allocation4 + $0x48] sm:$0xff]
        %v697 = vld [vmem:[#allocation4 + $0x50] sm:$0xff]
        %v698 = vld [vmem:[#allocation4 + $0x58] sm:$0xff]
        %v699 = vld [vmem:[#allocation4 + $0x60] sm:$0xff]
        %v700 = vld [vmem:[#allocation4 + $0x68] sm:$0xff]
        %v701 = vld [vmem:[#allocation4 + $0x70] sm:$0xff]
        %v702 = vld [vmem:[#allocation4 + $0x78] sm:$0xff]
        %v703 = vld [vmem:[#allocation4 + $0x80] sm:$0xff]
        %v704 = vld [vmem:[#allocation4 + $0x88] sm:$0xff]
        %v705 = vld [vmem:[#allocation4 + $0x90] sm:$0xff]
        %v706 = vld [vmem:[#allocation4 + $0x98] sm:$0xff]
        %v707 = vld [vmem:[#allocation4 + $0xa0] sm:$0xff]
        %v708 = vld [vmem:[#allocation4 + $0xa8] sm:$0xff]
        %v709 = vld [vmem:[#allocation4 + $0xb0] sm:$0xff]
        %v710 = vld [vmem:[#allocation4 + $0xb8] sm:$0xff]
        %v711 = vld [vmem:[#allocation4 + $0xc0] sm:$0xff]
        %v712 = vld [vmem:[#allocation4 + $0xc8] sm:$0xff]
        %v713 = vld [vmem:[#allocation4 + $0xd0] sm:$0xff]
        %v714 = vld [vmem:[#allocation4 + $0xd8] sm:$0xff]
        %v715 = vld [vmem:[#allocation4 + $0xe0] sm:$0xff]
        %v716 = vld [vmem:[#allocation4 + $0xe8] sm:$0xff]
        %v717 = vld [vmem:[#allocation4 + $0xf0] sm:$0xff]
        %v718 = vld [vmem:[#allocation4 + $0xf8] sm:$0xff]
        %v719 = vld [vmem:[#allocation4 + $0x100] sm:$0xff]
        %v720 = vld [vmem:[#allocation4 + $0x108] sm:$0xff]
        %v721 = vld [vmem:[#allocation4 + $0x110] sm:$0xff]
        %v722 = vld [vmem:[#allocation4 + $0x118] sm:$0xff]
        %v723 = vld [vmem:[#allocation4 + $0x120] sm:$0xff]
        %v724 = vld [vmem:[#allocation4 + $0x128] sm:$0xff]
        %v725 = vld [vmem:[#allocation4 + $0x130] sm:$0xff]
        %v726 = vld [vmem:[#allocation4 + $0x138] sm:$0xff]
        %v727 = vld [vmem:[#allocation4 + $0x140] sm:$0xff]
        %v728 = vld [vmem:[#allocation4 + $0x148] sm:$0xff]
        %v729 = vld [vmem:[#allocation4 + $0x150] sm:$0xff]
        %v730 = vld [vmem:[#allocation4 + $0x158] sm:$0xff]
        %v731 = vld [vmem:[#allocation4 + $0x160] sm:$0xff]
        %v732 = vld [vmem:[#allocation4 + $0x168] sm:$0xff]
        %v733 = vld [vmem:[#allocation4 + $0x170] sm:$0xff]
        %v734 = vld [vmem:[#allocation4 + $0x178] sm:$0xff]
        %v735 = vld [vmem:[#allocation4 + $0x180] sm:$0xff]
        %v736 = vld [vmem:[#allocation4 + $0x188] sm:$0xff]
        %v737 = vld [vmem:[#allocation4 + $0x190] sm:$0xff]
        %v738 = vld [vmem:[#allocation4 + $0x198] sm:$0xff]
        %v739 = vld [vmem:[#allocation4 + $0x1a0] sm:$0xff]
        %v740 = vld [vmem:[#allocation4 + $0x1a8] sm:$0xff]
        %v741 = vld [vmem:[#allocation4 + $0x1b0] sm:$0xff]
        %v742 = vld [vmem:[#allocation4 + $0x1b8] sm:$0xff]
        %v743 = vld [vmem:[#allocation4 + $0x1c0] sm:$0xff]
        %v744 = vld [vmem:[#allocation4 + $0x1c8] sm:$0xff]
        %v745 = vld [vmem:[#allocation4 + $0x1d0] sm:$0xff]
        %v746 = vld [vmem:[#allocation4 + $0x1d8] sm:$0xff]
        %v747 = vld [vmem:[#allocation4 + $0x1e0] sm:$0xff]
        %v748 = vld [vmem:[#allocation4 + $0x1e8] sm:$0xff]
        %v749 = vld [vmem:[#allocation4 + $0x1f0] sm:$0xff]
        %v750 = vld [vmem:[#allocation4 + $0x1f8] sm:$0xff]
        %v751 = vld [vmem:[#allocation4 + $0x200] sm:$0xff]
        %v752 = vld [vmem:[#allocation4 + $0x208] sm:$0xff]
        %v753 = vld [vmem:[#allocation4 + $0x210] sm:$0xff]
        %v754 = vld [vmem:[#allocation4 + $0x218] sm:$0xff]
        %v755 = vld [vmem:[#allocation4 + $0x220] sm:$0xff]
        %v756 = vld [vmem:[#allocation4 + $0x228] sm:$0xff]
        %v757 = vld [vmem:[#allocation4 + $0x230] sm:$0xff]
        %v758 = vld [vmem:[#allocation4 + $0x238] sm:$0xff]
        %v759 = vld [vmem:[#allocation4 + $0x240] sm:$0xff]
        %v760 = vld [vmem:[#allocation4 + $0x248] sm:$0xff]
        %v761 = vld [vmem:[#allocation4 + $0x250] sm:$0xff]
        %v762 = vld [vmem:[#allocation4 + $0x258] sm:$0xff]
        %v763 = vld [vmem:[#allocation4 + $0x260] sm:$0xff]
        %v764 = vld [vmem:[#allocation4 + $0x268] sm:$0xff]
        %v765 = vld [vmem:[#allocation4 + $0x270] sm:$0xff]
        %v766 = vld [vmem:[#allocation4 + $0x278] sm:$0xff]
        %v767 = vld [vmem:[#allocation4 + $0x280] sm:$0xff]
        %v768 = vld [vmem:[#allocation4 + $0x288] sm:$0xff]
        %v769 = vld [vmem:[#allocation4 + $0x290] sm:$0xff]
        %v770 = vld [vmem:[#allocation4 + $0x298] sm:$0xff]
        %v771 = vld [vmem:[#allocation4 + $0x2a0] sm:$0xff]
        %v772 = vld [vmem:[#allocation4 + $0x2a8] sm:$0xff]
        %v773 = vld [vmem:[#allocation4 + $0x2b0] sm:$0xff]
        %v774 = vld [vmem:[#allocation4 + $0x2b8] sm:$0xff]
        %v775 = vld [vmem:[#allocation4 + $0x2c0] sm:$0xff]
        %v776 = vld [vmem:[#allocation4 + $0x2c8] sm:$0xff]
        %v777 = vld [vmem:[#allocation4 + $0x2d0] sm:$0xff]
        %v778 = vld [vmem:[#allocation4 + $0x2d8] sm:$0xff]
        %v779 = vld [vmem:[#allocation4 + $0x2e0] sm:$0xff]
        %v780 = vld [vmem:[#allocation4 + $0x2e8] sm:$0xff]
        %v781 = vld [vmem:[#allocation4 + $0x2f0] sm:$0xff]
        %v782 = vld [vmem:[#allocation4 + $0x2f8] sm:$0xff]
        %v783 = vld [vmem:[#allocation4 + $0x300] sm:$0xff]
        %v784 = vld [vmem:[#allocation4 + $0x308] sm:$0xff]
        %v785 = vld [vmem:[#allocation4 + $0x310] sm:$0xff]
        %v786 = vld [vmem:[#allocation4 + $0x318] sm:$0xff]
        %v787 = vld [vmem:[#allocation4 + $0x320] sm:$0xff]
        %v788 = vld [vmem:[#allocation4 + $0x328] sm:$0xff]
        %v789 = vld [vmem:[#allocation4 + $0x330] sm:$0xff]
        %v790 = vld [vmem:[#allocation4 + $0x338] sm:$0xff]
        %v791 = vld [vmem:[#allocation4 + $0x340] sm:$0xff]
        %v792 = vld [vmem:[#allocation4 + $0x348] sm:$0xff]
        %v793 = vld [vmem:[#allocation4 + $0x350] sm:$0xff]
        %v794 = vld [vmem:[#allocation4 + $0x358] sm:$0xff]
        %v795 = vld [vmem:[#allocation4 + $0x360] sm:$0xff]
        %v796 = vld [vmem:[#allocation4 + $0x368] sm:$0xff]
        %v797 = vld [vmem:[#allocation4 + $0x370] sm:$0xff]
        %v798 = vld [vmem:[#allocation4 + $0x378] sm:$0xff]
        %v799 = vld [vmem:[#allocation4 + $0x380] sm:$0xff]
        %v800 = vld [vmem:[#allocation4 + $0x388] sm:$0xff]
        %v801 = vld [vmem:[#allocation4 + $0x390] sm:$0xff]
        %v802 = vld [vmem:[#allocation4 + $0x398] sm:$0xff]
        %v803 = vld [vmem:[#allocation4 + $0x3a0] sm:$0xff]
        %v804 = vld [vmem:[#allocation4 + $0x3a8] sm:$0xff]
        %v805 = vld [vmem:[#allocation4 + $0x3b0] sm:$0xff]
        %v806 = vld [vmem:[#allocation4 + $0x3b8] sm:$0xff]
        %v807 = vld [vmem:[#allocation4 + $0x3c0] sm:$0xff]
        %v808 = vld [vmem:[#allocation4 + $0x3c8] sm:$0xff]
        %v809 = vld [vmem:[#allocation4 + $0x3d0] sm:$0xff]
        %v810 = vld [vmem:[#allocation4 + $0x3d8] sm:$0xff]
        %v811 = vld [vmem:[#allocation4 + $0x3e0] sm:$0xff]
        %v812 = vld [vmem:[#allocation4 + $0x3e8] sm:$0xff]
        %v813 = vld [vmem:[#allocation4 + $0x3f0] sm:$0xff]
        %v814 = vld [vmem:[#allocation4 + $0x3f8] sm:$0xff]
        %v815 = vld [vmem:[#allocation4 + $0x400] sm:$0xff]
        %v816 = vld [vmem:[#allocation4 + $0x408] sm:$0xff]
        %v817 = vld [vmem:[#allocation4 + $0x410] sm:$0xff]
        %v818 = vld [vmem:[#allocation4 + $0x418] sm:$0xff]
        %v819 = vld [vmem:[#allocation4 + $0x420] sm:$0xff]
        %v820 = vld [vmem:[#allocation4 + $0x428] sm:$0xff]
        %v821 = vld [vmem:[#allocation4 + $0x430] sm:$0xff]
        %v822 = vld [vmem:[#allocation4 + $0x438] sm:$0xff]
        %v823 = vld [vmem:[#allocation4 + $0x440] sm:$0xff]
        %v824 = vld [vmem:[#allocation4 + $0x448] sm:$0xff]
        %v825 = vld [vmem:[#allocation4 + $0x450] sm:$0xff]
        %v826 = vld [vmem:[#allocation4 + $0x458] sm:$0xff]
        %v827 = vld [vmem:[#allocation4 + $0x460] sm:$0xff]
        %v828 = vld [vmem:[#allocation4 + $0x468] sm:$0xff]
        %v829 = vld [vmem:[#allocation4 + $0x470] sm:$0xff]
        %v830 = vld [vmem:[#allocation4 + $0x478] sm:$0xff]
        %v831 = vld [vmem:[#allocation4 + $0x480] sm:$0xff]
        %v832 = vld [vmem:[#allocation4 + $0x488] sm:$0xff]
        %v833 = vld [vmem:[#allocation4 + $0x490] sm:$0xff]
        %v834 = vld [vmem:[#allocation4 + $0x498] sm:$0xff]
        %v835 = vld [vmem:[#allocation4 + $0x4a0] sm:$0xff]
        %v836 = vld [vmem:[#allocation4 + $0x4a8] sm:$0xff]
        %v837 = vld [vmem:[#allocation4 + $0x4b0] sm:$0xff]
        %v838 = vld [vmem:[#allocation4 + $0x4b8] sm:$0xff]
        %v839 = vld [vmem:[#allocation4 + $0x4c0] sm:$0xff]
        %v840 = vld [vmem:[#allocation4 + $0x4c8] sm:$0xff]
        %v841 = vld [vmem:[#allocation4 + $0x4d0] sm:$0xff]
        %v842 = vld [vmem:[#allocation4 + $0x4d8] sm:$0xff]
        %v843 = vld [vmem:[#allocation4 + $0x4e0] sm:$0xff]
        %v844 = vld [vmem:[#allocation4 + $0x4e8] sm:$0xff]
        %v845 = vld [vmem:[#allocation4 + $0x4f0] sm:$0xff]
        %v846 = vld [vmem:[#allocation4 + $0x4f8] sm:$0xff]
        %v847 = vld [vmem:[#allocation4 + $0x500] sm:$0xff]
        %v848 = vld [vmem:[#allocation4 + $0x508] sm:$0xff]
        %v849 = vld [vmem:[#allocation4 + $0x510] sm:$0xff]
        %v850 = vld [vmem:[#allocation4 + $0x518] sm:$0xff]
        %v851 = vld [vmem:[#allocation4 + $0x520] sm:$0xff]
        %v852 = vld [vmem:[#allocation4 + $0x528] sm:$0xff]
        %v853 = vld [vmem:[#allocation4 + $0x530] sm:$0xff]
        %v854 = vld [vmem:[#allocation4 + $0x538] sm:$0xff]
        %v855 = vld [vmem:[#allocation4 + $0x540] sm:$0xff]
        %v856 = vld [vmem:[#allocation4 + $0x548] sm:$0xff]
        %v857 = vld [vmem:[#allocation4 + $0x550] sm:$0xff]
        %v858 = vld [vmem:[#allocation4 + $0x558] sm:$0xff]
        %v859 = vld [vmem:[#allocation4 + $0x560] sm:$0xff]
        %v860 = vld [vmem:[#allocation4 + $0x568] sm:$0xff]
        %v861 = vld [vmem:[#allocation4 + $0x570] sm:$0xff]
        %v862 = vld [vmem:[#allocation4 + $0x578] sm:$0xff]
        %v863 = vld [vmem:[#allocation4 + $0x580] sm:$0xff]
        %v864 = vld [vmem:[#allocation4 + $0x588] sm:$0xff]
        %v865 = vld [vmem:[#allocation4 + $0x590] sm:$0xff]
        %v866 = vld [vmem:[#allocation4 + $0x598] sm:$0xff]
        %v867 = vld [vmem:[#allocation4 + $0x5a0] sm:$0xff]
        %v868 = vld [vmem:[#allocation4 + $0x5a8] sm:$0xff]
        %v869 = vld [vmem:[#allocation4 + $0x5b0] sm:$0xff]
        %v870 = vld [vmem:[#allocation4 + $0x5b8] sm:$0xff]
        %v871 = vld [vmem:[#allocation4 + $0x5c0] sm:$0xff]
        %v872 = vld [vmem:[#allocation4 + $0x5c8] sm:$0xff]
        %v873 = vld [vmem:[#allocation4 + $0x5d0] sm:$0xff]
        %v874 = vld [vmem:[#allocation4 + $0x5d8] sm:$0xff]
        %v875 = vld [vmem:[#allocation4 + $0x5e0] sm:$0xff]
        %v876 = vld [vmem:[#allocation4 + $0x5e8] sm:$0xff]
        %v877 = vld [vmem:[#allocation4 + $0x5f0] sm:$0xff]
        %v878 = vld [vmem:[#allocation4 + $0x5f8] sm:$0xff]
        %v879 = vld [vmem:[#allocation4 + $0x600] sm:$0xff]
        %v880 = vld [vmem:[#allocation4 + $0x608] sm:$0xff]
        %v881 = vld [vmem:[#allocation4 + $0x610] sm:$0xff]
        %v882 = vld [vmem:[#allocation4 + $0x618] sm:$0xff]
        %v883 = vld [vmem:[#allocation4 + $0x620] sm:$0xff]
        %v884 = vld [vmem:[#allocation4 + $0x628] sm:$0xff]
        %v885 = vld [vmem:[#allocation4 + $0x630] sm:$0xff]
        %v886 = vld [vmem:[#allocation4 + $0x638] sm:$0xff]
        %v887 = vld [vmem:[#allocation4 + $0x640] sm:$0xff]
        %v888 = vld [vmem:[#allocation4 + $0x648] sm:$0xff]
        %v889 = vld [vmem:[#allocation4 + $0x650] sm:$0xff]
        %v890 = vld [vmem:[#allocation4 + $0x658] sm:$0xff]
        %v891 = vld [vmem:[#allocation4 + $0x660] sm:$0xff]
        %v892 = vld [vmem:[#allocation4 + $0x668] sm:$0xff]
        %v893 = vld [vmem:[#allocation4 + $0x670] sm:$0xff]
        %v894 = vld [vmem:[#allocation4 + $0x678] sm:$0xff]
        %v895 = vld [vmem:[#allocation4 + $0x680] sm:$0xff]
        %v896 = vld [vmem:[#allocation4 + $0x688] sm:$0xff]
        %v897 = vld [vmem:[#allocation4 + $0x690] sm:$0xff]
        %v898 = vld [vmem:[#allocation4 + $0x698] sm:$0xff]
        %v899 = vld [vmem:[#allocation4 + $0x6a0] sm:$0xff]
        %v900 = vld [vmem:[#allocation4 + $0x6a8] sm:$0xff]
        %v901 = vld [vmem:[#allocation4 + $0x6b0] sm:$0xff]
        %v902 = vld [vmem:[#allocation4 + $0x6b8] sm:$0xff]
        %v903 = vld [vmem:[#allocation4 + $0x6c0] sm:$0xff]
        %v904 = vld [vmem:[#allocation4 + $0x6c8] sm:$0xff]
        %v905 = vld [vmem:[#allocation4 + $0x6d0] sm:$0xff]
        %v906 = vld [vmem:[#allocation4 + $0x6d8] sm:$0xff]
        %v907 = vld [vmem:[#allocation4 + $0x6e0] sm:$0xff]
        %v908 = vld [vmem:[#allocation4 + $0x6e8] sm:$0xff]
        %v909 = vld [vmem:[#allocation4 + $0x6f0] sm:$0xff]
        %v910 = vld [vmem:[#allocation4 + $0x6f8] sm:$0xff]
        %v911 = vld [vmem:[#allocation4 + $0x700] sm:$0xff]
        %v912 = vld [vmem:[#allocation4 + $0x708] sm:$0xff]
        %v913 = vld [vmem:[#allocation4 + $0x710] sm:$0xff]
        %v914 = vld [vmem:[#allocation4 + $0x718] sm:$0xff]
        %v915 = vld [vmem:[#allocation4 + $0x720] sm:$0xff]
        %v916 = vld [vmem:[#allocation4 + $0x728] sm:$0xff]
        %v917 = vld [vmem:[#allocation4 + $0x730] sm:$0xff]
        %v918 = vld [vmem:[#allocation4 + $0x738] sm:$0xff]
        %v919 = vld [vmem:[#allocation4 + $0x740] sm:$0xff]
        %v920 = vld [vmem:[#allocation4 + $0x748] sm:$0xff]
        %v921 = vld [vmem:[#allocation4 + $0x750] sm:$0xff]
        %v922 = vld [vmem:[#allocation4 + $0x758] sm:$0xff]
        %v923 = vld [vmem:[#allocation4 + $0x760] sm:$0xff]
        %v924 = vld [vmem:[#allocation4 + $0x768] sm:$0xff]
        %v925 = vld [vmem:[#allocation4 + $0x770] sm:$0xff]
        %v926 = vld [vmem:[#allocation4 + $0x778] sm:$0xff]
        %v927 = vld [vmem:[#allocation4 + $0x780] sm:$0xff]
        %v928 = vld [vmem:[#allocation4 + $0x788] sm:$0xff]
        %v929 = vld [vmem:[#allocation4 + $0x790] sm:$0xff]
        %v930 = vld [vmem:[#allocation4 + $0x798] sm:$0xff]
        %v931 = vld [vmem:[#allocation4 + $0x7a0] sm:$0xff]
        %v932 = vld [vmem:[#allocation4 + $0x7a8] sm:$0xff]
        %v933 = vld [vmem:[#allocation4 + $0x7b0] sm:$0xff]
        %v934 = vld [vmem:[#allocation4 + $0x7b8] sm:$0xff]
        %v935 = vld [vmem:[#allocation4 + $0x7c0] sm:$0xff]
        %v936 = vld [vmem:[#allocation4 + $0x7c8] sm:$0xff]
        %v937 = vld [vmem:[#allocation4 + $0x7d0] sm:$0xff]
        %v938 = vld [vmem:[#allocation4 + $0x7d8] sm:$0xff]
        %v939 = vld [vmem:[#allocation4 + $0x7e0] sm:$0xff]
        %v940 = vld [vmem:[#allocation4 + $0x7e8] sm:$0xff]
        %v941 = vld [vmem:[#allocation4 + $0x7f0] sm:$0xff]
        %v942 = vld [vmem:[#allocation4 + $0x7f8] sm:$0xff]
        %v943 = vld [vmem:[#allocation4 + $0x800] sm:$0xff]
        %v944 = vld [vmem:[#allocation4 + $0x808] sm:$0xff]
        %v945 = vld [vmem:[#allocation4 + $0x810] sm:$0xff]
        %v946 = vld [vmem:[#allocation4 + $0x818] sm:$0xff]
        %v947 = vld [vmem:[#allocation4 + $0x820] sm:$0xff]
        %v948 = vld [vmem:[#allocation4 + $0x828] sm:$0xff]
        %v949 = vld [vmem:[#allocation4 + $0x830] sm:$0xff]
        %v950 = vld [vmem:[#allocation4 + $0x838] sm:$0xff]
        %v951 = vld [vmem:[#allocation4 + $0x840] sm:$0xff]
        %v952 = vld [vmem:[#allocation4 + $0x848] sm:$0xff]
        %v953 = vld [vmem:[#allocation4 + $0x850] sm:$0xff]
        %v954 = vld [vmem:[#allocation4 + $0x858] sm:$0xff]
        %v955 = vld [vmem:[#allocation4 + $0x860] sm:$0xff]
        %v956 = vld [vmem:[#allocation4 + $0x868] sm:$0xff]
        %v957 = vld [vmem:[#allocation4 + $0x870] sm:$0xff]
        %v958 = vld [vmem:[#allocation4 + $0x878] sm:$0xff]
        %v959 = vld [vmem:[#allocation4 + $0x880] sm:$0xff]
        %v960 = vld [vmem:[#allocation4 + $0x888] sm:$0xff]
        %v961 = vld [vmem:[#allocation4 + $0x890] sm:$0xff]
        %v962 = vld [vmem:[#allocation4 + $0x898] sm:$0xff]
        %v963 = vld [vmem:[#allocation4 + $0x8a0] sm:$0xff]
        %v964 = vld [vmem:[#allocation4 + $0x8a8] sm:$0xff]
        %v965 = vld [vmem:[#allocation4 + $0x8b0] sm:$0xff]
        %v966 = vld [vmem:[#allocation4 + $0x8b8] sm:$0xff]
        %v967 = vld [vmem:[#allocation4 + $0x8c0] sm:$0xff]
        %v968 = vld [vmem:[#allocation4 + $0x8c8] sm:$0xff]
        %v969 = vld [vmem:[#allocation4 + $0x8d0] sm:$0xff]
        %v970 = vld [vmem:[#allocation4 + $0x8d8] sm:$0xff]
        %v971 = vld [vmem:[#allocation4 + $0x8e0] sm:$0xff]
        %v972 = vld [vmem:[#allocation4 + $0x8e8] sm:$0xff]
        %v973 = vld [vmem:[#allocation4 + $0x8f0] sm:$0xff]
        %v974 = vld [vmem:[#allocation4 + $0x8f8] sm:$0xff]
        %v975 = vld [vmem:[#allocation4 + $0x900] sm:$0xff]
        %v976 = vld [vmem:[#allocation4 + $0x908] sm:$0xff]
        %v977 = vld [vmem:[#allocation4 + $0x910] sm:$0xff]
        %v978 = vld [vmem:[#allocation4 + $0x918] sm:$0xff]
        %v979 = vld [vmem:[#allocation4 + $0x920] sm:$0xff]
        %v980 = vld [vmem:[#allocation4 + $0x928] sm:$0xff]
        %v981 = vld [vmem:[#allocation4 + $0x930] sm:$0xff]
        %v982 = vld [vmem:[#allocation4 + $0x938] sm:$0xff]
        %v983 = vld [vmem:[#allocation4 + $0x940] sm:$0xff]
        %v984 = vld [vmem:[#allocation4 + $0x948] sm:$0xff]
        %v985 = vld [vmem:[#allocation4 + $0x950] sm:$0xff]
        %v986 = vld [vmem:[#allocation4 + $0x958] sm:$0xff]
        %v987 = vld [vmem:[#allocation4 + $0x960] sm:$0xff]
        %v988 = vld [vmem:[#allocation4 + $0x968] sm:$0xff]
        %v989 = vld [vmem:[#allocation4 + $0x970] sm:$0xff]
        %v990 = vld [vmem:[#allocation4 + $0x978] sm:$0xff]
        %v991 = vld [vmem:[#allocation4 + $0x980] sm:$0xff]
        %v992 = vld [vmem:[#allocation4 + $0x988] sm:$0xff]
        %v993 = vld [vmem:[#allocation4 + $0x990] sm:$0xff]
        %v994 = vld [vmem:[#allocation4 + $0x998] sm:$0xff]
        %v995 = vld [vmem:[#allocation4 + $0x9a0] sm:$0xff]
        %v996 = vld [vmem:[#allocation4 + $0x9a8] sm:$0xff]
        %v997 = vld [vmem:[#allocation4 + $0x9b0] sm:$0xff]
        %v998 = vld [vmem:[#allocation4 + $0x9b8] sm:$0xff]
        %v999 = vld [vmem:[#allocation4 + $0x9c0] sm:$0xff]
        %v1000 = vld [vmem:[#allocation4 + $0x9c8] sm:$0xff]
        %v1001 = vld [vmem:[#allocation4 + $0x9d0] sm:$0xff]
        %v1002 = vld [vmem:[#allocation4 + $0x9d8] sm:$0xff]
        %v1003 = vld [vmem:[#allocation4 + $0x9e0] sm:$0xff]
        %v1004 = vld [vmem:[#allocation4 + $0x9e8] sm:$0xff]
        %v1005 = vld [vmem:[#allocation4 + $0x9f0] sm:$0xff]
        %v1006 = vld [vmem:[#allocation4 + $0x9f8] sm:$0xff]
        %v1007 = vld [vmem:[#allocation4 + $0xa00] sm:$0xff]
        %v1008 = vld [vmem:[#allocation4 + $0xa08] sm:$0xff]
        %v1009 = vld [vmem:[#allocation4 + $0xa10] sm:$0xff]
        %v1010 = vld [vmem:[#allocation4 + $0xa18] sm:$0xff]
        %v1011 = vld [vmem:[#allocation4 + $0xa20] sm:$0xff]
        %v1012 = vld [vmem:[#allocation4 + $0xa28] sm:$0xff]
        %v1013 = vld [vmem:[#allocation4 + $0xa30] sm:$0xff]
        %v1014 = vld [vmem:[#allocation4 + $0xa38] sm:$0xff]
        %v1015 = vld [vmem:[#allocation4 + $0xa40] sm:$0xff]
        %v1016 = vld [vmem:[#allocation4 + $0xa48] sm:$0xff]
        %v1017 = vld [vmem:[#allocation4 + $0xa50] sm:$0xff]
        %v1018 = vld [vmem:[#allocation4 + $0xa58] sm:$0xff]
        %v1019 = vld [vmem:[#allocation4 + $0xa60] sm:$0xff]
        %v1020 = vld [vmem:[#allocation4 + $0xa68] sm:$0xff]
        %v1021 = vld [vmem:[#allocation4 + $0xa70] sm:$0xff]
        %v1022 = vld [vmem:[#allocation4 + $0xa78] sm:$0xff]
        %v1023 = vld [vmem:[#allocation4 + $0xa80] sm:$0xff]
        %v1024 = vld [vmem:[#allocation4 + $0xa88] sm:$0xff]
        %v1025 = vld [vmem:[#allocation4 + $0xa90] sm:$0xff]
        %v1026 = vld [vmem:[#allocation4 + $0xa98] sm:$0xff]
        %v1027 = vld [vmem:[#allocation4 + $0xaa0] sm:$0xff]
        %v1028 = vld [vmem:[#allocation4 + $0xaa8] sm:$0xff]
        %v1029 = vld [vmem:[#allocation4 + $0xab0] sm:$0xff]
        %v1030 = vld [vmem:[#allocation4 + $0xab8] sm:$0xff]
        %v1031 = vld [vmem:[#allocation4 + $0xac0] sm:$0xff]
        %v1032 = vld [vmem:[#allocation4 + $0xac8] sm:$0xff]
        %v1033 = vld [vmem:[#allocation4 + $0xad0] sm:$0xff]
        %v1034 = vld [vmem:[#allocation4 + $0xad8] sm:$0xff]
        %v1035 = vld [vmem:[#allocation4 + $0xae0] sm:$0xff]
        %v1036 = vld [vmem:[#allocation4 + $0xae8] sm:$0xff]
        %v1037 = vld [vmem:[#allocation4 + $0xaf0] sm:$0xff]
        %v1038 = vld [vmem:[#allocation4 + $0xaf8] sm:$0xff]
        %v1039 = vld [vmem:[#allocation4 + $0xb00] sm:$0xff]
        %v1040 = vld [vmem:[#allocation4 + $0xb08] sm:$0xff]
        %v1041 = vld [vmem:[#allocation4 + $0xb10] sm:$0xff]
        %v1042 = vld [vmem:[#allocation4 + $0xb18] sm:$0xff]
        %v1043 = vld [vmem:[#allocation4 + $0xb20] sm:$0xff]
        %v1044 = vld [vmem:[#allocation4 + $0xb28] sm:$0xff]
        %v1045 = vld [vmem:[#allocation4 + $0xb30] sm:$0xff]
        %v1046 = vld [vmem:[#allocation4 + $0xb38] sm:$0xff]
        %v1047 = vld [vmem:[#allocation4 + $0xb40] sm:$0xff]
        %v1048 = vld [vmem:[#allocation4 + $0xb48] sm:$0xff]
        %v1049 = vld [vmem:[#allocation4 + $0xb50] sm:$0xff]
        %v1050 = vld [vmem:[#allocation4 + $0xb58] sm:$0xff]
        %v1051 = vld [vmem:[#allocation4 + $0xb60] sm:$0xff]
        %v1052 = vld [vmem:[#allocation4 + $0xb68] sm:$0xff]
        %v1053 = vld [vmem:[#allocation4 + $0xb70] sm:$0xff]
        %v1054 = vld [vmem:[#allocation4 + $0xb78] sm:$0xff]
        %v1055 = vld [vmem:[#allocation4 + $0xb80] sm:$0xff]
        %v1056 = vld [vmem:[#allocation4 + $0xb88] sm:$0xff]
        %v1057 = vld [vmem:[#allocation4 + $0xb90] sm:$0xff]
        %v1058 = vld [vmem:[#allocation4 + $0xb98] sm:$0xff]
        %v1059 = vld [vmem:[#allocation4 + $0xba0] sm:$0xff]
        %v1060 = vld [vmem:[#allocation4 + $0xba8] sm:$0xff]
        %v1061 = vld [vmem:[#allocation4 + $0xbb0] sm:$0xff]
        %v1062 = vld [vmem:[#allocation4 + $0xbb8] sm:$0xff]
        %v1063 = vld [vmem:[#allocation4 + $0xbc0] sm:$0xff]
        %v1064 = vld [vmem:[#allocation4 + $0xbc8] sm:$0xff]
        %v1065 = vld [vmem:[#allocation4 + $0xbd0] sm:$0xff]
        %v1066 = vld [vmem:[#allocation4 + $0xbd8] sm:$0xff]
        %v1067 = vld [vmem:[#allocation4 + $0xbe0] sm:$0xff]
        %v1068 = vld [vmem:[#allocation4 + $0xbe8] sm:$0xff]
        %v1069 = vld [vmem:[#allocation4 + $0xbf0] sm:$0xff]
        %v1070 = vld [vmem:[#allocation4 + $0xbf8] sm:$0xff]
        %v1071 = vld [vmem:[#allocation4 + $0xc00] sm:$0xff]
        %v1072 = vld [vmem:[#allocation4 + $0xc08] sm:$0xff]
        %v1073 = vld [vmem:[#allocation4 + $0xc10] sm:$0xff]
        %v1074 = vld [vmem:[#allocation4 + $0xc18] sm:$0xff]
        %v1075 = vld [vmem:[#allocation4 + $0xc20] sm:$0xff]
        %v1076 = vld [vmem:[#allocation4 + $0xc28] sm:$0xff]
        %v1077 = vld [vmem:[#allocation4 + $0xc30] sm:$0xff]
        %v1078 = vld [vmem:[#allocation4 + $0xc38] sm:$0xff]
        %v1079 = vld [vmem:[#allocation4 + $0xc40] sm:$0xff]
        %v1080 = vld [vmem:[#allocation4 + $0xc48] sm:$0xff]
        %v1081 = vld [vmem:[#allocation4 + $0xc50] sm:$0xff]
        %v1082 = vld [vmem:[#allocation4 + $0xc58] sm:$0xff]
        %v1083 = vld [vmem:[#allocation4 + $0xc60] sm:$0xff]
        %v1084 = vld [vmem:[#allocation4 + $0xc68] sm:$0xff]
        %v1085 = vld [vmem:[#allocation4 + $0xc70] sm:$0xff]
        %v1086 = vld [vmem:[#allocation4 + $0xc78] sm:$0xff]
        %v1087 = vld [vmem:[#allocation4 + $0xc80] sm:$0xff]
        %v1088 = vld [vmem:[#allocation4 + $0xc88] sm:$0xff]
        %v1089 = vld [vmem:[#allocation4 + $0xc90] sm:$0xff]
        %v1090 = vld [vmem:[#allocation4 + $0xc98] sm:$0xff]
        %v1091 = vld [vmem:[#allocation4 + $0xca0] sm:$0xff]
        %v1092 = vld [vmem:[#allocation4 + $0xca8] sm:$0xff]
        %v1093 = vld [vmem:[#allocation4 + $0xcb0] sm:$0xff]
        %v1094 = vld [vmem:[#allocation4 + $0xcb8] sm:$0xff]
        %v1095 = vld [vmem:[#allocation4 + $0xcc0] sm:$0xff]
        %v1096 = vld [vmem:[#allocation4 + $0xcc8] sm:$0xff]
        %v1097 = vld [vmem:[#allocation4 + $0xcd0] sm:$0xff]
        %v1098 = vld [vmem:[#allocation4 + $0xcd8] sm:$0xff]
        %v1099 = vld [vmem:[#allocation4 + $0xce0] sm:$0xff]
        %v1100 = vld [vmem:[#allocation4 + $0xce8] sm:$0xff]
        %v1101 = vld [vmem:[#allocation4 + $0xcf0] sm:$0xff]
        %v1102 = vld [vmem:[#allocation4 + $0xcf8] sm:$0xff]
        %v1103 = vld [vmem:[#allocation4 + $0xd00] sm:$0xff]
        %v1104 = vld [vmem:[#allocation4 + $0xd08] sm:$0xff]
        %v1105 = vld [vmem:[#allocation4 + $0xd10] sm:$0xff]
        %v1106 = vld [vmem:[#allocation4 + $0xd18] sm:$0xff]
        %v1107 = vld [vmem:[#allocation4 + $0xd20] sm:$0xff]
        %v1108 = vld [vmem:[#allocation4 + $0xd28] sm:$0xff]
        %v1109 = vld [vmem:[#allocation4 + $0xd30] sm:$0xff]
        %v1110 = vld [vmem:[#allocation4 + $0xd38] sm:$0xff]
        %v1111 = vld [vmem:[#allocation4 + $0xd40] sm:$0xff]
        %v1112 = vld [vmem:[#allocation4 + $0xd48] sm:$0xff]
        %v1113 = vld [vmem:[#allocation4 + $0xd50] sm:$0xff]
        %v1114 = vld [vmem:[#allocation4 + $0xd58] sm:$0xff]
        %v1115 = vld [vmem:[#allocation4 + $0xd60] sm:$0xff]
        %v1116 = vld [vmem:[#allocation4 + $0xd68] sm:$0xff]
        %v1117 = vld [vmem:[#allocation4 + $0xd70] sm:$0xff]
        %v1118 = vld [vmem:[#allocation4 + $0xd78] sm:$0xff]
        %v1119 = vld [vmem:[#allocation4 + $0xd80] sm:$0xff]
        %v1120 = vld [vmem:[#allocation4 + $0xd88] sm:$0xff]
        %v1121 = vld [vmem:[#allocation4 + $0xd90] sm:$0xff]
        %v1122 = vld [vmem:[#allocation4 + $0xd98] sm:$0xff]
        %v1123 = vld [vmem:[#allocation4 + $0xda0] sm:$0xff]
        %v1124 = vld [vmem:[#allocation4 + $0xda8] sm:$0xff]
        %v1125 = vld [vmem:[#allocation4 + $0xdb0] sm:$0xff]
        %v1126 = vld [vmem:[#allocation4 + $0xdb8] sm:$0xff]
        %v1127 = vld [vmem:[#allocation4 + $0xdc0] sm:$0xff]
        %v1128 = vld [vmem:[#allocation4 + $0xdc8] sm:$0xff]
        %v1129 = vld [vmem:[#allocation4 + $0xdd0] sm:$0xff]
        %v1130 = vld [vmem:[#allocation4 + $0xdd8] sm:$0xff]
        %v1131 = vld [vmem:[#allocation4 + $0xde0] sm:$0xff]
        %v1132 = vld [vmem:[#allocation4 + $0xde8] sm:$0xff]
        %v1133 = vld [vmem:[#allocation4 + $0xdf0] sm:$0xff]
        %v1134 = vld [vmem:[#allocation4 + $0xdf8] sm:$0xff]
        %v1135 = vld [vmem:[#allocation4 + $0xe00] sm:$0xff]
        %v1136 = vld [vmem:[#allocation4 + $0xe08] sm:$0xff]
        %v1137 = vld [vmem:[#allocation4 + $0xe10] sm:$0xff]
        %v1138 = vld [vmem:[#allocation4 + $0xe18] sm:$0xff]
        %v1139 = vld [vmem:[#allocation4 + $0xe20] sm:$0xff]
        %v1140 = vld [vmem:[#allocation4 + $0xe28] sm:$0xff]
        %v1141 = vld [vmem:[#allocation4 + $0xe30] sm:$0xff]
        %v1142 = vld [vmem:[#allocation4 + $0xe38] sm:$0xff]
        %v1143 = vld [vmem:[#allocation4 + $0xe40] sm:$0xff]
        %v1144 = vld [vmem:[#allocation4 + $0xe48] sm:$0xff]
        %v1145 = vld [vmem:[#allocation4 + $0xe50] sm:$0xff]
        %v1146 = vld [vmem:[#allocation4 + $0xe58] sm:$0xff]
        %v1147 = vld [vmem:[#allocation4 + $0xe60] sm:$0xff]
        %v1148 = vld [vmem:[#allocation4 + $0xe68] sm:$0xff]
        %v1149 = vld [vmem:[#allocation4 + $0xe70] sm:$0xff]
        %v1150 = vld [vmem:[#allocation4 + $0xe78] sm:$0xff]
        %v1151 = vld [vmem:[#allocation4 + $0xe80] sm:$0xff]
        %v1152 = vld [vmem:[#allocation4 + $0xe88] sm:$0xff]
        %v1153 = vld [vmem:[#allocation4 + $0xe90] sm:$0xff]
        %v1154 = vld [vmem:[#allocation4 + $0xe98] sm:$0xff]
        %v1155 = vld [vmem:[#allocation4 + $0xea0] sm:$0xff]
        %v1156 = vld [vmem:[#allocation4 + $0xea8] sm:$0xff]
        %v1157 = vld [vmem:[#allocation4 + $0xeb0] sm:$0xff]
        %v1158 = vld [vmem:[#allocation4 + $0xeb8] sm:$0xff]
        %v1159 = vld [vmem:[#allocation4 + $0xec0] sm:$0xff]
        %v1160 = vld [vmem:[#allocation4 + $0xec8] sm:$0xff]
        %v1161 = vld [vmem:[#allocation4 + $0xed0] sm:$0xff]
        %v1162 = vld [vmem:[#allocation4 + $0xed8] sm:$0xff]
        %v1163 = vld [vmem:[#allocation4 + $0xee0] sm:$0xff]
        %v1164 = vld [vmem:[#allocation4 + $0xee8] sm:$0xff]
        %v1165 = vld [vmem:[#allocation4 + $0xef0] sm:$0xff]
        %v1166 = vld [vmem:[#allocation4 + $0xef8] sm:$0xff]
        %v1167 = vld [vmem:[#allocation4 + $0xf00] sm:$0xff]
        %v1168 = vld [vmem:[#allocation4 + $0xf08] sm:$0xff]
        %v1169 = vld [vmem:[#allocation4 + $0xf10] sm:$0xff]
        %v1170 = vld [vmem:[#allocation4 + $0xf18] sm:$0xff]
        %v1171 = vld [vmem:[#allocation4 + $0xf20] sm:$0xff]
        %v1172 = vld [vmem:[#allocation4 + $0xf28] sm:$0xff]
        %v1173 = vld [vmem:[#allocation4 + $0xf30] sm:$0xff]
        %v1174 = vld [vmem:[#allocation4 + $0xf38] sm:$0xff]
        %v1175 = vld [vmem:[#allocation4 + $0xf40] sm:$0xff]
        %v1176 = vld [vmem:[#allocation4 + $0xf48] sm:$0xff]
        %v1177 = vld [vmem:[#allocation4 + $0xf50] sm:$0xff]
        %v1178 = vld [vmem:[#allocation4 + $0xf58] sm:$0xff]
        %v1179 = vld [vmem:[#allocation4 + $0xf60] sm:$0xff]
        %v1180 = vld [vmem:[#allocation4 + $0xf68] sm:$0xff]
        %v1181 = vld [vmem:[#allocation4 + $0xf70] sm:$0xff]
        %v1182 = vld [vmem:[#allocation4 + $0xf78] sm:$0xff]
        %v1183 = vld [vmem:[#allocation4 + $0xf80] sm:$0xff]
        %v1184 = vld [vmem:[#allocation4 + $0xf88] sm:$0xff]
        %v1185 = vld [vmem:[#allocation4 + $0xf90] sm:$0xff]
        %v1186 = vld [vmem:[#allocation4 + $0xf98] sm:$0xff]
        %v1187 = vld [vmem:[#allocation4 + $0xfa0] sm:$0xff]
        %v1188 = vld [vmem:[#allocation4 + $0xfa8] sm:$0xff]
        %v1189 = vld [vmem:[#allocation4 + $0xfb0] sm:$0xff]
        %v1190 = vld [vmem:[#allocation4 + $0xfb8] sm:$0xff]
        %v1191 = vld [vmem:[#allocation4 + $0xfc0] sm:$0xff]
        %v1192 = vld [vmem:[#allocation4 + $0xfc8] sm:$0xff]
        %v1193 = vld [vmem:[#allocation4 + $0xfd0] sm:$0xff]
        %v1194 = vld [vmem:[#allocation4 + $0xfd8] sm:$0xff]
        %v1195 = vld [vmem:[#allocation4 + $0xfe0] sm:$0xff]
        %v1196 = vld [vmem:[#allocation4 + $0xfe8] sm:$0xff]
        %v1197 = vld [vmem:[#allocation4 + $0xff0] sm:$0xff]
        %v1198 = vld [vmem:[#allocation4 + $0xff8] sm:$0xff]
        %v1199 = vld [vmem:[#allocation6] sm:$0xf]
        %v1201 = vlaneseq
        %v1202 = vshrl.u32 %v1201, 7
        %v1203 = vsub.s32 0, %v1202
        %v1204 = vrot.slane %v1199, %v1203
        %v1205 = vlaneseq
        %v1206 = vshrl.u32 %v1205, 7
        %v1207 = vsub.s32 1, %v1206
        %v1208 = vrot.slane %v1199, %v1207
        %v1209 = vlaneseq
        %v1210 = vshrl.u32 %v1209, 7
        %v1211 = vsub.s32 2, %v1210
        %v1212 = vrot.slane %v1199, %v1211
        %v1213 = vlaneseq
        %v1214 = vshrl.u32 %v1213, 7
        %v1215 = vsub.s32 3, %v1214
        %v1216 = vrot.slane %v1199, %v1215
        %v1733 = vunpack.c.l.b16 %v687
        %v1734 = vunpack.c.h.b16 %v687
        %v1735 = vunpack.c.l.b16 %v688
        %v1736 = vunpack.c.h.b16 %v688
        %v1737 = vunpack.c.l.b16 %v689
        %v1738 = vunpack.c.h.b16 %v689
        %v1739 = vunpack.c.l.b16 %v690
        %v1740 = vunpack.c.h.b16 %v690
        %v1741 = vunpack.c.l.b16 %v691
        %v1742 = vunpack.c.h.b16 %v691
        %v1743 = vunpack.c.l.b16 %v692
        %v1744 = vunpack.c.h.b16 %v692
        %v1745 = vunpack.c.l.b16 %v693
        %v1746 = vunpack.c.h.b16 %v693
        %v1747 = vunpack.c.l.b16 %v694
        %v1748 = vunpack.c.h.b16 %v694
        %v1749 = vunpack.c.l.b16 %v695
        %v1750 = vunpack.c.h.b16 %v695
        %v1751 = vunpack.c.l.b16 %v696
        %v1752 = vunpack.c.h.b16 %v696
        %v1753 = vunpack.c.l.b16 %v697
        %v1754 = vunpack.c.h.b16 %v697
        %v1755 = vunpack.c.l.b16 %v698
        %v1756 = vunpack.c.h.b16 %v698
        %v1757 = vunpack.c.l.b16 %v699
        %v1758 = vunpack.c.h.b16 %v699
        %v1759 = vunpack.c.l.b16 %v700
        %v1760 = vunpack.c.h.b16 %v700
        %v1761 = vunpack.c.l.b16 %v701
        %v1762 = vunpack.c.h.b16 %v701
        %v1763 = vunpack.c.l.b16 %v702
        %v1764 = vunpack.c.h.b16 %v702
        %v1765 = vunpack.c.l.b16 %v703
        %v1766 = vunpack.c.h.b16 %v703
        %v1767 = vunpack.c.l.b16 %v704
        %v1768 = vunpack.c.h.b16 %v704
        %v1769 = vunpack.c.l.b16 %v705
        %v1770 = vunpack.c.h.b16 %v705
        %v1771 = vunpack.c.l.b16 %v706
        %v1772 = vunpack.c.h.b16 %v706
        %v1773 = vunpack.c.l.b16 %v707
        %v1774 = vunpack.c.h.b16 %v707
        %v1775 = vunpack.c.l.b16 %v708
        %v1776 = vunpack.c.h.b16 %v708
        %v1777 = vunpack.c.l.b16 %v709
        %v1778 = vunpack.c.h.b16 %v709
        %v1779 = vunpack.c.l.b16 %v710
        %v1780 = vunpack.c.h.b16 %v710
        %v1781 = vunpack.c.l.b16 %v711
        %v1782 = vunpack.c.h.b16 %v711
        %v1783 = vunpack.c.l.b16 %v712
        %v1784 = vunpack.c.h.b16 %v712
        %v1785 = vunpack.c.l.b16 %v713
        %v1786 = vunpack.c.h.b16 %v713
        %v1787 = vunpack.c.l.b16 %v714
        %v1788 = vunpack.c.h.b16 %v714
        %v1789 = vunpack.c.l.b16 %v715
        %v1790 = vunpack.c.h.b16 %v715
        %v1791 = vunpack.c.l.b16 %v716
        %v1792 = vunpack.c.h.b16 %v716
        %v1793 = vunpack.c.l.b16 %v717
        %v1794 = vunpack.c.h.b16 %v717
        %v1795 = vunpack.c.l.b16 %v718
        %v1796 = vunpack.c.h.b16 %v718
        %v1797 = vunpack.c.l.b16 %v719
        %v1798 = vunpack.c.h.b16 %v719
        %v1799 = vunpack.c.l.b16 %v720
        %v1800 = vunpack.c.h.b16 %v720
        %v1801 = vunpack.c.l.b16 %v721
        %v1802 = vunpack.c.h.b16 %v721
        %v1803 = vunpack.c.l.b16 %v722
        %v1804 = vunpack.c.h.b16 %v722
        %v1805 = vunpack.c.l.b16 %v723
        %v1806 = vunpack.c.h.b16 %v723
        %v1807 = vunpack.c.l.b16 %v724
        %v1808 = vunpack.c.h.b16 %v724
        %v1809 = vunpack.c.l.b16 %v725
        %v1810 = vunpack.c.h.b16 %v725
        %v1811 = vunpack.c.l.b16 %v726
        %v1812 = vunpack.c.h.b16 %v726
        %v1813 = vunpack.c.l.b16 %v727
        %v1814 = vunpack.c.h.b16 %v727
        %v1815 = vunpack.c.l.b16 %v728
        %v1816 = vunpack.c.h.b16 %v728
        %v1817 = vunpack.c.l.b16 %v729
        %v1818 = vunpack.c.h.b16 %v729
        %v1819 = vunpack.c.l.b16 %v730
        %v1820 = vunpack.c.h.b16 %v730
        %v1821 = vunpack.c.l.b16 %v731
        %v1822 = vunpack.c.h.b16 %v731
        %v1823 = vunpack.c.l.b16 %v732
        %v1824 = vunpack.c.h.b16 %v732
        %v1825 = vunpack.c.l.b16 %v733
        %v1826 = vunpack.c.h.b16 %v733
        %v1827 = vunpack.c.l.b16 %v734
        %v1828 = vunpack.c.h.b16 %v734
        %v1829 = vunpack.c.l.b16 %v735
        %v1830 = vunpack.c.h.b16 %v735
        %v1831 = vunpack.c.l.b16 %v736
        %v1832 = vunpack.c.h.b16 %v736
        %v1833 = vunpack.c.l.b16 %v737
        %v1834 = vunpack.c.h.b16 %v737
        %v1835 = vunpack.c.l.b16 %v738
        %v1836 = vunpack.c.h.b16 %v738
        %v1837 = vunpack.c.l.b16 %v739
        %v1838 = vunpack.c.h.b16 %v739
        %v1839 = vunpack.c.l.b16 %v740
        %v1840 = vunpack.c.h.b16 %v740
        %v1841 = vunpack.c.l.b16 %v741
        %v1842 = vunpack.c.h.b16 %v741
        %v1843 = vunpack.c.l.b16 %v742
        %v1844 = vunpack.c.h.b16 %v742
        %v1845 = vunpack.c.l.b16 %v743
        %v1846 = vunpack.c.h.b16 %v743
        %v1847 = vunpack.c.l.b16 %v744
        %v1848 = vunpack.c.h.b16 %v744
        %v1849 = vunpack.c.l.b16 %v745
        %v1850 = vunpack.c.h.b16 %v745
        %v1851 = vunpack.c.l.b16 %v746
        %v1852 = vunpack.c.h.b16 %v746
        %v1853 = vunpack.c.l.b16 %v747
        %v1854 = vunpack.c.h.b16 %v747
        %v1855 = vunpack.c.l.b16 %v748
        %v1856 = vunpack.c.h.b16 %v748
        %v1857 = vunpack.c.l.b16 %v749
        %v1858 = vunpack.c.h.b16 %v749
        %v1859 = vunpack.c.l.b16 %v750
        %v1860 = vunpack.c.h.b16 %v750
        %v1861 = vunpack.c.l.b16 %v751
        %v1862 = vunpack.c.h.b16 %v751
        %v1863 = vunpack.c.l.b16 %v752
        %v1864 = vunpack.c.h.b16 %v752
        %v1865 = vunpack.c.l.b16 %v753
        %v1866 = vunpack.c.h.b16 %v753
        %v1867 = vunpack.c.l.b16 %v754
        %v1868 = vunpack.c.h.b16 %v754
        %v1869 = vunpack.c.l.b16 %v755
        %v1870 = vunpack.c.h.b16 %v755
        %v1871 = vunpack.c.l.b16 %v756
        %v1872 = vunpack.c.h.b16 %v756
        %v1873 = vunpack.c.l.b16 %v757
        %v1874 = vunpack.c.h.b16 %v757
        %v1875 = vunpack.c.l.b16 %v758
        %v1876 = vunpack.c.h.b16 %v758
        %v1877 = vunpack.c.l.b16 %v759
        %v1878 = vunpack.c.h.b16 %v759
        %v1879 = vunpack.c.l.b16 %v760
        %v1880 = vunpack.c.h.b16 %v760
        %v1881 = vunpack.c.l.b16 %v761
        %v1882 = vunpack.c.h.b16 %v761
        %v1883 = vunpack.c.l.b16 %v762
        %v1884 = vunpack.c.h.b16 %v762
        %v1885 = vunpack.c.l.b16 %v763
        %v1886 = vunpack.c.h.b16 %v763
        %v1887 = vunpack.c.l.b16 %v764
        %v1888 = vunpack.c.h.b16 %v764
        %v1889 = vunpack.c.l.b16 %v765
        %v1890 = vunpack.c.h.b16 %v765
        %v1891 = vunpack.c.l.b16 %v766
        %v1892 = vunpack.c.h.b16 %v766
        %v1893 = vunpack.c.l.b16 %v767
        %v1894 = vunpack.c.h.b16 %v767
        %v1895 = vunpack.c.l.b16 %v768
        %v1896 = vunpack.c.h.b16 %v768
        %v1897 = vunpack.c.l.b16 %v769
        %v1898 = vunpack.c.h.b16 %v769
        %v1899 = vunpack.c.l.b16 %v770
        %v1900 = vunpack.c.h.b16 %v770
        %v1901 = vunpack.c.l.b16 %v771
        %v1902 = vunpack.c.h.b16 %v771
        %v1903 = vunpack.c.l.b16 %v772
        %v1904 = vunpack.c.h.b16 %v772
        %v1905 = vunpack.c.l.b16 %v773
        %v1906 = vunpack.c.h.b16 %v773
        %v1907 = vunpack.c.l.b16 %v774
        %v1908 = vunpack.c.h.b16 %v774
        %v1909 = vunpack.c.l.b16 %v775
        %v1910 = vunpack.c.h.b16 %v775
        %v1911 = vunpack.c.l.b16 %v776
        %v1912 = vunpack.c.h.b16 %v776
        %v1913 = vunpack.c.l.b16 %v777
        %v1914 = vunpack.c.h.b16 %v777
        %v1915 = vunpack.c.l.b16 %v778
        %v1916 = vunpack.c.h.b16 %v778
        %v1917 = vunpack.c.l.b16 %v779
        %v1918 = vunpack.c.h.b16 %v779
        %v1919 = vunpack.c.l.b16 %v780
        %v1920 = vunpack.c.h.b16 %v780
        %v1921 = vunpack.c.l.b16 %v781
        %v1922 = vunpack.c.h.b16 %v781
        %v1923 = vunpack.c.l.b16 %v782
        %v1924 = vunpack.c.h.b16 %v782
        %v1925 = vunpack.c.l.b16 %v783
        %v1926 = vunpack.c.h.b16 %v783
        %v1927 = vunpack.c.l.b16 %v784
        %v1928 = vunpack.c.h.b16 %v784
        %v1929 = vunpack.c.l.b16 %v785
        %v1930 = vunpack.c.h.b16 %v785
        %v1931 = vunpack.c.l.b16 %v786
        %v1932 = vunpack.c.h.b16 %v786
        %v1933 = vunpack.c.l.b16 %v787
        %v1934 = vunpack.c.h.b16 %v787
        %v1935 = vunpack.c.l.b16 %v788
        %v1936 = vunpack.c.h.b16 %v788
        %v1937 = vunpack.c.l.b16 %v789
        %v1938 = vunpack.c.h.b16 %v789
        %v1939 = vunpack.c.l.b16 %v790
        %v1940 = vunpack.c.h.b16 %v790
        %v1941 = vunpack.c.l.b16 %v791
        %v1942 = vunpack.c.h.b16 %v791
        %v1943 = vunpack.c.l.b16 %v792
        %v1944 = vunpack.c.h.b16 %v792
        %v1945 = vunpack.c.l.b16 %v793
        %v1946 = vunpack.c.h.b16 %v793
        %v1947 = vunpack.c.l.b16 %v794
        %v1948 = vunpack.c.h.b16 %v794
        %v1949 = vunpack.c.l.b16 %v795
        %v1950 = vunpack.c.h.b16 %v795
        %v1951 = vunpack.c.l.b16 %v796
        %v1952 = vunpack.c.h.b16 %v796
        %v1953 = vunpack.c.l.b16 %v797
        %v1954 = vunpack.c.h.b16 %v797
        %v1955 = vunpack.c.l.b16 %v798
        %v1956 = vunpack.c.h.b16 %v798
        %v1957 = vunpack.c.l.b16 %v799
        %v1958 = vunpack.c.h.b16 %v799
        %v1959 = vunpack.c.l.b16 %v800
        %v1960 = vunpack.c.h.b16 %v800
        %v1961 = vunpack.c.l.b16 %v801
        %v1962 = vunpack.c.h.b16 %v801
        %v1963 = vunpack.c.l.b16 %v802
        %v1964 = vunpack.c.h.b16 %v802
        %v1965 = vunpack.c.l.b16 %v803
        %v1966 = vunpack.c.h.b16 %v803
        %v1967 = vunpack.c.l.b16 %v804
        %v1968 = vunpack.c.h.b16 %v804
        %v1969 = vunpack.c.l.b16 %v805
        %v1970 = vunpack.c.h.b16 %v805
        %v1971 = vunpack.c.l.b16 %v806
        %v1972 = vunpack.c.h.b16 %v806
        %v1973 = vunpack.c.l.b16 %v807
        %v1974 = vunpack.c.h.b16 %v807
        %v1975 = vunpack.c.l.b16 %v808
        %v1976 = vunpack.c.h.b16 %v808
        %v1977 = vunpack.c.l.b16 %v809
        %v1978 = vunpack.c.h.b16 %v809
        %v1979 = vunpack.c.l.b16 %v810
        %v1980 = vunpack.c.h.b16 %v810
        %v1981 = vunpack.c.l.b16 %v811
        %v1982 = vunpack.c.h.b16 %v811
        %v1983 = vunpack.c.l.b16 %v812
        %v1984 = vunpack.c.h.b16 %v812
        %v1985 = vunpack.c.l.b16 %v813
        %v1986 = vunpack.c.h.b16 %v813
        %v1987 = vunpack.c.l.b16 %v814
        %v1988 = vunpack.c.h.b16 %v814
        %v1989 = vunpack.c.l.b16 %v815
        %v1990 = vunpack.c.h.b16 %v815
        %v1991 = vunpack.c.l.b16 %v816
        %v1992 = vunpack.c.h.b16 %v816
        %v1993 = vunpack.c.l.b16 %v817
        %v1994 = vunpack.c.h.b16 %v817
        %v1995 = vunpack.c.l.b16 %v818
        %v1996 = vunpack.c.h.b16 %v818
        %v1997 = vunpack.c.l.b16 %v819
        %v1998 = vunpack.c.h.b16 %v819
        %v1999 = vunpack.c.l.b16 %v820
        %v2000 = vunpack.c.h.b16 %v820
        %v2001 = vunpack.c.l.b16 %v821
        %v2002 = vunpack.c.h.b16 %v821
        %v2003 = vunpack.c.l.b16 %v822
        %v2004 = vunpack.c.h.b16 %v822
        %v2005 = vunpack.c.l.b16 %v823
        %v2006 = vunpack.c.h.b16 %v823
        %v2007 = vunpack.c.l.b16 %v824
        %v2008 = vunpack.c.h.b16 %v824
        %v2009 = vunpack.c.l.b16 %v825
        %v2010 = vunpack.c.h.b16 %v825
        %v2011 = vunpack.c.l.b16 %v826
        %v2012 = vunpack.c.h.b16 %v826
        %v2013 = vunpack.c.l.b16 %v827
        %v2014 = vunpack.c.h.b16 %v827
        %v2015 = vunpack.c.l.b16 %v828
        %v2016 = vunpack.c.h.b16 %v828
        %v2017 = vunpack.c.l.b16 %v829
        %v2018 = vunpack.c.h.b16 %v829
        %v2019 = vunpack.c.l.b16 %v830
        %v2020 = vunpack.c.h.b16 %v830
        %v2021 = vunpack.c.l.b16 %v831
        %v2022 = vunpack.c.h.b16 %v831
        %v2023 = vunpack.c.l.b16 %v832
        %v2024 = vunpack.c.h.b16 %v832
        %v2025 = vunpack.c.l.b16 %v833
        %v2026 = vunpack.c.h.b16 %v833
        %v2027 = vunpack.c.l.b16 %v834
        %v2028 = vunpack.c.h.b16 %v834
        %v2029 = vunpack.c.l.b16 %v835
        %v2030 = vunpack.c.h.b16 %v835
        %v2031 = vunpack.c.l.b16 %v836
        %v2032 = vunpack.c.h.b16 %v836
        %v2033 = vunpack.c.l.b16 %v837
        %v2034 = vunpack.c.h.b16 %v837
        %v2035 = vunpack.c.l.b16 %v838
        %v2036 = vunpack.c.h.b16 %v838
        %v2037 = vunpack.c.l.b16 %v839
        %v2038 = vunpack.c.h.b16 %v839
        %v2039 = vunpack.c.l.b16 %v840
        %v2040 = vunpack.c.h.b16 %v840
        %v2041 = vunpack.c.l.b16 %v841
        %v2042 = vunpack.c.h.b16 %v841
        %v2043 = vunpack.c.l.b16 %v842
        %v2044 = vunpack.c.h.b16 %v842
        %v2045 = vunpack.c.l.b16 %v843
        %v2046 = vunpack.c.h.b16 %v843
        %v2047 = vunpack.c.l.b16 %v844
        %v2048 = vunpack.c.h.b16 %v844
        %v2049 = vunpack.c.l.b16 %v845
        %v2050 = vunpack.c.h.b16 %v845
        %v2051 = vunpack.c.l.b16 %v846
        %v2052 = vunpack.c.h.b16 %v846
        %v2053 = vunpack.c.l.b16 %v847
        %v2054 = vunpack.c.h.b16 %v847
        %v2055 = vunpack.c.l.b16 %v848
        %v2056 = vunpack.c.h.b16 %v848
        %v2057 = vunpack.c.l.b16 %v849
        %v2058 = vunpack.c.h.b16 %v849
        %v2059 = vunpack.c.l.b16 %v850
        %v2060 = vunpack.c.h.b16 %v850
        %v2061 = vunpack.c.l.b16 %v851
        %v2062 = vunpack.c.h.b16 %v851
        %v2063 = vunpack.c.l.b16 %v852
        %v2064 = vunpack.c.h.b16 %v852
        %v2065 = vunpack.c.l.b16 %v853
        %v2066 = vunpack.c.h.b16 %v853
        %v2067 = vunpack.c.l.b16 %v854
        %v2068 = vunpack.c.h.b16 %v854
        %v2069 = vunpack.c.l.b16 %v855
        %v2070 = vunpack.c.h.b16 %v855
        %v2071 = vunpack.c.l.b16 %v856
        %v2072 = vunpack.c.h.b16 %v856
        %v2073 = vunpack.c.l.b16 %v857
        %v2074 = vunpack.c.h.b16 %v857
        %v2075 = vunpack.c.l.b16 %v858
        %v2076 = vunpack.c.h.b16 %v858
        %v2077 = vunpack.c.l.b16 %v859
        %v2078 = vunpack.c.h.b16 %v859
        %v2079 = vunpack.c.l.b16 %v860
        %v2080 = vunpack.c.h.b16 %v860
        %v2081 = vunpack.c.l.b16 %v861
        %v2082 = vunpack.c.h.b16 %v861
        %v2083 = vunpack.c.l.b16 %v862
        %v2084 = vunpack.c.h.b16 %v862
        %v2085 = vunpack.c.l.b16 %v863
        %v2086 = vunpack.c.h.b16 %v863
        %v2087 = vunpack.c.l.b16 %v864
        %v2088 = vunpack.c.h.b16 %v864
        %v2089 = vunpack.c.l.b16 %v865
        %v2090 = vunpack.c.h.b16 %v865
        %v2091 = vunpack.c.l.b16 %v866
        %v2092 = vunpack.c.h.b16 %v866
        %v2093 = vunpack.c.l.b16 %v867
        %v2094 = vunpack.c.h.b16 %v867
        %v2095 = vunpack.c.l.b16 %v868
        %v2096 = vunpack.c.h.b16 %v868
        %v2097 = vunpack.c.l.b16 %v869
        %v2098 = vunpack.c.h.b16 %v869
        %v2099 = vunpack.c.l.b16 %v870
        %v2100 = vunpack.c.h.b16 %v870
        %v2101 = vunpack.c.l.b16 %v871
        %v2102 = vunpack.c.h.b16 %v871
        %v2103 = vunpack.c.l.b16 %v872
        %v2104 = vunpack.c.h.b16 %v872
        %v2105 = vunpack.c.l.b16 %v873
        %v2106 = vunpack.c.h.b16 %v873
        %v2107 = vunpack.c.l.b16 %v874
        %v2108 = vunpack.c.h.b16 %v874
        %v2109 = vunpack.c.l.b16 %v875
        %v2110 = vunpack.c.h.b16 %v875
        %v2111 = vunpack.c.l.b16 %v876
        %v2112 = vunpack.c.h.b16 %v876
        %v2113 = vunpack.c.l.b16 %v877
        %v2114 = vunpack.c.h.b16 %v877
        %v2115 = vunpack.c.l.b16 %v878
        %v2116 = vunpack.c.h.b16 %v878
        %v2117 = vunpack.c.l.b16 %v879
        %v2118 = vunpack.c.h.b16 %v879
        %v2119 = vunpack.c.l.b16 %v880
        %v2120 = vunpack.c.h.b16 %v880
        %v2121 = vunpack.c.l.b16 %v881
        %v2122 = vunpack.c.h.b16 %v881
        %v2123 = vunpack.c.l.b16 %v882
        %v2124 = vunpack.c.h.b16 %v882
        %v2125 = vunpack.c.l.b16 %v883
        %v2126 = vunpack.c.h.b16 %v883
        %v2127 = vunpack.c.l.b16 %v884
        %v2128 = vunpack.c.h.b16 %v884
        %v2129 = vunpack.c.l.b16 %v885
        %v2130 = vunpack.c.h.b16 %v885
        %v2131 = vunpack.c.l.b16 %v886
        %v2132 = vunpack.c.h.b16 %v886
        %v2133 = vunpack.c.l.b16 %v887
        %v2134 = vunpack.c.h.b16 %v887
        %v2135 = vunpack.c.l.b16 %v888
        %v2136 = vunpack.c.h.b16 %v888
        %v2137 = vunpack.c.l.b16 %v889
        %v2138 = vunpack.c.h.b16 %v889
        %v2139 = vunpack.c.l.b16 %v890
        %v2140 = vunpack.c.h.b16 %v890
        %v2141 = vunpack.c.l.b16 %v891
        %v2142 = vunpack.c.h.b16 %v891
        %v2143 = vunpack.c.l.b16 %v892
        %v2144 = vunpack.c.h.b16 %v892
        %v2145 = vunpack.c.l.b16 %v893
        %v2146 = vunpack.c.h.b16 %v893
        %v2147 = vunpack.c.l.b16 %v894
        %v2148 = vunpack.c.h.b16 %v894
        %v2149 = vunpack.c.l.b16 %v895
        %v2150 = vunpack.c.h.b16 %v895
        %v2151 = vunpack.c.l.b16 %v896
        %v2152 = vunpack.c.h.b16 %v896
        %v2153 = vunpack.c.l.b16 %v897
        %v2154 = vunpack.c.h.b16 %v897
        %v2155 = vunpack.c.l.b16 %v898
        %v2156 = vunpack.c.h.b16 %v898
        %v2157 = vunpack.c.l.b16 %v899
        %v2158 = vunpack.c.h.b16 %v899
        %v2159 = vunpack.c.l.b16 %v900
        %v2160 = vunpack.c.h.b16 %v900
        %v2161 = vunpack.c.l.b16 %v901
        %v2162 = vunpack.c.h.b16 %v901
        %v2163 = vunpack.c.l.b16 %v902
        %v2164 = vunpack.c.h.b16 %v902
        %v2165 = vunpack.c.l.b16 %v903
        %v2166 = vunpack.c.h.b16 %v903
        %v2167 = vunpack.c.l.b16 %v904
        %v2168 = vunpack.c.h.b16 %v904
        %v2169 = vunpack.c.l.b16 %v905
        %v2170 = vunpack.c.h.b16 %v905
        %v2171 = vunpack.c.l.b16 %v906
        %v2172 = vunpack.c.h.b16 %v906
        %v2173 = vunpack.c.l.b16 %v907
        %v2174 = vunpack.c.h.b16 %v907
        %v2175 = vunpack.c.l.b16 %v908
        %v2176 = vunpack.c.h.b16 %v908
        %v2177 = vunpack.c.l.b16 %v909
        %v2178 = vunpack.c.h.b16 %v909
        %v2179 = vunpack.c.l.b16 %v910
        %v2180 = vunpack.c.h.b16 %v910
        %v2181 = vunpack.c.l.b16 %v911
        %v2182 = vunpack.c.h.b16 %v911
        %v2183 = vunpack.c.l.b16 %v912
        %v2184 = vunpack.c.h.b16 %v912
        %v2185 = vunpack.c.l.b16 %v913
        %v2186 = vunpack.c.h.b16 %v913
        %v2187 = vunpack.c.l.b16 %v914
        %v2188 = vunpack.c.h.b16 %v914
        %v2189 = vunpack.c.l.b16 %v915
        %v2190 = vunpack.c.h.b16 %v915
        %v2191 = vunpack.c.l.b16 %v916
        %v2192 = vunpack.c.h.b16 %v916
        %v2193 = vunpack.c.l.b16 %v917
        %v2194 = vunpack.c.h.b16 %v917
        %v2195 = vunpack.c.l.b16 %v918
        %v2196 = vunpack.c.h.b16 %v918
        %v2197 = vunpack.c.l.b16 %v919
        %v2198 = vunpack.c.h.b16 %v919
        %v2199 = vunpack.c.l.b16 %v920
        %v2200 = vunpack.c.h.b16 %v920
        %v2201 = vunpack.c.l.b16 %v921
        %v2202 = vunpack.c.h.b16 %v921
        %v2203 = vunpack.c.l.b16 %v922
        %v2204 = vunpack.c.h.b16 %v922
        %v2205 = vunpack.c.l.b16 %v923
        %v2206 = vunpack.c.h.b16 %v923
        %v2207 = vunpack.c.l.b16 %v924
        %v2208 = vunpack.c.h.b16 %v924
        %v2209 = vunpack.c.l.b16 %v925
        %v2210 = vunpack.c.h.b16 %v925
        %v2211 = vunpack.c.l.b16 %v926
        %v2212 = vunpack.c.h.b16 %v926
        %v2213 = vunpack.c.l.b16 %v927
        %v2214 = vunpack.c.h.b16 %v927
        %v2215 = vunpack.c.l.b16 %v928
        %v2216 = vunpack.c.h.b16 %v928
        %v2217 = vunpack.c.l.b16 %v929
        %v2218 = vunpack.c.h.b16 %v929
        %v2219 = vunpack.c.l.b16 %v930
        %v2220 = vunpack.c.h.b16 %v930
        %v2221 = vunpack.c.l.b16 %v931
        %v2222 = vunpack.c.h.b16 %v931
        %v2223 = vunpack.c.l.b16 %v932
        %v2224 = vunpack.c.h.b16 %v932
        %v2225 = vunpack.c.l.b16 %v933
        %v2226 = vunpack.c.h.b16 %v933
        %v2227 = vunpack.c.l.b16 %v934
        %v2228 = vunpack.c.h.b16 %v934
        %v2229 = vunpack.c.l.b16 %v935
        %v2230 = vunpack.c.h.b16 %v935
        %v2231 = vunpack.c.l.b16 %v936
        %v2232 = vunpack.c.h.b16 %v936
        %v2233 = vunpack.c.l.b16 %v937
        %v2234 = vunpack.c.h.b16 %v937
        %v2235 = vunpack.c.l.b16 %v938
        %v2236 = vunpack.c.h.b16 %v938
        %v2237 = vunpack.c.l.b16 %v939
        %v2238 = vunpack.c.h.b16 %v939
        %v2239 = vunpack.c.l.b16 %v940
        %v2240 = vunpack.c.h.b16 %v940
        %v2241 = vunpack.c.l.b16 %v941
        %v2242 = vunpack.c.h.b16 %v941
        %v2243 = vunpack.c.l.b16 %v942
        %v2244 = vunpack.c.h.b16 %v942
        %v2245 = vunpack.c.l.b16 %v943
        %v2246 = vunpack.c.h.b16 %v943
        %v2247 = vunpack.c.l.b16 %v944
        %v2248 = vunpack.c.h.b16 %v944
        %v2249 = vunpack.c.l.b16 %v945
        %v2250 = vunpack.c.h.b16 %v945
        %v2251 = vunpack.c.l.b16 %v946
        %v2252 = vunpack.c.h.b16 %v946
        %v2253 = vunpack.c.l.b16 %v947
        %v2254 = vunpack.c.h.b16 %v947
        %v2255 = vunpack.c.l.b16 %v948
        %v2256 = vunpack.c.h.b16 %v948
        %v2257 = vunpack.c.l.b16 %v949
        %v2258 = vunpack.c.h.b16 %v949
        %v2259 = vunpack.c.l.b16 %v950
        %v2260 = vunpack.c.h.b16 %v950
        %v2261 = vunpack.c.l.b16 %v951
        %v2262 = vunpack.c.h.b16 %v951
        %v2263 = vunpack.c.l.b16 %v952
        %v2264 = vunpack.c.h.b16 %v952
        %v2265 = vunpack.c.l.b16 %v953
        %v2266 = vunpack.c.h.b16 %v953
        %v2267 = vunpack.c.l.b16 %v954
        %v2268 = vunpack.c.h.b16 %v954
        %v2269 = vunpack.c.l.b16 %v955
        %v2270 = vunpack.c.h.b16 %v955
        %v2271 = vunpack.c.l.b16 %v956
        %v2272 = vunpack.c.h.b16 %v956
        %v2273 = vunpack.c.l.b16 %v957
        %v2274 = vunpack.c.h.b16 %v957
        %v2275 = vunpack.c.l.b16 %v958
        %v2276 = vunpack.c.h.b16 %v958
        %v2277 = vunpack.c.l.b16 %v959
        %v2278 = vunpack.c.h.b16 %v959
        %v2279 = vunpack.c.l.b16 %v960
        %v2280 = vunpack.c.h.b16 %v960
        %v2281 = vunpack.c.l.b16 %v961
        %v2282 = vunpack.c.h.b16 %v961
        %v2283 = vunpack.c.l.b16 %v962
        %v2284 = vunpack.c.h.b16 %v962
        %v2285 = vunpack.c.l.b16 %v963
        %v2286 = vunpack.c.h.b16 %v963
        %v2287 = vunpack.c.l.b16 %v964
        %v2288 = vunpack.c.h.b16 %v964
        %v2289 = vunpack.c.l.b16 %v965
        %v2290 = vunpack.c.h.b16 %v965
        %v2291 = vunpack.c.l.b16 %v966
        %v2292 = vunpack.c.h.b16 %v966
        %v2293 = vunpack.c.l.b16 %v967
        %v2294 = vunpack.c.h.b16 %v967
        %v2295 = vunpack.c.l.b16 %v968
        %v2296 = vunpack.c.h.b16 %v968
        %v2297 = vunpack.c.l.b16 %v969
        %v2298 = vunpack.c.h.b16 %v969
        %v2299 = vunpack.c.l.b16 %v970
        %v2300 = vunpack.c.h.b16 %v970
        %v2301 = vunpack.c.l.b16 %v971
        %v2302 = vunpack.c.h.b16 %v971
        %v2303 = vunpack.c.l.b16 %v972
        %v2304 = vunpack.c.h.b16 %v972
        %v2305 = vunpack.c.l.b16 %v973
        %v2306 = vunpack.c.h.b16 %v973
        %v2307 = vunpack.c.l.b16 %v974
        %v2308 = vunpack.c.h.b16 %v974
        %v2309 = vunpack.c.l.b16 %v975
        %v2310 = vunpack.c.h.b16 %v975
        %v2311 = vunpack.c.l.b16 %v976
        %v2312 = vunpack.c.h.b16 %v976
        %v2313 = vunpack.c.l.b16 %v977
        %v2314 = vunpack.c.h.b16 %v977
        %v2315 = vunpack.c.l.b16 %v978
        %v2316 = vunpack.c.h.b16 %v978
        %v2317 = vunpack.c.l.b16 %v979
        %v2318 = vunpack.c.h.b16 %v979
        %v2319 = vunpack.c.l.b16 %v980
        %v2320 = vunpack.c.h.b16 %v980
        %v2321 = vunpack.c.l.b16 %v981
        %v2322 = vunpack.c.h.b16 %v981
        %v2323 = vunpack.c.l.b16 %v982
        %v2324 = vunpack.c.h.b16 %v982
        %v2325 = vunpack.c.l.b16 %v983
        %v2326 = vunpack.c.h.b16 %v983
        %v2327 = vunpack.c.l.b16 %v984
        %v2328 = vunpack.c.h.b16 %v984
        %v2329 = vunpack.c.l.b16 %v985
        %v2330 = vunpack.c.h.b16 %v985
        %v2331 = vunpack.c.l.b16 %v986
        %v2332 = vunpack.c.h.b16 %v986
        %v2333 = vunpack.c.l.b16 %v987
        %v2334 = vunpack.c.h.b16 %v987
        %v2335 = vunpack.c.l.b16 %v988
        %v2336 = vunpack.c.h.b16 %v988
        %v2337 = vunpack.c.l.b16 %v989
        %v2338 = vunpack.c.h.b16 %v989
        %v2339 = vunpack.c.l.b16 %v990
        %v2340 = vunpack.c.h.b16 %v990
        %v2341 = vunpack.c.l.b16 %v991
        %v2342 = vunpack.c.h.b16 %v991
        %v2343 = vunpack.c.l.b16 %v992
        %v2344 = vunpack.c.h.b16 %v992
        %v2345 = vunpack.c.l.b16 %v993
        %v2346 = vunpack.c.h.b16 %v993
        %v2347 = vunpack.c.l.b16 %v994
        %v2348 = vunpack.c.h.b16 %v994
        %v2349 = vunpack.c.l.b16 %v995
        %v2350 = vunpack.c.h.b16 %v995
        %v2351 = vunpack.c.l.b16 %v996
        %v2352 = vunpack.c.h.b16 %v996
        %v2353 = vunpack.c.l.b16 %v997
        %v2354 = vunpack.c.h.b16 %v997
        %v2355 = vunpack.c.l.b16 %v998
        %v2356 = vunpack.c.h.b16 %v998
        %v2357 = vunpack.c.l.b16 %v999
        %v2358 = vunpack.c.h.b16 %v999
        %v2359 = vunpack.c.l.b16 %v1000
        %v2360 = vunpack.c.h.b16 %v1000
        %v2361 = vunpack.c.l.b16 %v1001
        %v2362 = vunpack.c.h.b16 %v1001
        %v2363 = vunpack.c.l.b16 %v1002
        %v2364 = vunpack.c.h.b16 %v1002
        %v2365 = vunpack.c.l.b16 %v1003
        %v2366 = vunpack.c.h.b16 %v1003
        %v2367 = vunpack.c.l.b16 %v1004
        %v2368 = vunpack.c.h.b16 %v1004
        %v2369 = vunpack.c.l.b16 %v1005
        %v2370 = vunpack.c.h.b16 %v1005
        %v2371 = vunpack.c.l.b16 %v1006
        %v2372 = vunpack.c.h.b16 %v1006
        %v2373 = vunpack.c.l.b16 %v1007
        %v2374 = vunpack.c.h.b16 %v1007
        %v2375 = vunpack.c.l.b16 %v1008
        %v2376 = vunpack.c.h.b16 %v1008
        %v2377 = vunpack.c.l.b16 %v1009
        %v2378 = vunpack.c.h.b16 %v1009
        %v2379 = vunpack.c.l.b16 %v1010
        %v2380 = vunpack.c.h.b16 %v1010
        %v2381 = vunpack.c.l.b16 %v1011
        %v2382 = vunpack.c.h.b16 %v1011
        %v2383 = vunpack.c.l.b16 %v1012
        %v2384 = vunpack.c.h.b16 %v1012
        %v2385 = vunpack.c.l.b16 %v1013
        %v2386 = vunpack.c.h.b16 %v1013
        %v2387 = vunpack.c.l.b16 %v1014
        %v2388 = vunpack.c.h.b16 %v1014
        %v2389 = vunpack.c.l.b16 %v1015
        %v2390 = vunpack.c.h.b16 %v1015
        %v2391 = vunpack.c.l.b16 %v1016
        %v2392 = vunpack.c.h.b16 %v1016
        %v2393 = vunpack.c.l.b16 %v1017
        %v2394 = vunpack.c.h.b16 %v1017
        %v2395 = vunpack.c.l.b16 %v1018
        %v2396 = vunpack.c.h.b16 %v1018
        %v2397 = vunpack.c.l.b16 %v1019
        %v2398 = vunpack.c.h.b16 %v1019
        %v2399 = vunpack.c.l.b16 %v1020
        %v2400 = vunpack.c.h.b16 %v1020
        %v2401 = vunpack.c.l.b16 %v1021
        %v2402 = vunpack.c.h.b16 %v1021
        %v2403 = vunpack.c.l.b16 %v1022
        %v2404 = vunpack.c.h.b16 %v1022
        %v2405 = vunpack.c.l.b16 %v1023
        %v2406 = vunpack.c.h.b16 %v1023
        %v2407 = vunpack.c.l.b16 %v1024
        %v2408 = vunpack.c.h.b16 %v1024
        %v2409 = vunpack.c.l.b16 %v1025
        %v2410 = vunpack.c.h.b16 %v1025
        %v2411 = vunpack.c.l.b16 %v1026
        %v2412 = vunpack.c.h.b16 %v1026
        %v2413 = vunpack.c.l.b16 %v1027
        %v2414 = vunpack.c.h.b16 %v1027
        %v2415 = vunpack.c.l.b16 %v1028
        %v2416 = vunpack.c.h.b16 %v1028
        %v2417 = vunpack.c.l.b16 %v1029
        %v2418 = vunpack.c.h.b16 %v1029
        %v2419 = vunpack.c.l.b16 %v1030
        %v2420 = vunpack.c.h.b16 %v1030
        %v2421 = vunpack.c.l.b16 %v1031
        %v2422 = vunpack.c.h.b16 %v1031
        %v2423 = vunpack.c.l.b16 %v1032
        %v2424 = vunpack.c.h.b16 %v1032
        %v2425 = vunpack.c.l.b16 %v1033
        %v2426 = vunpack.c.h.b16 %v1033
        %v2427 = vunpack.c.l.b16 %v1034
        %v2428 = vunpack.c.h.b16 %v1034
        %v2429 = vunpack.c.l.b16 %v1035
        %v2430 = vunpack.c.h.b16 %v1035
        %v2431 = vunpack.c.l.b16 %v1036
        %v2432 = vunpack.c.h.b16 %v1036
        %v2433 = vunpack.c.l.b16 %v1037
        %v2434 = vunpack.c.h.b16 %v1037
        %v2435 = vunpack.c.l.b16 %v1038
        %v2436 = vunpack.c.h.b16 %v1038
        %v2437 = vunpack.c.l.b16 %v1039
        %v2438 = vunpack.c.h.b16 %v1039
        %v2439 = vunpack.c.l.b16 %v1040
        %v2440 = vunpack.c.h.b16 %v1040
        %v2441 = vunpack.c.l.b16 %v1041
        %v2442 = vunpack.c.h.b16 %v1041
        %v2443 = vunpack.c.l.b16 %v1042
        %v2444 = vunpack.c.h.b16 %v1042
        %v2445 = vunpack.c.l.b16 %v1043
        %v2446 = vunpack.c.h.b16 %v1043
        %v2447 = vunpack.c.l.b16 %v1044
        %v2448 = vunpack.c.h.b16 %v1044
        %v2449 = vunpack.c.l.b16 %v1045
        %v2450 = vunpack.c.h.b16 %v1045
        %v2451 = vunpack.c.l.b16 %v1046
        %v2452 = vunpack.c.h.b16 %v1046
        %v2453 = vunpack.c.l.b16 %v1047
        %v2454 = vunpack.c.h.b16 %v1047
        %v2455 = vunpack.c.l.b16 %v1048
        %v2456 = vunpack.c.h.b16 %v1048
        %v2457 = vunpack.c.l.b16 %v1049
        %v2458 = vunpack.c.h.b16 %v1049
        %v2459 = vunpack.c.l.b16 %v1050
        %v2460 = vunpack.c.h.b16 %v1050
        %v2461 = vunpack.c.l.b16 %v1051
        %v2462 = vunpack.c.h.b16 %v1051
        %v2463 = vunpack.c.l.b16 %v1052
        %v2464 = vunpack.c.h.b16 %v1052
        %v2465 = vunpack.c.l.b16 %v1053
        %v2466 = vunpack.c.h.b16 %v1053
        %v2467 = vunpack.c.l.b16 %v1054
        %v2468 = vunpack.c.h.b16 %v1054
        %v2469 = vunpack.c.l.b16 %v1055
        %v2470 = vunpack.c.h.b16 %v1055
        %v2471 = vunpack.c.l.b16 %v1056
        %v2472 = vunpack.c.h.b16 %v1056
        %v2473 = vunpack.c.l.b16 %v1057
        %v2474 = vunpack.c.h.b16 %v1057
        %v2475 = vunpack.c.l.b16 %v1058
        %v2476 = vunpack.c.h.b16 %v1058
        %v2477 = vunpack.c.l.b16 %v1059
        %v2478 = vunpack.c.h.b16 %v1059
        %v2479 = vunpack.c.l.b16 %v1060
        %v2480 = vunpack.c.h.b16 %v1060
        %v2481 = vunpack.c.l.b16 %v1061
        %v2482 = vunpack.c.h.b16 %v1061
        %v2483 = vunpack.c.l.b16 %v1062
        %v2484 = vunpack.c.h.b16 %v1062
        %v2485 = vunpack.c.l.b16 %v1063
        %v2486 = vunpack.c.h.b16 %v1063
        %v2487 = vunpack.c.l.b16 %v1064
        %v2488 = vunpack.c.h.b16 %v1064
        %v2489 = vunpack.c.l.b16 %v1065
        %v2490 = vunpack.c.h.b16 %v1065
        %v2491 = vunpack.c.l.b16 %v1066
        %v2492 = vunpack.c.h.b16 %v1066
        %v2493 = vunpack.c.l.b16 %v1067
        %v2494 = vunpack.c.h.b16 %v1067
        %v2495 = vunpack.c.l.b16 %v1068
        %v2496 = vunpack.c.h.b16 %v1068
        %v2497 = vunpack.c.l.b16 %v1069
        %v2498 = vunpack.c.h.b16 %v1069
        %v2499 = vunpack.c.l.b16 %v1070
        %v2500 = vunpack.c.h.b16 %v1070
        %v2501 = vunpack.c.l.b16 %v1071
        %v2502 = vunpack.c.h.b16 %v1071
        %v2503 = vunpack.c.l.b16 %v1072
        %v2504 = vunpack.c.h.b16 %v1072
        %v2505 = vunpack.c.l.b16 %v1073
        %v2506 = vunpack.c.h.b16 %v1073
        %v2507 = vunpack.c.l.b16 %v1074
        %v2508 = vunpack.c.h.b16 %v1074
        %v2509 = vunpack.c.l.b16 %v1075
        %v2510 = vunpack.c.h.b16 %v1075
        %v2511 = vunpack.c.l.b16 %v1076
        %v2512 = vunpack.c.h.b16 %v1076
        %v2513 = vunpack.c.l.b16 %v1077
        %v2514 = vunpack.c.h.b16 %v1077
        %v2515 = vunpack.c.l.b16 %v1078
        %v2516 = vunpack.c.h.b16 %v1078
        %v2517 = vunpack.c.l.b16 %v1079
        %v2518 = vunpack.c.h.b16 %v1079
        %v2519 = vunpack.c.l.b16 %v1080
        %v2520 = vunpack.c.h.b16 %v1080
        %v2521 = vunpack.c.l.b16 %v1081
        %v2522 = vunpack.c.h.b16 %v1081
        %v2523 = vunpack.c.l.b16 %v1082
        %v2524 = vunpack.c.h.b16 %v1082
        %v2525 = vunpack.c.l.b16 %v1083
        %v2526 = vunpack.c.h.b16 %v1083
        %v2527 = vunpack.c.l.b16 %v1084
        %v2528 = vunpack.c.h.b16 %v1084
        %v2529 = vunpack.c.l.b16 %v1085
        %v2530 = vunpack.c.h.b16 %v1085
        %v2531 = vunpack.c.l.b16 %v1086
        %v2532 = vunpack.c.h.b16 %v1086
        %v2533 = vunpack.c.l.b16 %v1087
        %v2534 = vunpack.c.h.b16 %v1087
        %v2535 = vunpack.c.l.b16 %v1088
        %v2536 = vunpack.c.h.b16 %v1088
        %v2537 = vunpack.c.l.b16 %v1089
        %v2538 = vunpack.c.h.b16 %v1089
        %v2539 = vunpack.c.l.b16 %v1090
        %v2540 = vunpack.c.h.b16 %v1090
        %v2541 = vunpack.c.l.b16 %v1091
        %v2542 = vunpack.c.h.b16 %v1091
        %v2543 = vunpack.c.l.b16 %v1092
        %v2544 = vunpack.c.h.b16 %v1092
        %v2545 = vunpack.c.l.b16 %v1093
        %v2546 = vunpack.c.h.b16 %v1093
        %v2547 = vunpack.c.l.b16 %v1094
        %v2548 = vunpack.c.h.b16 %v1094
        %v2549 = vunpack.c.l.b16 %v1095
        %v2550 = vunpack.c.h.b16 %v1095
        %v2551 = vunpack.c.l.b16 %v1096
        %v2552 = vunpack.c.h.b16 %v1096
        %v2553 = vunpack.c.l.b16 %v1097
        %v2554 = vunpack.c.h.b16 %v1097
        %v2555 = vunpack.c.l.b16 %v1098
        %v2556 = vunpack.c.h.b16 %v1098
        %v2557 = vunpack.c.l.b16 %v1099
        %v2558 = vunpack.c.h.b16 %v1099
        %v2559 = vunpack.c.l.b16 %v1100
        %v2560 = vunpack.c.h.b16 %v1100
        %v2561 = vunpack.c.l.b16 %v1101
        %v2562 = vunpack.c.h.b16 %v1101
        %v2563 = vunpack.c.l.b16 %v1102
        %v2564 = vunpack.c.h.b16 %v1102
        %v2565 = vunpack.c.l.b16 %v1103
        %v2566 = vunpack.c.h.b16 %v1103
        %v2567 = vunpack.c.l.b16 %v1104
        %v2568 = vunpack.c.h.b16 %v1104
        %v2569 = vunpack.c.l.b16 %v1105
        %v2570 = vunpack.c.h.b16 %v1105
        %v2571 = vunpack.c.l.b16 %v1106
        %v2572 = vunpack.c.h.b16 %v1106
        %v2573 = vunpack.c.l.b16 %v1107
        %v2574 = vunpack.c.h.b16 %v1107
        %v2575 = vunpack.c.l.b16 %v1108
        %v2576 = vunpack.c.h.b16 %v1108
        %v2577 = vunpack.c.l.b16 %v1109
        %v2578 = vunpack.c.h.b16 %v1109
        %v2579 = vunpack.c.l.b16 %v1110
        %v2580 = vunpack.c.h.b16 %v1110
        %v2581 = vunpack.c.l.b16 %v1111
        %v2582 = vunpack.c.h.b16 %v1111
        %v2583 = vunpack.c.l.b16 %v1112
        %v2584 = vunpack.c.h.b16 %v1112
        %v2585 = vunpack.c.l.b16 %v1113
        %v2586 = vunpack.c.h.b16 %v1113
        %v2587 = vunpack.c.l.b16 %v1114
        %v2588 = vunpack.c.h.b16 %v1114
        %v2589 = vunpack.c.l.b16 %v1115
        %v2590 = vunpack.c.h.b16 %v1115
        %v2591 = vunpack.c.l.b16 %v1116
        %v2592 = vunpack.c.h.b16 %v1116
        %v2593 = vunpack.c.l.b16 %v1117
        %v2594 = vunpack.c.h.b16 %v1117
        %v2595 = vunpack.c.l.b16 %v1118
        %v2596 = vunpack.c.h.b16 %v1118
        %v2597 = vunpack.c.l.b16 %v1119
        %v2598 = vunpack.c.h.b16 %v1119
        %v2599 = vunpack.c.l.b16 %v1120
        %v2600 = vunpack.c.h.b16 %v1120
        %v2601 = vunpack.c.l.b16 %v1121
        %v2602 = vunpack.c.h.b16 %v1121
        %v2603 = vunpack.c.l.b16 %v1122
        %v2604 = vunpack.c.h.b16 %v1122
        %v2605 = vunpack.c.l.b16 %v1123
        %v2606 = vunpack.c.h.b16 %v1123
        %v2607 = vunpack.c.l.b16 %v1124
        %v2608 = vunpack.c.h.b16 %v1124
        %v2609 = vunpack.c.l.b16 %v1125
        %v2610 = vunpack.c.h.b16 %v1125
        %v2611 = vunpack.c.l.b16 %v1126
        %v2612 = vunpack.c.h.b16 %v1126
        %v2613 = vunpack.c.l.b16 %v1127
        %v2614 = vunpack.c.h.b16 %v1127
        %v2615 = vunpack.c.l.b16 %v1128
        %v2616 = vunpack.c.h.b16 %v1128
        %v2617 = vunpack.c.l.b16 %v1129
        %v2618 = vunpack.c.h.b16 %v1129
        %v2619 = vunpack.c.l.b16 %v1130
        %v2620 = vunpack.c.h.b16 %v1130
        %v2621 = vunpack.c.l.b16 %v1131
        %v2622 = vunpack.c.h.b16 %v1131
        %v2623 = vunpack.c.l.b16 %v1132
        %v2624 = vunpack.c.h.b16 %v1132
        %v2625 = vunpack.c.l.b16 %v1133
        %v2626 = vunpack.c.h.b16 %v1133
        %v2627 = vunpack.c.l.b16 %v1134
        %v2628 = vunpack.c.h.b16 %v1134
        %v2629 = vunpack.c.l.b16 %v1135
        %v2630 = vunpack.c.h.b16 %v1135
        %v2631 = vunpack.c.l.b16 %v1136
        %v2632 = vunpack.c.h.b16 %v1136
        %v2633 = vunpack.c.l.b16 %v1137
        %v2634 = vunpack.c.h.b16 %v1137
        %v2635 = vunpack.c.l.b16 %v1138
        %v2636 = vunpack.c.h.b16 %v1138
        %v2637 = vunpack.c.l.b16 %v1139
        %v2638 = vunpack.c.h.b16 %v1139
        %v2639 = vunpack.c.l.b16 %v1140
        %v2640 = vunpack.c.h.b16 %v1140
        %v2641 = vunpack.c.l.b16 %v1141
        %v2642 = vunpack.c.h.b16 %v1141
        %v2643 = vunpack.c.l.b16 %v1142
        %v2644 = vunpack.c.h.b16 %v1142
        %v2645 = vunpack.c.l.b16 %v1143
        %v2646 = vunpack.c.h.b16 %v1143
        %v2647 = vunpack.c.l.b16 %v1144
        %v2648 = vunpack.c.h.b16 %v1144
        %v2649 = vunpack.c.l.b16 %v1145
        %v2650 = vunpack.c.h.b16 %v1145
        %v2651 = vunpack.c.l.b16 %v1146
        %v2652 = vunpack.c.h.b16 %v1146
        %v2653 = vunpack.c.l.b16 %v1147
        %v2654 = vunpack.c.h.b16 %v1147
        %v2655 = vunpack.c.l.b16 %v1148
        %v2656 = vunpack.c.h.b16 %v1148
        %v2657 = vunpack.c.l.b16 %v1149
        %v2658 = vunpack.c.h.b16 %v1149
        %v2659 = vunpack.c.l.b16 %v1150
        %v2660 = vunpack.c.h.b16 %v1150
        %v2661 = vunpack.c.l.b16 %v1151
        %v2662 = vunpack.c.h.b16 %v1151
        %v2663 = vunpack.c.l.b16 %v1152
        %v2664 = vunpack.c.h.b16 %v1152
        %v2665 = vunpack.c.l.b16 %v1153
        %v2666 = vunpack.c.h.b16 %v1153
        %v2667 = vunpack.c.l.b16 %v1154
        %v2668 = vunpack.c.h.b16 %v1154
        %v2669 = vunpack.c.l.b16 %v1155
        %v2670 = vunpack.c.h.b16 %v1155
        %v2671 = vunpack.c.l.b16 %v1156
        %v2672 = vunpack.c.h.b16 %v1156
        %v2673 = vunpack.c.l.b16 %v1157
        %v2674 = vunpack.c.h.b16 %v1157
        %v2675 = vunpack.c.l.b16 %v1158
        %v2676 = vunpack.c.h.b16 %v1158
        %v2677 = vunpack.c.l.b16 %v1159
        %v2678 = vunpack.c.h.b16 %v1159
        %v2679 = vunpack.c.l.b16 %v1160
        %v2680 = vunpack.c.h.b16 %v1160
        %v2681 = vunpack.c.l.b16 %v1161
        %v2682 = vunpack.c.h.b16 %v1161
        %v2683 = vunpack.c.l.b16 %v1162
        %v2684 = vunpack.c.h.b16 %v1162
        %v2685 = vunpack.c.l.b16 %v1163
        %v2686 = vunpack.c.h.b16 %v1163
        %v2687 = vunpack.c.l.b16 %v1164
        %v2688 = vunpack.c.h.b16 %v1164
        %v2689 = vunpack.c.l.b16 %v1165
        %v2690 = vunpack.c.h.b16 %v1165
        %v2691 = vunpack.c.l.b16 %v1166
        %v2692 = vunpack.c.h.b16 %v1166
        %v2693 = vunpack.c.l.b16 %v1167
        %v2694 = vunpack.c.h.b16 %v1167
        %v2695 = vunpack.c.l.b16 %v1168
        %v2696 = vunpack.c.h.b16 %v1168
        %v2697 = vunpack.c.l.b16 %v1169
        %v2698 = vunpack.c.h.b16 %v1169
        %v2699 = vunpack.c.l.b16 %v1170
        %v2700 = vunpack.c.h.b16 %v1170
        %v2701 = vunpack.c.l.b16 %v1171
        %v2702 = vunpack.c.h.b16 %v1171
        %v2703 = vunpack.c.l.b16 %v1172
        %v2704 = vunpack.c.h.b16 %v1172
        %v2705 = vunpack.c.l.b16 %v1173
        %v2706 = vunpack.c.h.b16 %v1173
        %v2707 = vunpack.c.l.b16 %v1174
        %v2708 = vunpack.c.h.b16 %v1174
        %v2709 = vunpack.c.l.b16 %v1175
        %v2710 = vunpack.c.h.b16 %v1175
        %v2711 = vunpack.c.l.b16 %v1176
        %v2712 = vunpack.c.h.b16 %v1176
        %v2713 = vunpack.c.l.b16 %v1177
        %v2714 = vunpack.c.h.b16 %v1177
        %v2715 = vunpack.c.l.b16 %v1178
        %v2716 = vunpack.c.h.b16 %v1178
        %v2717 = vunpack.c.l.b16 %v1179
        %v2718 = vunpack.c.h.b16 %v1179
        %v2719 = vunpack.c.l.b16 %v1180
        %v2720 = vunpack.c.h.b16 %v1180
        %v2721 = vunpack.c.l.b16 %v1181
        %v2722 = vunpack.c.h.b16 %v1181
        %v2723 = vunpack.c.l.b16 %v1182
        %v2724 = vunpack.c.h.b16 %v1182
        %v2725 = vunpack.c.l.b16 %v1183
        %v2726 = vunpack.c.h.b16 %v1183
        %v2727 = vunpack.c.l.b16 %v1184
        %v2728 = vunpack.c.h.b16 %v1184
        %v2729 = vunpack.c.l.b16 %v1185
        %v2730 = vunpack.c.h.b16 %v1185
        %v2731 = vunpack.c.l.b16 %v1186
        %v2732 = vunpack.c.h.b16 %v1186
        %v2733 = vunpack.c.l.b16 %v1187
        %v2734 = vunpack.c.h.b16 %v1187
        %v2735 = vunpack.c.l.b16 %v1188
        %v2736 = vunpack.c.h.b16 %v1188
        %v2737 = vunpack.c.l.b16 %v1189
        %v2738 = vunpack.c.h.b16 %v1189
        %v2739 = vunpack.c.l.b16 %v1190
        %v2740 = vunpack.c.h.b16 %v1190
        %v2741 = vunpack.c.l.b16 %v1191
        %v2742 = vunpack.c.h.b16 %v1191
        %v2743 = vunpack.c.l.b16 %v1192
        %v2744 = vunpack.c.h.b16 %v1192
        %v2745 = vunpack.c.l.b16 %v1193
        %v2746 = vunpack.c.h.b16 %v1193
        %v2747 = vunpack.c.l.b16 %v1194
        %v2748 = vunpack.c.h.b16 %v1194
        %v2749 = vunpack.c.l.b16 %v1195
        %v2750 = vunpack.c.h.b16 %v1195
        %v2751 = vunpack.c.l.b16 %v1196
        %v2752 = vunpack.c.h.b16 %v1196
        %v2753 = vunpack.c.l.b16 %v1197
        %v2754 = vunpack.c.h.b16 %v1197
        %v2755 = vunpack.c.l.b16 %v1198
        %v2756 = vunpack.c.h.b16 %v1198
        %v2757 = vpack.c.b16 %v1737, %v1733
        %v2758 = vpack.c.b16 %v1738, %v1734
        %v2759 = vpack.c.b16 %v1739, %v1735
        %v2760 = vpack.c.b16 %v1740, %v1736
        %v2761 = vpack.c.b16 %v1745, %v1741
        %v2762 = vpack.c.b16 %v1746, %v1742
        %v2763 = vpack.c.b16 %v1747, %v1743
        %v2764 = vpack.c.b16 %v1748, %v1744
        %v2765 = vpack.c.b16 %v1753, %v1749
        %v2766 = vpack.c.b16 %v1754, %v1750
        %v2767 = vpack.c.b16 %v1755, %v1751
        %v2768 = vpack.c.b16 %v1756, %v1752
        %v2769 = vpack.c.b16 %v1761, %v1757
        %v2770 = vpack.c.b16 %v1762, %v1758
        %v2771 = vpack.c.b16 %v1763, %v1759
        %v2772 = vpack.c.b16 %v1764, %v1760
        %v2773 = vpack.c.b16 %v1769, %v1765
        %v2774 = vpack.c.b16 %v1770, %v1766
        %v2775 = vpack.c.b16 %v1771, %v1767
        %v2776 = vpack.c.b16 %v1772, %v1768
        %v2777 = vpack.c.b16 %v1777, %v1773
        %v2778 = vpack.c.b16 %v1778, %v1774
        %v2779 = vpack.c.b16 %v1779, %v1775
        %v2780 = vpack.c.b16 %v1780, %v1776
        %v2781 = vpack.c.b16 %v1785, %v1781
        %v2782 = vpack.c.b16 %v1786, %v1782
        %v2783 = vpack.c.b16 %v1787, %v1783
        %v2784 = vpack.c.b16 %v1788, %v1784
        %v2785 = vpack.c.b16 %v1793, %v1789
        %v2786 = vpack.c.b16 %v1794, %v1790
        %v2787 = vpack.c.b16 %v1795, %v1791
        %v2788 = vpack.c.b16 %v1796, %v1792
        %v2789 = vpack.c.b16 %v1801, %v1797
        %v2790 = vpack.c.b16 %v1802, %v1798
        %v2791 = vpack.c.b16 %v1803, %v1799
        %v2792 = vpack.c.b16 %v1804, %v1800
        %v2793 = vpack.c.b16 %v1809, %v1805
        %v2794 = vpack.c.b16 %v1810, %v1806
        %v2795 = vpack.c.b16 %v1811, %v1807
        %v2796 = vpack.c.b16 %v1812, %v1808
        %v2797 = vpack.c.b16 %v1817, %v1813
        %v2798 = vpack.c.b16 %v1818, %v1814
        %v2799 = vpack.c.b16 %v1819, %v1815
        %v2800 = vpack.c.b16 %v1820, %v1816
        %v2801 = vpack.c.b16 %v1825, %v1821
        %v2802 = vpack.c.b16 %v1826, %v1822
        %v2803 = vpack.c.b16 %v1827, %v1823
        %v2804 = vpack.c.b16 %v1828, %v1824
        %v2805 = vpack.c.b16 %v1833, %v1829
        %v2806 = vpack.c.b16 %v1834, %v1830
        %v2807 = vpack.c.b16 %v1835, %v1831
        %v2808 = vpack.c.b16 %v1836, %v1832
        %v2809 = vpack.c.b16 %v1841, %v1837
        %v2810 = vpack.c.b16 %v1842, %v1838
        %v2811 = vpack.c.b16 %v1843, %v1839
        %v2812 = vpack.c.b16 %v1844, %v1840
        %v2813 = vpack.c.b16 %v1849, %v1845
        %v2814 = vpack.c.b16 %v1850, %v1846
        %v2815 = vpack.c.b16 %v1851, %v1847
        %v2816 = vpack.c.b16 %v1852, %v1848
        %v2817 = vpack.c.b16 %v1857, %v1853
        %v2818 = vpack.c.b16 %v1858, %v1854
        %v2819 = vpack.c.b16 %v1859, %v1855
        %v2820 = vpack.c.b16 %v1860, %v1856
        %v2821 = vpack.c.b16 %v1865, %v1861
        %v2822 = vpack.c.b16 %v1866, %v1862
        %v2823 = vpack.c.b16 %v1867, %v1863
        %v2824 = vpack.c.b16 %v1868, %v1864
        %v2825 = vpack.c.b16 %v1873, %v1869
        %v2826 = vpack.c.b16 %v1874, %v1870
        %v2827 = vpack.c.b16 %v1875, %v1871
        %v2828 = vpack.c.b16 %v1876, %v1872
        %v2829 = vpack.c.b16 %v1881, %v1877
        %v2830 = vpack.c.b16 %v1882, %v1878
        %v2831 = vpack.c.b16 %v1883, %v1879
        %v2832 = vpack.c.b16 %v1884, %v1880
        %v2833 = vpack.c.b16 %v1889, %v1885
        %v2834 = vpack.c.b16 %v1890, %v1886
        %v2835 = vpack.c.b16 %v1891, %v1887
        %v2836 = vpack.c.b16 %v1892, %v1888
        %v2837 = vpack.c.b16 %v1897, %v1893
        %v2838 = vpack.c.b16 %v1898, %v1894
        %v2839 = vpack.c.b16 %v1899, %v1895
        %v2840 = vpack.c.b16 %v1900, %v1896
        %v2841 = vpack.c.b16 %v1905, %v1901
        %v2842 = vpack.c.b16 %v1906, %v1902
        %v2843 = vpack.c.b16 %v1907, %v1903
        %v2844 = vpack.c.b16 %v1908, %v1904
        %v2845 = vpack.c.b16 %v1913, %v1909
        %v2846 = vpack.c.b16 %v1914, %v1910
        %v2847 = vpack.c.b16 %v1915, %v1911
        %v2848 = vpack.c.b16 %v1916, %v1912
        %v2849 = vpack.c.b16 %v1921, %v1917
        %v2850 = vpack.c.b16 %v1922, %v1918
        %v2851 = vpack.c.b16 %v1923, %v1919
        %v2852 = vpack.c.b16 %v1924, %v1920
        %v2853 = vpack.c.b16 %v1929, %v1925
        %v2854 = vpack.c.b16 %v1930, %v1926
        %v2855 = vpack.c.b16 %v1931, %v1927
        %v2856 = vpack.c.b16 %v1932, %v1928
        %v2857 = vpack.c.b16 %v1937, %v1933
        %v2858 = vpack.c.b16 %v1938, %v1934
        %v2859 = vpack.c.b16 %v1939, %v1935
        %v2860 = vpack.c.b16 %v1940, %v1936
        %v2861 = vpack.c.b16 %v1945, %v1941
        %v2862 = vpack.c.b16 %v1946, %v1942
        %v2863 = vpack.c.b16 %v1947, %v1943
        %v2864 = vpack.c.b16 %v1948, %v1944
        %v2865 = vpack.c.b16 %v1953, %v1949
        %v2866 = vpack.c.b16 %v1954, %v1950
        %v2867 = vpack.c.b16 %v1955, %v1951
        %v2868 = vpack.c.b16 %v1956, %v1952
        %v2869 = vpack.c.b16 %v1961, %v1957
        %v2870 = vpack.c.b16 %v1962, %v1958
        %v2871 = vpack.c.b16 %v1963, %v1959
        %v2872 = vpack.c.b16 %v1964, %v1960
        %v2873 = vpack.c.b16 %v1969, %v1965
        %v2874 = vpack.c.b16 %v1970, %v1966
        %v2875 = vpack.c.b16 %v1971, %v1967
        %v2876 = vpack.c.b16 %v1972, %v1968
        %v2877 = vpack.c.b16 %v1977, %v1973
        %v2878 = vpack.c.b16 %v1978, %v1974
        %v2879 = vpack.c.b16 %v1979, %v1975
        %v2880 = vpack.c.b16 %v1980, %v1976
        %v2881 = vpack.c.b16 %v1985, %v1981
        %v2882 = vpack.c.b16 %v1986, %v1982
        %v2883 = vpack.c.b16 %v1987, %v1983
        %v2884 = vpack.c.b16 %v1988, %v1984
        %v2885 = vpack.c.b16 %v1993, %v1989
        %v2886 = vpack.c.b16 %v1994, %v1990
        %v2887 = vpack.c.b16 %v1995, %v1991
        %v2888 = vpack.c.b16 %v1996, %v1992
        %v2889 = vpack.c.b16 %v2001, %v1997
        %v2890 = vpack.c.b16 %v2002, %v1998
        %v2891 = vpack.c.b16 %v2003, %v1999
        %v2892 = vpack.c.b16 %v2004, %v2000
        %v2893 = vpack.c.b16 %v2009, %v2005
        %v2894 = vpack.c.b16 %v2010, %v2006
        %v2895 = vpack.c.b16 %v2011, %v2007
        %v2896 = vpack.c.b16 %v2012, %v2008
        %v2897 = vpack.c.b16 %v2017, %v2013
        %v2898 = vpack.c.b16 %v2018, %v2014
        %v2899 = vpack.c.b16 %v2019, %v2015
        %v2900 = vpack.c.b16 %v2020, %v2016
        %v2901 = vpack.c.b16 %v2025, %v2021
        %v2902 = vpack.c.b16 %v2026, %v2022
        %v2903 = vpack.c.b16 %v2027, %v2023
        %v2904 = vpack.c.b16 %v2028, %v2024
        %v2905 = vpack.c.b16 %v2033, %v2029
        %v2906 = vpack.c.b16 %v2034, %v2030
        %v2907 = vpack.c.b16 %v2035, %v2031
        %v2908 = vpack.c.b16 %v2036, %v2032
        %v2909 = vpack.c.b16 %v2041, %v2037
        %v2910 = vpack.c.b16 %v2042, %v2038
        %v2911 = vpack.c.b16 %v2043, %v2039
        %v2912 = vpack.c.b16 %v2044, %v2040
        %v2913 = vpack.c.b16 %v2049, %v2045
        %v2914 = vpack.c.b16 %v2050, %v2046
        %v2915 = vpack.c.b16 %v2051, %v2047
        %v2916 = vpack.c.b16 %v2052, %v2048
        %v2917 = vpack.c.b16 %v2057, %v2053
        %v2918 = vpack.c.b16 %v2058, %v2054
        %v2919 = vpack.c.b16 %v2059, %v2055
        %v2920 = vpack.c.b16 %v2060, %v2056
        %v2921 = vpack.c.b16 %v2065, %v2061
        %v2922 = vpack.c.b16 %v2066, %v2062
        %v2923 = vpack.c.b16 %v2067, %v2063
        %v2924 = vpack.c.b16 %v2068, %v2064
        %v2925 = vpack.c.b16 %v2073, %v2069
        %v2926 = vpack.c.b16 %v2074, %v2070
        %v2927 = vpack.c.b16 %v2075, %v2071
        %v2928 = vpack.c.b16 %v2076, %v2072
        %v2929 = vpack.c.b16 %v2081, %v2077
        %v2930 = vpack.c.b16 %v2082, %v2078
        %v2931 = vpack.c.b16 %v2083, %v2079
        %v2932 = vpack.c.b16 %v2084, %v2080
        %v2933 = vpack.c.b16 %v2089, %v2085
        %v2934 = vpack.c.b16 %v2090, %v2086
        %v2935 = vpack.c.b16 %v2091, %v2087
        %v2936 = vpack.c.b16 %v2092, %v2088
        %v2937 = vpack.c.b16 %v2097, %v2093
        %v2938 = vpack.c.b16 %v2098, %v2094
        %v2939 = vpack.c.b16 %v2099, %v2095
        %v2940 = vpack.c.b16 %v2100, %v2096
        %v2941 = vpack.c.b16 %v2105, %v2101
        %v2942 = vpack.c.b16 %v2106, %v2102
        %v2943 = vpack.c.b16 %v2107, %v2103
        %v2944 = vpack.c.b16 %v2108, %v2104
        %v2945 = vpack.c.b16 %v2113, %v2109
        %v2946 = vpack.c.b16 %v2114, %v2110
        %v2947 = vpack.c.b16 %v2115, %v2111
        %v2948 = vpack.c.b16 %v2116, %v2112
        %v2949 = vpack.c.b16 %v2121, %v2117
        %v2950 = vpack.c.b16 %v2122, %v2118
        %v2951 = vpack.c.b16 %v2123, %v2119
        %v2952 = vpack.c.b16 %v2124, %v2120
        %v2953 = vpack.c.b16 %v2129, %v2125
        %v2954 = vpack.c.b16 %v2130, %v2126
        %v2955 = vpack.c.b16 %v2131, %v2127
        %v2956 = vpack.c.b16 %v2132, %v2128
        %v2957 = vpack.c.b16 %v2137, %v2133
        %v2958 = vpack.c.b16 %v2138, %v2134
        %v2959 = vpack.c.b16 %v2139, %v2135
        %v2960 = vpack.c.b16 %v2140, %v2136
        %v2961 = vpack.c.b16 %v2145, %v2141
        %v2962 = vpack.c.b16 %v2146, %v2142
        %v2963 = vpack.c.b16 %v2147, %v2143
        %v2964 = vpack.c.b16 %v2148, %v2144
        %v2965 = vpack.c.b16 %v2153, %v2149
        %v2966 = vpack.c.b16 %v2154, %v2150
        %v2967 = vpack.c.b16 %v2155, %v2151
        %v2968 = vpack.c.b16 %v2156, %v2152
        %v2969 = vpack.c.b16 %v2161, %v2157
        %v2970 = vpack.c.b16 %v2162, %v2158
        %v2971 = vpack.c.b16 %v2163, %v2159
        %v2972 = vpack.c.b16 %v2164, %v2160
        %v2973 = vpack.c.b16 %v2169, %v2165
        %v2974 = vpack.c.b16 %v2170, %v2166
        %v2975 = vpack.c.b16 %v2171, %v2167
        %v2976 = vpack.c.b16 %v2172, %v2168
        %v2977 = vpack.c.b16 %v2177, %v2173
        %v2978 = vpack.c.b16 %v2178, %v2174
        %v2979 = vpack.c.b16 %v2179, %v2175
        %v2980 = vpack.c.b16 %v2180, %v2176
        %v2981 = vpack.c.b16 %v2185, %v2181
        %v2982 = vpack.c.b16 %v2186, %v2182
        %v2983 = vpack.c.b16 %v2187, %v2183
        %v2984 = vpack.c.b16 %v2188, %v2184
        %v2985 = vpack.c.b16 %v2193, %v2189
        %v2986 = vpack.c.b16 %v2194, %v2190
        %v2987 = vpack.c.b16 %v2195, %v2191
        %v2988 = vpack.c.b16 %v2196, %v2192
        %v2989 = vpack.c.b16 %v2201, %v2197
        %v2990 = vpack.c.b16 %v2202, %v2198
        %v2991 = vpack.c.b16 %v2203, %v2199
        %v2992 = vpack.c.b16 %v2204, %v2200
        %v2993 = vpack.c.b16 %v2209, %v2205
        %v2994 = vpack.c.b16 %v2210, %v2206
        %v2995 = vpack.c.b16 %v2211, %v2207
        %v2996 = vpack.c.b16 %v2212, %v2208
        %v2997 = vpack.c.b16 %v2217, %v2213
        %v2998 = vpack.c.b16 %v2218, %v2214
        %v2999 = vpack.c.b16 %v2219, %v2215
        %v3000 = vpack.c.b16 %v2220, %v2216
        %v3001 = vpack.c.b16 %v2225, %v2221
        %v3002 = vpack.c.b16 %v2226, %v2222
        %v3003 = vpack.c.b16 %v2227, %v2223
        %v3004 = vpack.c.b16 %v2228, %v2224
        %v3005 = vpack.c.b16 %v2233, %v2229
        %v3006 = vpack.c.b16 %v2234, %v2230
        %v3007 = vpack.c.b16 %v2235, %v2231
        %v3008 = vpack.c.b16 %v2236, %v2232
        %v3009 = vpack.c.b16 %v2241, %v2237
        %v3010 = vpack.c.b16 %v2242, %v2238
        %v3011 = vpack.c.b16 %v2243, %v2239
        %v3012 = vpack.c.b16 %v2244, %v2240
        %v3013 = vpack.c.b16 %v2249, %v2245
        %v3014 = vpack.c.b16 %v2250, %v2246
        %v3015 = vpack.c.b16 %v2251, %v2247
        %v3016 = vpack.c.b16 %v2252, %v2248
        %v3017 = vpack.c.b16 %v2257, %v2253
        %v3018 = vpack.c.b16 %v2258, %v2254
        %v3019 = vpack.c.b16 %v2259, %v2255
        %v3020 = vpack.c.b16 %v2260, %v2256
        %v3021 = vpack.c.b16 %v2265, %v2261
        %v3022 = vpack.c.b16 %v2266, %v2262
        %v3023 = vpack.c.b16 %v2267, %v2263
        %v3024 = vpack.c.b16 %v2268, %v2264
        %v3025 = vpack.c.b16 %v2273, %v2269
        %v3026 = vpack.c.b16 %v2274, %v2270
        %v3027 = vpack.c.b16 %v2275, %v2271
        %v3028 = vpack.c.b16 %v2276, %v2272
        %v3029 = vpack.c.b16 %v2281, %v2277
        %v3030 = vpack.c.b16 %v2282, %v2278
        %v3031 = vpack.c.b16 %v2283, %v2279
        %v3032 = vpack.c.b16 %v2284, %v2280
        %v3033 = vpack.c.b16 %v2289, %v2285
        %v3034 = vpack.c.b16 %v2290, %v2286
        %v3035 = vpack.c.b16 %v2291, %v2287
        %v3036 = vpack.c.b16 %v2292, %v2288
        %v3037 = vpack.c.b16 %v2297, %v2293
        %v3038 = vpack.c.b16 %v2298, %v2294
        %v3039 = vpack.c.b16 %v2299, %v2295
        %v3040 = vpack.c.b16 %v2300, %v2296
        %v3041 = vpack.c.b16 %v2305, %v2301
        %v3042 = vpack.c.b16 %v2306, %v2302
        %v3043 = vpack.c.b16 %v2307, %v2303
        %v3044 = vpack.c.b16 %v2308, %v2304
        %v3045 = vpack.c.b16 %v2313, %v2309
        %v3046 = vpack.c.b16 %v2314, %v2310
        %v3047 = vpack.c.b16 %v2315, %v2311
        %v3048 = vpack.c.b16 %v2316, %v2312
        %v3049 = vpack.c.b16 %v2321, %v2317
        %v3050 = vpack.c.b16 %v2322, %v2318
        %v3051 = vpack.c.b16 %v2323, %v2319
        %v3052 = vpack.c.b16 %v2324, %v2320
        %v3053 = vpack.c.b16 %v2329, %v2325
        %v3054 = vpack.c.b16 %v2330, %v2326
        %v3055 = vpack.c.b16 %v2331, %v2327
        %v3056 = vpack.c.b16 %v2332, %v2328
        %v3057 = vpack.c.b16 %v2337, %v2333
        %v3058 = vpack.c.b16 %v2338, %v2334
        %v3059 = vpack.c.b16 %v2339, %v2335
        %v3060 = vpack.c.b16 %v2340, %v2336
        %v3061 = vpack.c.b16 %v2345, %v2341
        %v3062 = vpack.c.b16 %v2346, %v2342
        %v3063 = vpack.c.b16 %v2347, %v2343
        %v3064 = vpack.c.b16 %v2348, %v2344
        %v3065 = vpack.c.b16 %v2353, %v2349
        %v3066 = vpack.c.b16 %v2354, %v2350
        %v3067 = vpack.c.b16 %v2355, %v2351
        %v3068 = vpack.c.b16 %v2356, %v2352
        %v3069 = vpack.c.b16 %v2361, %v2357
        %v3070 = vpack.c.b16 %v2362, %v2358
        %v3071 = vpack.c.b16 %v2363, %v2359
        %v3072 = vpack.c.b16 %v2364, %v2360
        %v3073 = vpack.c.b16 %v2369, %v2365
        %v3074 = vpack.c.b16 %v2370, %v2366
        %v3075 = vpack.c.b16 %v2371, %v2367
        %v3076 = vpack.c.b16 %v2372, %v2368
        %v3077 = vpack.c.b16 %v2377, %v2373
        %v3078 = vpack.c.b16 %v2378, %v2374
        %v3079 = vpack.c.b16 %v2379, %v2375
        %v3080 = vpack.c.b16 %v2380, %v2376
        %v3081 = vpack.c.b16 %v2385, %v2381
        %v3082 = vpack.c.b16 %v2386, %v2382
        %v3083 = vpack.c.b16 %v2387, %v2383
        %v3084 = vpack.c.b16 %v2388, %v2384
        %v3085 = vpack.c.b16 %v2393, %v2389
        %v3086 = vpack.c.b16 %v2394, %v2390
        %v3087 = vpack.c.b16 %v2395, %v2391
        %v3088 = vpack.c.b16 %v2396, %v2392
        %v3089 = vpack.c.b16 %v2401, %v2397
        %v3090 = vpack.c.b16 %v2402, %v2398
        %v3091 = vpack.c.b16 %v2403, %v2399
        %v3092 = vpack.c.b16 %v2404, %v2400
        %v3093 = vpack.c.b16 %v2409, %v2405
        %v3094 = vpack.c.b16 %v2410, %v2406
        %v3095 = vpack.c.b16 %v2411, %v2407
        %v3096 = vpack.c.b16 %v2412, %v2408
        %v3097 = vpack.c.b16 %v2417, %v2413
        %v3098 = vpack.c.b16 %v2418, %v2414
        %v3099 = vpack.c.b16 %v2419, %v2415
        %v3100 = vpack.c.b16 %v2420, %v2416
        %v3101 = vpack.c.b16 %v2425, %v2421
        %v3102 = vpack.c.b16 %v2426, %v2422
        %v3103 = vpack.c.b16 %v2427, %v2423
        %v3104 = vpack.c.b16 %v2428, %v2424
        %v3105 = vpack.c.b16 %v2433, %v2429
        %v3106 = vpack.c.b16 %v2434, %v2430
        %v3107 = vpack.c.b16 %v2435, %v2431
        %v3108 = vpack.c.b16 %v2436, %v2432
        %v3109 = vpack.c.b16 %v2441, %v2437
        %v3110 = vpack.c.b16 %v2442, %v2438
        %v3111 = vpack.c.b16 %v2443, %v2439
        %v3112 = vpack.c.b16 %v2444, %v2440
        %v3113 = vpack.c.b16 %v2449, %v2445
        %v3114 = vpack.c.b16 %v2450, %v2446
        %v3115 = vpack.c.b16 %v2451, %v2447
        %v3116 = vpack.c.b16 %v2452, %v2448
        %v3117 = vpack.c.b16 %v2457, %v2453
        %v3118 = vpack.c.b16 %v2458, %v2454
        %v3119 = vpack.c.b16 %v2459, %v2455
        %v3120 = vpack.c.b16 %v2460, %v2456
        %v3121 = vpack.c.b16 %v2465, %v2461
        %v3122 = vpack.c.b16 %v2466, %v2462
        %v3123 = vpack.c.b16 %v2467, %v2463
        %v3124 = vpack.c.b16 %v2468, %v2464
        %v3125 = vpack.c.b16 %v2473, %v2469
        %v3126 = vpack.c.b16 %v2474, %v2470
        %v3127 = vpack.c.b16 %v2475, %v2471
        %v3128 = vpack.c.b16 %v2476, %v2472
        %v3129 = vpack.c.b16 %v2481, %v2477
        %v3130 = vpack.c.b16 %v2482, %v2478
        %v3131 = vpack.c.b16 %v2483, %v2479
        %v3132 = vpack.c.b16 %v2484, %v2480
        %v3133 = vpack.c.b16 %v2489, %v2485
        %v3134 = vpack.c.b16 %v2490, %v2486
        %v3135 = vpack.c.b16 %v2491, %v2487
        %v3136 = vpack.c.b16 %v2492, %v2488
        %v3137 = vpack.c.b16 %v2497, %v2493
        %v3138 = vpack.c.b16 %v2498, %v2494
        %v3139 = vpack.c.b16 %v2499, %v2495
        %v3140 = vpack.c.b16 %v2500, %v2496
        %v3141 = vpack.c.b16 %v2505, %v2501
        %v3142 = vpack.c.b16 %v2506, %v2502
        %v3143 = vpack.c.b16 %v2507, %v2503
        %v3144 = vpack.c.b16 %v2508, %v2504
        %v3145 = vpack.c.b16 %v2513, %v2509
        %v3146 = vpack.c.b16 %v2514, %v2510
        %v3147 = vpack.c.b16 %v2515, %v2511
        %v3148 = vpack.c.b16 %v2516, %v2512
        %v3149 = vpack.c.b16 %v2521, %v2517
        %v3150 = vpack.c.b16 %v2522, %v2518
        %v3151 = vpack.c.b16 %v2523, %v2519
        %v3152 = vpack.c.b16 %v2524, %v2520
        %v3153 = vpack.c.b16 %v2529, %v2525
        %v3154 = vpack.c.b16 %v2530, %v2526
        %v3155 = vpack.c.b16 %v2531, %v2527
        %v3156 = vpack.c.b16 %v2532, %v2528
        %v3157 = vpack.c.b16 %v2537, %v2533
        %v3158 = vpack.c.b16 %v2538, %v2534
        %v3159 = vpack.c.b16 %v2539, %v2535
        %v3160 = vpack.c.b16 %v2540, %v2536
        %v3161 = vpack.c.b16 %v2545, %v2541
        %v3162 = vpack.c.b16 %v2546, %v2542
        %v3163 = vpack.c.b16 %v2547, %v2543
        %v3164 = vpack.c.b16 %v2548, %v2544
        %v3165 = vpack.c.b16 %v2553, %v2549
        %v3166 = vpack.c.b16 %v2554, %v2550
        %v3167 = vpack.c.b16 %v2555, %v2551
        %v3168 = vpack.c.b16 %v2556, %v2552
        %v3169 = vpack.c.b16 %v2561, %v2557
        %v3170 = vpack.c.b16 %v2562, %v2558
        %v3171 = vpack.c.b16 %v2563, %v2559
        %v3172 = vpack.c.b16 %v2564, %v2560
        %v3173 = vpack.c.b16 %v2569, %v2565
        %v3174 = vpack.c.b16 %v2570, %v2566
        %v3175 = vpack.c.b16 %v2571, %v2567
        %v3176 = vpack.c.b16 %v2572, %v2568
        %v3177 = vpack.c.b16 %v2577, %v2573
        %v3178 = vpack.c.b16 %v2578, %v2574
        %v3179 = vpack.c.b16 %v2579, %v2575
        %v3180 = vpack.c.b16 %v2580, %v2576
        %v3181 = vpack.c.b16 %v2585, %v2581
        %v3182 = vpack.c.b16 %v2586, %v2582
        %v3183 = vpack.c.b16 %v2587, %v2583
        %v3184 = vpack.c.b16 %v2588, %v2584
        %v3185 = vpack.c.b16 %v2593, %v2589
        %v3186 = vpack.c.b16 %v2594, %v2590
        %v3187 = vpack.c.b16 %v2595, %v2591
        %v3188 = vpack.c.b16 %v2596, %v2592
        %v3189 = vpack.c.b16 %v2601, %v2597
        %v3190 = vpack.c.b16 %v2602, %v2598
        %v3191 = vpack.c.b16 %v2603, %v2599
        %v3192 = vpack.c.b16 %v2604, %v2600
        %v3193 = vpack.c.b16 %v2609, %v2605
        %v3194 = vpack.c.b16 %v2610, %v2606
        %v3195 = vpack.c.b16 %v2611, %v2607
        %v3196 = vpack.c.b16 %v2612, %v2608
        %v3197 = vpack.c.b16 %v2617, %v2613
        %v3198 = vpack.c.b16 %v2618, %v2614
        %v3199 = vpack.c.b16 %v2619, %v2615
        %v3200 = vpack.c.b16 %v2620, %v2616
        %v3201 = vpack.c.b16 %v2625, %v2621
        %v3202 = vpack.c.b16 %v2626, %v2622
        %v3203 = vpack.c.b16 %v2627, %v2623
        %v3204 = vpack.c.b16 %v2628, %v2624
        %v3205 = vpack.c.b16 %v2633, %v2629
        %v3206 = vpack.c.b16 %v2634, %v2630
        %v3207 = vpack.c.b16 %v2635, %v2631
        %v3208 = vpack.c.b16 %v2636, %v2632
        %v3209 = vpack.c.b16 %v2641, %v2637
        %v3210 = vpack.c.b16 %v2642, %v2638
        %v3211 = vpack.c.b16 %v2643, %v2639
        %v3212 = vpack.c.b16 %v2644, %v2640
        %v3213 = vpack.c.b16 %v2649, %v2645
        %v3214 = vpack.c.b16 %v2650, %v2646
        %v3215 = vpack.c.b16 %v2651, %v2647
        %v3216 = vpack.c.b16 %v2652, %v2648
        %v3217 = vpack.c.b16 %v2657, %v2653
        %v3218 = vpack.c.b16 %v2658, %v2654
        %v3219 = vpack.c.b16 %v2659, %v2655
        %v3220 = vpack.c.b16 %v2660, %v2656
        %v3221 = vpack.c.b16 %v2665, %v2661
        %v3222 = vpack.c.b16 %v2666, %v2662
        %v3223 = vpack.c.b16 %v2667, %v2663
        %v3224 = vpack.c.b16 %v2668, %v2664
        %v3225 = vpack.c.b16 %v2673, %v2669
        %v3226 = vpack.c.b16 %v2674, %v2670
        %v3227 = vpack.c.b16 %v2675, %v2671
        %v3228 = vpack.c.b16 %v2676, %v2672
        %v3229 = vpack.c.b16 %v2681, %v2677
        %v3230 = vpack.c.b16 %v2682, %v2678
        %v3231 = vpack.c.b16 %v2683, %v2679
        %v3232 = vpack.c.b16 %v2684, %v2680
        %v3233 = vpack.c.b16 %v2689, %v2685
        %v3234 = vpack.c.b16 %v2690, %v2686
        %v3235 = vpack.c.b16 %v2691, %v2687
        %v3236 = vpack.c.b16 %v2692, %v2688
        %v3237 = vpack.c.b16 %v2697, %v2693
        %v3238 = vpack.c.b16 %v2698, %v2694
        %v3239 = vpack.c.b16 %v2699, %v2695
        %v3240 = vpack.c.b16 %v2700, %v2696
        %v3241 = vpack.c.b16 %v2705, %v2701
        %v3242 = vpack.c.b16 %v2706, %v2702
        %v3243 = vpack.c.b16 %v2707, %v2703
        %v3244 = vpack.c.b16 %v2708, %v2704
        %v3245 = vpack.c.b16 %v2713, %v2709
        %v3246 = vpack.c.b16 %v2714, %v2710
        %v3247 = vpack.c.b16 %v2715, %v2711
        %v3248 = vpack.c.b16 %v2716, %v2712
        %v3249 = vpack.c.b16 %v2721, %v2717
        %v3250 = vpack.c.b16 %v2722, %v2718
        %v3251 = vpack.c.b16 %v2723, %v2719
        %v3252 = vpack.c.b16 %v2724, %v2720
        %v3253 = vpack.c.b16 %v2729, %v2725
        %v3254 = vpack.c.b16 %v2730, %v2726
        %v3255 = vpack.c.b16 %v2731, %v2727
        %v3256 = vpack.c.b16 %v2732, %v2728
        %v3257 = vpack.c.b16 %v2737, %v2733
        %v3258 = vpack.c.b16 %v2738, %v2734
        %v3259 = vpack.c.b16 %v2739, %v2735
        %v3260 = vpack.c.b16 %v2740, %v2736
        %v3261 = vpack.c.b16 %v2745, %v2741
        %v3262 = vpack.c.b16 %v2746, %v2742
        %v3263 = vpack.c.b16 %v2747, %v2743
        %v3264 = vpack.c.b16 %v2748, %v2744
        %v3265 = vpack.c.b16 %v2753, %v2749
        %v3266 = vpack.c.b16 %v2754, %v2750
        %v3267 = vpack.c.b16 %v2755, %v2751
        %v3268 = vpack.c.b16 %v2756, %v2752
        %3781 = vmatprep.subr.bf16.mxu0 %v2786
        %3782 = vmatpush1.bf16.msra.mxu0 %v2785
        %3783 = vmatprep.subr.bf16.mxu0 %v2782
        %3784 = vmatpush1.bf16.msra.mxu0 %v2781
        %3785 = vmatprep.subr.bf16.mxu0 %v2778
        %3786 = vmatpush1.bf16.msra.mxu0 %v2777
        %3787 = vmatprep.subr.bf16.mxu0 %v2774
        %3788 = vmatpush1.bf16.msra.mxu0 %v2773
        %3789 = vmatprep.subr.bf16.mxu0 %v2770
        %3790 = vmatpush1.bf16.msra.mxu0 %v2769
        %3791 = vmatprep.subr.bf16.mxu0 %v2766
        %3792 = vmatpush1.bf16.msra.mxu0 %v2765
        %3793 = vmatprep.subr.bf16.mxu0 %v2762
        %3794 = vmatpush1.bf16.msra.mxu0 %v2761
        %3795 = vmatprep.subr.bf16.mxu0 %v2758
        %3796 = vmatpush1.bf16.msra.mxu0 %v2757
        %3797 = vmatprep.subr.bf16.mxu0 %v2818
        %3798 = vmatpush2.bf16.msra.mxu0 %v2817
        %3799 = vmatprep.subr.bf16.mxu0 %v2814
        %3800 = vmatpush2.bf16.msra.mxu0 %v2813
        %3801 = vmatprep.subr.bf16.mxu0 %v2810
        %3802 = vmatpush2.bf16.msra.mxu0 %v2809
        %3803 = vmatprep.subr.bf16.mxu0 %v2806
        %3804 = vmatpush2.bf16.msra.mxu0 %v2805
        %3805 = vmatprep.subr.bf16.mxu0 %v2802
        %3806 = vmatpush2.bf16.msra.mxu0 %v2801
        %3807 = vmatprep.subr.bf16.mxu0 %v2798
        %3808 = vmatpush2.bf16.msra.mxu0 %v2797
        %3809 = vmatprep.subr.bf16.mxu0 %v2794
        %3810 = vmatpush2.bf16.msra.mxu0 %v2793
        %3811 = vmatprep.subr.bf16.mxu0 %v2790
        %3812 = vmatpush2.bf16.msra.mxu0 %v2789
        %3813 = vmatprep.mubr.bf16.mxu0 %v560
        %3814 = vmatmul.mubr.bf16.gmra.mxu0 %v559
        %v3815 = vpop.f32.mrf.mxu0
        %v3816 = vadd.f32 %v1204, %v3815
        %v3817 = vpop.f32.mrf.mxu0
        %v3818 = vadd.f32 %v1208, %v3817
        %v3819 = vpop.f32.mrf.mxu0
        %v3820 = vadd.f32 %v1204, %v3819
        %v3821 = vpop.f32.mrf.mxu0
        %v3822 = vadd.f32 %v1208, %v3821
        %3823 = vmatprep.mubr.bf16.mxu0 %v576
        %3824 = vmatmul.mubr.bf16.gmra.mxu0 %v575
        %v3825 = vpop.f32.mrf.mxu0
        %v3826 = vadd.f32 %v1204, %v3825
        %v3827 = vpop.f32.mrf.mxu0
        %v3828 = vadd.f32 %v1208, %v3827
        %v3829 = vpop.f32.mrf.mxu0
        %v3830 = vadd.f32 %v1204, %v3829
        %v3831 = vpop.f32.mrf.mxu0
        %v3832 = vadd.f32 %v1208, %v3831
        %3833 = vmatprep.mubr.bf16.mxu0 %v592
        %3834 = vmatmul.mubr.bf16.gmra.mxu0 %v591
        %v3835 = vpop.f32.mrf.mxu0
        %v3836 = vadd.f32 %v1204, %v3835
        %v3837 = vpop.f32.mrf.mxu0
        %v3838 = vadd.f32 %v1208, %v3837
        %v3839 = vpop.f32.mrf.mxu0
        %v3840 = vadd.f32 %v1204, %v3839
        %v3841 = vpop.f32.mrf.mxu0
        %v3842 = vadd.f32 %v1208, %v3841
        %3843 = vmatprep.mubr.bf16.mxu0 %v608
        %3844 = vmatmul.mubr.bf16.gmra.mxu0 %v607
        %v3845 = vpop.f32.mrf.mxu0
        %v3846 = vadd.f32 %v1204, %v3845
        %v3847 = vpop.f32.mrf.mxu0
        %v3848 = vadd.f32 %v1208, %v3847
        %v3849 = vpop.f32.mrf.mxu0
        %v3850 = vadd.f32 %v1204, %v3849
        %v3851 = vpop.f32.mrf.mxu0
        %v3852 = vadd.f32 %v1208, %v3851
        %3853 = vmatprep.mubr.bf16.mxu0 %v624
        %3854 = vmatmul.mubr.bf16.gmra.mxu0 %v623
        %v3855 = vpop.f32.mrf.mxu0
        %v3856 = vadd.f32 %v1204, %v3855
        %v3857 = vpop.f32.mrf.mxu0
        %v3858 = vadd.f32 %v1208, %v3857
        %v3859 = vpop.f32.mrf.mxu0
        %v3860 = vadd.f32 %v1204, %v3859
        %v3861 = vpop.f32.mrf.mxu0
        %v3862 = vadd.f32 %v1208, %v3861
        %3863 = vmatprep.mubr.bf16.mxu0 %v640
        %3864 = vmatmul.mubr.bf16.gmra.mxu0 %v639
        %v3865 = vpop.f32.mrf.mxu0
        %v3866 = vadd.f32 %v1204, %v3865
        %v3867 = vpop.f32.mrf.mxu0
        %v3868 = vadd.f32 %v1208, %v3867
        %v3869 = vpop.f32.mrf.mxu0
        %v3870 = vadd.f32 %v1204, %v3869
        %v3871 = vpop.f32.mrf.mxu0
        %v3872 = vadd.f32 %v1208, %v3871
        %3873 = vmatprep.mubr.bf16.mxu0 %v656
        %3874 = vmatmul.mubr.bf16.gmra.mxu0 %v655
        %v3875 = vpop.f32.mrf.mxu0
        %v3876 = vadd.f32 %v1204, %v3875
        %v3877 = vpop.f32.mrf.mxu0
        %v3878 = vadd.f32 %v1208, %v3877
        %v3879 = vpop.f32.mrf.mxu0
        %v3880 = vadd.f32 %v1204, %v3879
        %v3881 = vpop.f32.mrf.mxu0
        %v3882 = vadd.f32 %v1208, %v3881
        %3883 = vmatprep.mubr.bf16.mxu0 %v672
        %3884 = vmatmul.mubr.bf16.gmra.mxu0 %v671
        %v3885 = vpop.f32.mrf.mxu0
        %v3886 = vadd.f32 %v1204, %v3885
        %v3887 = vpop.f32.mrf.mxu0
        %v3888 = vadd.f32 %v1208, %v3887
        %v3889 = vpop.f32.mrf.mxu0
        %v3890 = vadd.f32 %v1204, %v3889
        %v3891 = vpop.f32.mrf.mxu0
        %v3892 = vadd.f32 %v1208, %v3891
        %3893 = vdwg.mxu0
        %3894 = vmatprep.subr.bf16.mxu0 %v2850
        %3895 = vmatpush1.bf16.msra.mxu0 %v2849
        %3896 = vmatprep.subr.bf16.mxu0 %v2846
        %3897 = vmatpush1.bf16.msra.mxu0 %v2845
        %3898 = vmatprep.subr.bf16.mxu0 %v2842
        %3899 = vmatpush1.bf16.msra.mxu0 %v2841
        %3900 = vmatprep.subr.bf16.mxu0 %v2838
        %3901 = vmatpush1.bf16.msra.mxu0 %v2837
        %3902 = vmatprep.subr.bf16.mxu0 %v2834
        %3903 = vmatpush1.bf16.msra.mxu0 %v2833
        %3904 = vmatprep.subr.bf16.mxu0 %v2830
        %3905 = vmatpush1.bf16.msra.mxu0 %v2829
        %3906 = vmatprep.subr.bf16.mxu0 %v2826
        %3907 = vmatpush1.bf16.msra.mxu0 %v2825
        %3908 = vmatprep.subr.bf16.mxu0 %v2822
        %3909 = vmatpush1.bf16.msra.mxu0 %v2821
        %3910 = vmatprep.subr.bf16.mxu0 %v2882
        %3911 = vmatpush2.bf16.msra.mxu0 %v2881
        %3912 = vmatprep.subr.bf16.mxu0 %v2878
        %3913 = vmatpush2.bf16.msra.mxu0 %v2877
        %3914 = vmatprep.subr.bf16.mxu0 %v2874
        %3915 = vmatpush2.bf16.msra.mxu0 %v2873
        %3916 = vmatprep.subr.bf16.mxu0 %v2870
        %3917 = vmatpush2.bf16.msra.mxu0 %v2869
        %3918 = vmatprep.subr.bf16.mxu0 %v2866
        %3919 = vmatpush2.bf16.msra.mxu0 %v2865
        %3920 = vmatprep.subr.bf16.mxu0 %v2862
        %3921 = vmatpush2.bf16.msra.mxu0 %v2861
        %3922 = vmatprep.subr.bf16.mxu0 %v2858
        %3923 = vmatpush2.bf16.msra.mxu0 %v2857
        %3924 = vmatprep.subr.bf16.mxu0 %v2854
        %3925 = vmatpush2.bf16.msra.mxu0 %v2853
        %3926 = vmatprep.mubr.bf16.mxu0 %v562
        %3927 = vmatmul.mubr.bf16.gmra.mxu0 %v561
        %v3928 = vpop.f32.mrf.mxu0
        %v3929 = vadd.f32 %v3816, %v3928
        %v3930 = vpop.f32.mrf.mxu0
        %v3931 = vadd.f32 %v3818, %v3930
        %v3932 = vpop.f32.mrf.mxu0
        %v3933 = vadd.f32 %v3820, %v3932
        %v3934 = vpop.f32.mrf.mxu0
        %v3935 = vadd.f32 %v3822, %v3934
        %3936 = vmatprep.mubr.bf16.mxu0 %v578
        %3937 = vmatmul.mubr.bf16.gmra.mxu0 %v577
        %v3938 = vpop.f32.mrf.mxu0
        %v3939 = vadd.f32 %v3826, %v3938
        %v3940 = vpop.f32.mrf.mxu0
        %v3941 = vadd.f32 %v3828, %v3940
        %v3942 = vpop.f32.mrf.mxu0
        %v3943 = vadd.f32 %v3830, %v3942
        %v3944 = vpop.f32.mrf.mxu0
        %v3945 = vadd.f32 %v3832, %v3944
        %3946 = vmatprep.mubr.bf16.mxu0 %v594
        %3947 = vmatmul.mubr.bf16.gmra.mxu0 %v593
        %v3948 = vpop.f32.mrf.mxu0
        %v3949 = vadd.f32 %v3836, %v3948
        %v3950 = vpop.f32.mrf.mxu0
        %v3951 = vadd.f32 %v3838, %v3950
        %v3952 = vpop.f32.mrf.mxu0
        %v3953 = vadd.f32 %v3840, %v3952
        %v3954 = vpop.f32.mrf.mxu0
        %v3955 = vadd.f32 %v3842, %v3954
        %3956 = vmatprep.mubr.bf16.mxu0 %v610
        %3957 = vmatmul.mubr.bf16.gmra.mxu0 %v609
        %v3958 = vpop.f32.mrf.mxu0
        %v3959 = vadd.f32 %v3846, %v3958
        %v3960 = vpop.f32.mrf.mxu0
        %v3961 = vadd.f32 %v3848, %v3960
        %v3962 = vpop.f32.mrf.mxu0
        %v3963 = vadd.f32 %v3850, %v3962
        %v3964 = vpop.f32.mrf.mxu0
        %v3965 = vadd.f32 %v3852, %v3964
        %3966 = vmatprep.mubr.bf16.mxu0 %v626
        %3967 = vmatmul.mubr.bf16.gmra.mxu0 %v625
        %v3968 = vpop.f32.mrf.mxu0
        %v3969 = vadd.f32 %v3856, %v3968
        %v3970 = vpop.f32.mrf.mxu0
        %v3971 = vadd.f32 %v3858, %v3970
        %v3972 = vpop.f32.mrf.mxu0
        %v3973 = vadd.f32 %v3860, %v3972
        %v3974 = vpop.f32.mrf.mxu0
        %v3975 = vadd.f32 %v3862, %v3974
        %3976 = vmatprep.mubr.bf16.mxu0 %v642
        %3977 = vmatmul.mubr.bf16.gmra.mxu0 %v641
        %v3978 = vpop.f32.mrf.mxu0
        %v3979 = vadd.f32 %v3866, %v3978
        %v3980 = vpop.f32.mrf.mxu0
        %v3981 = vadd.f32 %v3868, %v3980
        %v3982 = vpop.f32.mrf.mxu0
        %v3983 = vadd.f32 %v3870, %v3982
        %v3984 = vpop.f32.mrf.mxu0
        %v3985 = vadd.f32 %v3872, %v3984
        %3986 = vmatprep.mubr.bf16.mxu0 %v658
        %3987 = vmatmul.mubr.bf16.gmra.mxu0 %v657
        %v3988 = vpop.f32.mrf.mxu0
        %v3989 = vadd.f32 %v3876, %v3988
        %v3990 = vpop.f32.mrf.mxu0
        %v3991 = vadd.f32 %v3878, %v3990
        %v3992 = vpop.f32.mrf.mxu0
        %v3993 = vadd.f32 %v3880, %v3992
        %v3994 = vpop.f32.mrf.mxu0
        %v3995 = vadd.f32 %v3882, %v3994
        %3996 = vmatprep.mubr.bf16.mxu0 %v674
        %3997 = vmatmul.mubr.bf16.gmra.mxu0 %v673
        %v3998 = vpop.f32.mrf.mxu0
        %v3999 = vadd.f32 %v3886, %v3998
        %v4000 = vpop.f32.mrf.mxu0
        %v4001 = vadd.f32 %v3888, %v4000
        %v4002 = vpop.f32.mrf.mxu0
        %v4003 = vadd.f32 %v3890, %v4002
        %v4004 = vpop.f32.mrf.mxu0
        %v4005 = vadd.f32 %v3892, %v4004
        %4006 = vdwg.mxu0
        %4007 = vmatprep.subr.bf16.mxu0 %v2914
        %4008 = vmatpush1.bf16.msra.mxu0 %v2913
        %4009 = vmatprep.subr.bf16.mxu0 %v2910
        %4010 = vmatpush1.bf16.msra.mxu0 %v2909
        %4011 = vmatprep.subr.bf16.mxu0 %v2906
        %4012 = vmatpush1.bf16.msra.mxu0 %v2905
        %4013 = vmatprep.subr.bf16.mxu0 %v2902
        %4014 = vmatpush1.bf16.msra.mxu0 %v2901
        %4015 = vmatprep.subr.bf16.mxu0 %v2898
        %4016 = vmatpush1.bf16.msra.mxu0 %v2897
        %4017 = vmatprep.subr.bf16.mxu0 %v2894
        %4018 = vmatpush1.bf16.msra.mxu0 %v2893
        %4019 = vmatprep.subr.bf16.mxu0 %v2890
        %4020 = vmatpush1.bf16.msra.mxu0 %v2889
        %4021 = vmatprep.subr.bf16.mxu0 %v2886
        %4022 = vmatpush1.bf16.msra.mxu0 %v2885
        %4023 = vmatprep.subr.bf16.mxu0 %v2946
        %4024 = vmatpush2.bf16.msra.mxu0 %v2945
        %4025 = vmatprep.subr.bf16.mxu0 %v2942
        %4026 = vmatpush2.bf16.msra.mxu0 %v2941
        %4027 = vmatprep.subr.bf16.mxu0 %v2938
        %4028 = vmatpush2.bf16.msra.mxu0 %v2937
        %4029 = vmatprep.subr.bf16.mxu0 %v2934
        %4030 = vmatpush2.bf16.msra.mxu0 %v2933
        %4031 = vmatprep.subr.bf16.mxu0 %v2930
        %4032 = vmatpush2.bf16.msra.mxu0 %v2929
        %4033 = vmatprep.subr.bf16.mxu0 %v2926
        %4034 = vmatpush2.bf16.msra.mxu0 %v2925
        %4035 = vmatprep.subr.bf16.mxu0 %v2922
        %4036 = vmatpush2.bf16.msra.mxu0 %v2921
        %4037 = vmatprep.subr.bf16.mxu0 %v2918
        %4038 = vmatpush2.bf16.msra.mxu0 %v2917
        %4039 = vmatprep.mubr.bf16.mxu0 %v564
        %4040 = vmatmul.mubr.bf16.gmra.mxu0 %v563
        %v4041 = vpop.f32.mrf.mxu0
        %v4042 = vadd.f32 %v3929, %v4041
        %v4043 = vpop.f32.mrf.mxu0
        %v4044 = vadd.f32 %v3931, %v4043
        %v4045 = vpop.f32.mrf.mxu0
        %v4046 = vadd.f32 %v3933, %v4045
        %v4047 = vpop.f32.mrf.mxu0
        %v4048 = vadd.f32 %v3935, %v4047
        %4049 = vmatprep.mubr.bf16.mxu0 %v580
        %4050 = vmatmul.mubr.bf16.gmra.mxu0 %v579
        %v4051 = vpop.f32.mrf.mxu0
        %v4052 = vadd.f32 %v3939, %v4051
        %v4053 = vpop.f32.mrf.mxu0
        %v4054 = vadd.f32 %v3941, %v4053
        %v4055 = vpop.f32.mrf.mxu0
        %v4056 = vadd.f32 %v3943, %v4055
        %v4057 = vpop.f32.mrf.mxu0
        %v4058 = vadd.f32 %v3945, %v4057
        %4059 = vmatprep.mubr.bf16.mxu0 %v596
        %4060 = vmatmul.mubr.bf16.gmra.mxu0 %v595
        %v4061 = vpop.f32.mrf.mxu0
        %v4062 = vadd.f32 %v3949, %v4061
        %v4063 = vpop.f32.mrf.mxu0
        %v4064 = vadd.f32 %v3951, %v4063
        %v4065 = vpop.f32.mrf.mxu0
        %v4066 = vadd.f32 %v3953, %v4065
        %v4067 = vpop.f32.mrf.mxu0
        %v4068 = vadd.f32 %v3955, %v4067
        %4069 = vmatprep.mubr.bf16.mxu0 %v612
        %4070 = vmatmul.mubr.bf16.gmra.mxu0 %v611
        %v4071 = vpop.f32.mrf.mxu0
        %v4072 = vadd.f32 %v3959, %v4071
        %v4073 = vpop.f32.mrf.mxu0
        %v4074 = vadd.f32 %v3961, %v4073
        %v4075 = vpop.f32.mrf.mxu0
        %v4076 = vadd.f32 %v3963, %v4075
        %v4077 = vpop.f32.mrf.mxu0
        %v4078 = vadd.f32 %v3965, %v4077
        %4079 = vmatprep.mubr.bf16.mxu0 %v628
        %4080 = vmatmul.mubr.bf16.gmra.mxu0 %v627
        %v4081 = vpop.f32.mrf.mxu0
        %v4082 = vadd.f32 %v3969, %v4081
        %v4083 = vpop.f32.mrf.mxu0
        %v4084 = vadd.f32 %v3971, %v4083
        %v4085 = vpop.f32.mrf.mxu0
        %v4086 = vadd.f32 %v3973, %v4085
        %v4087 = vpop.f32.mrf.mxu0
        %v4088 = vadd.f32 %v3975, %v4087
        %4089 = vmatprep.mubr.bf16.mxu0 %v644
        %4090 = vmatmul.mubr.bf16.gmra.mxu0 %v643
        %v4091 = vpop.f32.mrf.mxu0
        %v4092 = vadd.f32 %v3979, %v4091
        %v4093 = vpop.f32.mrf.mxu0
        %v4094 = vadd.f32 %v3981, %v4093
        %v4095 = vpop.f32.mrf.mxu0
        %v4096 = vadd.f32 %v3983, %v4095
        %v4097 = vpop.f32.mrf.mxu0
        %v4098 = vadd.f32 %v3985, %v4097
        %4099 = vmatprep.mubr.bf16.mxu0 %v660
        %4100 = vmatmul.mubr.bf16.gmra.mxu0 %v659
        %v4101 = vpop.f32.mrf.mxu0
        %v4102 = vadd.f32 %v3989, %v4101
        %v4103 = vpop.f32.mrf.mxu0
        %v4104 = vadd.f32 %v3991, %v4103
        %v4105 = vpop.f32.mrf.mxu0
        %v4106 = vadd.f32 %v3993, %v4105
        %v4107 = vpop.f32.mrf.mxu0
        %v4108 = vadd.f32 %v3995, %v4107
        %4109 = vmatprep.mubr.bf16.mxu0 %v676
        %4110 = vmatmul.mubr.bf16.gmra.mxu0 %v675
        %v4111 = vpop.f32.mrf.mxu0
        %v4112 = vadd.f32 %v3999, %v4111
        %v4113 = vpop.f32.mrf.mxu0
        %v4114 = vadd.f32 %v4001, %v4113
        %v4115 = vpop.f32.mrf.mxu0
        %v4116 = vadd.f32 %v4003, %v4115
        %v4117 = vpop.f32.mrf.mxu0
        %v4118 = vadd.f32 %v4005, %v4117
        %4119 = vdwg.mxu0
        %4120 = vmatprep.subr.bf16.mxu0 %v2978
        %4121 = vmatpush1.bf16.msra.mxu0 %v2977
        %4122 = vmatprep.subr.bf16.mxu0 %v2974
        %4123 = vmatpush1.bf16.msra.mxu0 %v2973
        %4124 = vmatprep.subr.bf16.mxu0 %v2970
        %4125 = vmatpush1.bf16.msra.mxu0 %v2969
        %4126 = vmatprep.subr.bf16.mxu0 %v2966
        %4127 = vmatpush1.bf16.msra.mxu0 %v2965
        %4128 = vmatprep.subr.bf16.mxu0 %v2962
        %4129 = vmatpush1.bf16.msra.mxu0 %v2961
        %4130 = vmatprep.subr.bf16.mxu0 %v2958
        %4131 = vmatpush1.bf16.msra.mxu0 %v2957
        %4132 = vmatprep.subr.bf16.mxu0 %v2954
        %4133 = vmatpush1.bf16.msra.mxu0 %v2953
        %4134 = vmatprep.subr.bf16.mxu0 %v2950
        %4135 = vmatpush1.bf16.msra.mxu0 %v2949
        %4136 = vmatprep.subr.bf16.mxu0 %v3010
        %4137 = vmatpush2.bf16.msra.mxu0 %v3009
        %4138 = vmatprep.subr.bf16.mxu0 %v3006
        %4139 = vmatpush2.bf16.msra.mxu0 %v3005
        %4140 = vmatprep.subr.bf16.mxu0 %v3002
        %4141 = vmatpush2.bf16.msra.mxu0 %v3001
        %4142 = vmatprep.subr.bf16.mxu0 %v2998
        %4143 = vmatpush2.bf16.msra.mxu0 %v2997
        %4144 = vmatprep.subr.bf16.mxu0 %v2994
        %4145 = vmatpush2.bf16.msra.mxu0 %v2993
        %4146 = vmatprep.subr.bf16.mxu0 %v2990
        %4147 = vmatpush2.bf16.msra.mxu0 %v2989
        %4148 = vmatprep.subr.bf16.mxu0 %v2986
        %4149 = vmatpush2.bf16.msra.mxu0 %v2985
        %4150 = vmatprep.subr.bf16.mxu0 %v2982
        %4151 = vmatpush2.bf16.msra.mxu0 %v2981
        %4152 = vmatprep.mubr.bf16.mxu0 %v566
        %4153 = vmatmul.mubr.bf16.gmra.mxu0 %v565
        %v4154 = vpop.f32.mrf.mxu0
        %v4155 = vadd.f32 %v4042, %v4154
        %v4156 = vpop.f32.mrf.mxu0
        %v4157 = vadd.f32 %v4044, %v4156
        %v4158 = vpop.f32.mrf.mxu0
        %v4159 = vadd.f32 %v4046, %v4158
        %v4160 = vpop.f32.mrf.mxu0
        %v4161 = vadd.f32 %v4048, %v4160
        %4162 = vmatprep.mubr.bf16.mxu0 %v582
        %4163 = vmatmul.mubr.bf16.gmra.mxu0 %v581
        %v4164 = vpop.f32.mrf.mxu0
        %v4165 = vadd.f32 %v4052, %v4164
        %v4166 = vpop.f32.mrf.mxu0
        %v4167 = vadd.f32 %v4054, %v4166
        %v4168 = vpop.f32.mrf.mxu0
        %v4169 = vadd.f32 %v4056, %v4168
        %v4170 = vpop.f32.mrf.mxu0
        %v4171 = vadd.f32 %v4058, %v4170
        %4172 = vmatprep.mubr.bf16.mxu0 %v598
        %4173 = vmatmul.mubr.bf16.gmra.mxu0 %v597
        %v4174 = vpop.f32.mrf.mxu0
        %v4175 = vadd.f32 %v4062, %v4174
        %v4176 = vpop.f32.mrf.mxu0
        %v4177 = vadd.f32 %v4064, %v4176
        %v4178 = vpop.f32.mrf.mxu0
        %v4179 = vadd.f32 %v4066, %v4178
        %v4180 = vpop.f32.mrf.mxu0
        %v4181 = vadd.f32 %v4068, %v4180
        %4182 = vmatprep.mubr.bf16.mxu0 %v614
        %4183 = vmatmul.mubr.bf16.gmra.mxu0 %v613
        %v4184 = vpop.f32.mrf.mxu0
        %v4185 = vadd.f32 %v4072, %v4184
        %v4186 = vpop.f32.mrf.mxu0
        %v4187 = vadd.f32 %v4074, %v4186
        %v4188 = vpop.f32.mrf.mxu0
        %v4189 = vadd.f32 %v4076, %v4188
        %v4190 = vpop.f32.mrf.mxu0
        %v4191 = vadd.f32 %v4078, %v4190
        %4192 = vmatprep.mubr.bf16.mxu0 %v630
        %4193 = vmatmul.mubr.bf16.gmra.mxu0 %v629
        %v4194 = vpop.f32.mrf.mxu0
        %v4195 = vadd.f32 %v4082, %v4194
        %v4196 = vpop.f32.mrf.mxu0
        %v4197 = vadd.f32 %v4084, %v4196
        %v4198 = vpop.f32.mrf.mxu0
        %v4199 = vadd.f32 %v4086, %v4198
        %v4200 = vpop.f32.mrf.mxu0
        %v4201 = vadd.f32 %v4088, %v4200
        %4202 = vmatprep.mubr.bf16.mxu0 %v646
        %4203 = vmatmul.mubr.bf16.gmra.mxu0 %v645
        %v4204 = vpop.f32.mrf.mxu0
        %v4205 = vadd.f32 %v4092, %v4204
        %v4206 = vpop.f32.mrf.mxu0
        %v4207 = vadd.f32 %v4094, %v4206
        %v4208 = vpop.f32.mrf.mxu0
        %v4209 = vadd.f32 %v4096, %v4208
        %v4210 = vpop.f32.mrf.mxu0
        %v4211 = vadd.f32 %v4098, %v4210
        %4212 = vmatprep.mubr.bf16.mxu0 %v662
        %4213 = vmatmul.mubr.bf16.gmra.mxu0 %v661
        %v4214 = vpop.f32.mrf.mxu0
        %v4215 = vadd.f32 %v4102, %v4214
        %v4216 = vpop.f32.mrf.mxu0
        %v4217 = vadd.f32 %v4104, %v4216
        %v4218 = vpop.f32.mrf.mxu0
        %v4219 = vadd.f32 %v4106, %v4218
        %v4220 = vpop.f32.mrf.mxu0
        %v4221 = vadd.f32 %v4108, %v4220
        %4222 = vmatprep.mubr.bf16.mxu0 %v678
        %4223 = vmatmul.mubr.bf16.gmra.mxu0 %v677
        %v4224 = vpop.f32.mrf.mxu0
        %v4225 = vadd.f32 %v4112, %v4224
        %v4226 = vpop.f32.mrf.mxu0
        %v4227 = vadd.f32 %v4114, %v4226
        %v4228 = vpop.f32.mrf.mxu0
        %v4229 = vadd.f32 %v4116, %v4228
        %v4230 = vpop.f32.mrf.mxu0
        %v4231 = vadd.f32 %v4118, %v4230
        %4232 = vdwg.mxu0
        %4233 = vmatprep.subr.bf16.mxu0 %v3042
        %4234 = vmatpush1.bf16.msra.mxu0 %v3041
        %4235 = vmatprep.subr.bf16.mxu0 %v3038
        %4236 = vmatpush1.bf16.msra.mxu0 %v3037
        %4237 = vmatprep.subr.bf16.mxu0 %v3034
        %4238 = vmatpush1.bf16.msra.mxu0 %v3033
        %4239 = vmatprep.subr.bf16.mxu0 %v3030
        %4240 = vmatpush1.bf16.msra.mxu0 %v3029
        %4241 = vmatprep.subr.bf16.mxu0 %v3026
        %4242 = vmatpush1.bf16.msra.mxu0 %v3025
        %4243 = vmatprep.subr.bf16.mxu0 %v3022
        %4244 = vmatpush1.bf16.msra.mxu0 %v3021
        %4245 = vmatprep.subr.bf16.mxu0 %v3018
        %4246 = vmatpush1.bf16.msra.mxu0 %v3017
        %4247 = vmatprep.subr.bf16.mxu0 %v3014
        %4248 = vmatpush1.bf16.msra.mxu0 %v3013
        %4249 = vmatprep.subr.bf16.mxu0 %v3074
        %4250 = vmatpush2.bf16.msra.mxu0 %v3073
        %4251 = vmatprep.subr.bf16.mxu0 %v3070
        %4252 = vmatpush2.bf16.msra.mxu0 %v3069
        %4253 = vmatprep.subr.bf16.mxu0 %v3066
        %4254 = vmatpush2.bf16.msra.mxu0 %v3065
        %4255 = vmatprep.subr.bf16.mxu0 %v3062
        %4256 = vmatpush2.bf16.msra.mxu0 %v3061
        %4257 = vmatprep.subr.bf16.mxu0 %v3058
        %4258 = vmatpush2.bf16.msra.mxu0 %v3057
        %4259 = vmatprep.subr.bf16.mxu0 %v3054
        %4260 = vmatpush2.bf16.msra.mxu0 %v3053
        %4261 = vmatprep.subr.bf16.mxu0 %v3050
        %4262 = vmatpush2.bf16.msra.mxu0 %v3049
        %4263 = vmatprep.subr.bf16.mxu0 %v3046
        %4264 = vmatpush2.bf16.msra.mxu0 %v3045
        %4265 = vmatprep.mubr.bf16.mxu0 %v568
        %4266 = vmatmul.mubr.bf16.gmra.mxu0 %v567
        %v4267 = vpop.f32.mrf.mxu0
        %v4268 = vadd.f32 %v4155, %v4267
        %v4269 = vpop.f32.mrf.mxu0
        %v4270 = vadd.f32 %v4157, %v4269
        %v4271 = vpop.f32.mrf.mxu0
        %v4272 = vadd.f32 %v4159, %v4271
        %v4273 = vpop.f32.mrf.mxu0
        %v4274 = vadd.f32 %v4161, %v4273
        %4275 = vmatprep.mubr.bf16.mxu0 %v584
        %4276 = vmatmul.mubr.bf16.gmra.mxu0 %v583
        %v4277 = vpop.f32.mrf.mxu0
        %v4278 = vadd.f32 %v4165, %v4277
        %v4279 = vpop.f32.mrf.mxu0
        %v4280 = vadd.f32 %v4167, %v4279
        %v4281 = vpop.f32.mrf.mxu0
        %v4282 = vadd.f32 %v4169, %v4281
        %v4283 = vpop.f32.mrf.mxu0
        %v4284 = vadd.f32 %v4171, %v4283
        %4285 = vmatprep.mubr.bf16.mxu0 %v600
        %4286 = vmatmul.mubr.bf16.gmra.mxu0 %v599
        %v4287 = vpop.f32.mrf.mxu0
        %v4288 = vadd.f32 %v4175, %v4287
        %v4289 = vpop.f32.mrf.mxu0
        %v4290 = vadd.f32 %v4177, %v4289
        %v4291 = vpop.f32.mrf.mxu0
        %v4292 = vadd.f32 %v4179, %v4291
        %v4293 = vpop.f32.mrf.mxu0
        %v4294 = vadd.f32 %v4181, %v4293
        %4295 = vmatprep.mubr.bf16.mxu0 %v616
        %4296 = vmatmul.mubr.bf16.gmra.mxu0 %v615
        %v4297 = vpop.f32.mrf.mxu0
        %v4298 = vadd.f32 %v4185, %v4297
        %v4299 = vpop.f32.mrf.mxu0
        %v4300 = vadd.f32 %v4187, %v4299
        %v4301 = vpop.f32.mrf.mxu0
        %v4302 = vadd.f32 %v4189, %v4301
        %v4303 = vpop.f32.mrf.mxu0
        %v4304 = vadd.f32 %v4191, %v4303
        %4305 = vmatprep.mubr.bf16.mxu0 %v632
        %4306 = vmatmul.mubr.bf16.gmra.mxu0 %v631
        %v4307 = vpop.f32.mrf.mxu0
        %v4308 = vadd.f32 %v4195, %v4307
        %v4309 = vpop.f32.mrf.mxu0
        %v4310 = vadd.f32 %v4197, %v4309
        %v4311 = vpop.f32.mrf.mxu0
        %v4312 = vadd.f32 %v4199, %v4311
        %v4313 = vpop.f32.mrf.mxu0
        %v4314 = vadd.f32 %v4201, %v4313
        %4315 = vmatprep.mubr.bf16.mxu0 %v648
        %4316 = vmatmul.mubr.bf16.gmra.mxu0 %v647
        %v4317 = vpop.f32.mrf.mxu0
        %v4318 = vadd.f32 %v4205, %v4317
        %v4319 = vpop.f32.mrf.mxu0
        %v4320 = vadd.f32 %v4207, %v4319
        %v4321 = vpop.f32.mrf.mxu0
        %v4322 = vadd.f32 %v4209, %v4321
        %v4323 = vpop.f32.mrf.mxu0
        %v4324 = vadd.f32 %v4211, %v4323
        %4325 = vmatprep.mubr.bf16.mxu0 %v664
        %4326 = vmatmul.mubr.bf16.gmra.mxu0 %v663
        %v4327 = vpop.f32.mrf.mxu0
        %v4328 = vadd.f32 %v4215, %v4327
        %v4329 = vpop.f32.mrf.mxu0
        %v4330 = vadd.f32 %v4217, %v4329
        %v4331 = vpop.f32.mrf.mxu0
        %v4332 = vadd.f32 %v4219, %v4331
        %v4333 = vpop.f32.mrf.mxu0
        %v4334 = vadd.f32 %v4221, %v4333
        %4335 = vmatprep.mubr.bf16.mxu0 %v680
        %4336 = vmatmul.mubr.bf16.gmra.mxu0 %v679
        %v4337 = vpop.f32.mrf.mxu0
        %v4338 = vadd.f32 %v4225, %v4337
        %v4339 = vpop.f32.mrf.mxu0
        %v4340 = vadd.f32 %v4227, %v4339
        %v4341 = vpop.f32.mrf.mxu0
        %v4342 = vadd.f32 %v4229, %v4341
        %v4343 = vpop.f32.mrf.mxu0
        %v4344 = vadd.f32 %v4231, %v4343
        %4345 = vdwg.mxu0
        %4346 = vmatprep.subr.bf16.mxu0 %v3106
        %4347 = vmatpush1.bf16.msra.mxu0 %v3105
        %4348 = vmatprep.subr.bf16.mxu0 %v3102
        %4349 = vmatpush1.bf16.msra.mxu0 %v3101
        %4350 = vmatprep.subr.bf16.mxu0 %v3098
        %4351 = vmatpush1.bf16.msra.mxu0 %v3097
        %4352 = vmatprep.subr.bf16.mxu0 %v3094
        %4353 = vmatpush1.bf16.msra.mxu0 %v3093
        %4354 = vmatprep.subr.bf16.mxu0 %v3090
        %4355 = vmatpush1.bf16.msra.mxu0 %v3089
        %4356 = vmatprep.subr.bf16.mxu0 %v3086
        %4357 = vmatpush1.bf16.msra.mxu0 %v3085
        %4358 = vmatprep.subr.bf16.mxu0 %v3082
        %4359 = vmatpush1.bf16.msra.mxu0 %v3081
        %4360 = vmatprep.subr.bf16.mxu0 %v3078
        %4361 = vmatpush1.bf16.msra.mxu0 %v3077
        %4362 = vmatprep.subr.bf16.mxu0 %v3138
        %4363 = vmatpush2.bf16.msra.mxu0 %v3137
        %4364 = vmatprep.subr.bf16.mxu0 %v3134
        %4365 = vmatpush2.bf16.msra.mxu0 %v3133
        %4366 = vmatprep.subr.bf16.mxu0 %v3130
        %4367 = vmatpush2.bf16.msra.mxu0 %v3129
        %4368 = vmatprep.subr.bf16.mxu0 %v3126
        %4369 = vmatpush2.bf16.msra.mxu0 %v3125
        %4370 = vmatprep.subr.bf16.mxu0 %v3122
        %4371 = vmatpush2.bf16.msra.mxu0 %v3121
        %4372 = vmatprep.subr.bf16.mxu0 %v3118
        %4373 = vmatpush2.bf16.msra.mxu0 %v3117
        %4374 = vmatprep.subr.bf16.mxu0 %v3114
        %4375 = vmatpush2.bf16.msra.mxu0 %v3113
        %4376 = vmatprep.subr.bf16.mxu0 %v3110
        %4377 = vmatpush2.bf16.msra.mxu0 %v3109
        %4378 = vmatprep.mubr.bf16.mxu0 %v570
        %4379 = vmatmul.mubr.bf16.gmra.mxu0 %v569
        %v4380 = vpop.f32.mrf.mxu0
        %v4381 = vadd.f32 %v4268, %v4380
        %v4382 = vpop.f32.mrf.mxu0
        %v4383 = vadd.f32 %v4270, %v4382
        %v4384 = vpop.f32.mrf.mxu0
        %v4385 = vadd.f32 %v4272, %v4384
        %v4386 = vpop.f32.mrf.mxu0
        %v4387 = vadd.f32 %v4274, %v4386
        %4388 = vmatprep.mubr.bf16.mxu0 %v586
        %4389 = vmatmul.mubr.bf16.gmra.mxu0 %v585
        %v4390 = vpop.f32.mrf.mxu0
        %v4391 = vadd.f32 %v4278, %v4390
        %v4392 = vpop.f32.mrf.mxu0
        %v4393 = vadd.f32 %v4280, %v4392
        %v4394 = vpop.f32.mrf.mxu0
        %v4395 = vadd.f32 %v4282, %v4394
        %v4396 = vpop.f32.mrf.mxu0
        %v4397 = vadd.f32 %v4284, %v4396
        %4398 = vmatprep.mubr.bf16.mxu0 %v602
        %4399 = vmatmul.mubr.bf16.gmra.mxu0 %v601
        %v4400 = vpop.f32.mrf.mxu0
        %v4401 = vadd.f32 %v4288, %v4400
        %v4402 = vpop.f32.mrf.mxu0
        %v4403 = vadd.f32 %v4290, %v4402
        %v4404 = vpop.f32.mrf.mxu0
        %v4405 = vadd.f32 %v4292, %v4404
        %v4406 = vpop.f32.mrf.mxu0
        %v4407 = vadd.f32 %v4294, %v4406
        %4408 = vmatprep.mubr.bf16.mxu0 %v618
        %4409 = vmatmul.mubr.bf16.gmra.mxu0 %v617
        %v4410 = vpop.f32.mrf.mxu0
        %v4411 = vadd.f32 %v4298, %v4410
        %v4412 = vpop.f32.mrf.mxu0
        %v4413 = vadd.f32 %v4300, %v4412
        %v4414 = vpop.f32.mrf.mxu0
        %v4415 = vadd.f32 %v4302, %v4414
        %v4416 = vpop.f32.mrf.mxu0
        %v4417 = vadd.f32 %v4304, %v4416
        %4418 = vmatprep.mubr.bf16.mxu0 %v634
        %4419 = vmatmul.mubr.bf16.gmra.mxu0 %v633
        %v4420 = vpop.f32.mrf.mxu0
        %v4421 = vadd.f32 %v4308, %v4420
        %v4422 = vpop.f32.mrf.mxu0
        %v4423 = vadd.f32 %v4310, %v4422
        %v4424 = vpop.f32.mrf.mxu0
        %v4425 = vadd.f32 %v4312, %v4424
        %v4426 = vpop.f32.mrf.mxu0
        %v4427 = vadd.f32 %v4314, %v4426
        %4428 = vmatprep.mubr.bf16.mxu0 %v650
        %4429 = vmatmul.mubr.bf16.gmra.mxu0 %v649
        %v4430 = vpop.f32.mrf.mxu0
        %v4431 = vadd.f32 %v4318, %v4430
        %v4432 = vpop.f32.mrf.mxu0
        %v4433 = vadd.f32 %v4320, %v4432
        %v4434 = vpop.f32.mrf.mxu0
        %v4435 = vadd.f32 %v4322, %v4434
        %v4436 = vpop.f32.mrf.mxu0
        %v4437 = vadd.f32 %v4324, %v4436
        %4438 = vmatprep.mubr.bf16.mxu0 %v666
        %4439 = vmatmul.mubr.bf16.gmra.mxu0 %v665
        %v4440 = vpop.f32.mrf.mxu0
        %v4441 = vadd.f32 %v4328, %v4440
        %v4442 = vpop.f32.mrf.mxu0
        %v4443 = vadd.f32 %v4330, %v4442
        %v4444 = vpop.f32.mrf.mxu0
        %v4445 = vadd.f32 %v4332, %v4444
        %v4446 = vpop.f32.mrf.mxu0
        %v4447 = vadd.f32 %v4334, %v4446
        %4448 = vmatprep.mubr.bf16.mxu0 %v682
        %4449 = vmatmul.mubr.bf16.gmra.mxu0 %v681
        %v4450 = vpop.f32.mrf.mxu0
        %v4451 = vadd.f32 %v4338, %v4450
        %v4452 = vpop.f32.mrf.mxu0
        %v4453 = vadd.f32 %v4340, %v4452
        %v4454 = vpop.f32.mrf.mxu0
        %v4455 = vadd.f32 %v4342, %v4454
        %v4456 = vpop.f32.mrf.mxu0
        %v4457 = vadd.f32 %v4344, %v4456
        %4458 = vdwg.mxu0
        %4459 = vmatprep.subr.bf16.mxu0 %v3170
        %4460 = vmatpush1.bf16.msra.mxu0 %v3169
        %4461 = vmatprep.subr.bf16.mxu0 %v3166
        %4462 = vmatpush1.bf16.msra.mxu0 %v3165
        %4463 = vmatprep.subr.bf16.mxu0 %v3162
        %4464 = vmatpush1.bf16.msra.mxu0 %v3161
        %4465 = vmatprep.subr.bf16.mxu0 %v3158
        %4466 = vmatpush1.bf16.msra.mxu0 %v3157
        %4467 = vmatprep.subr.bf16.mxu0 %v3154
        %4468 = vmatpush1.bf16.msra.mxu0 %v3153
        %4469 = vmatprep.subr.bf16.mxu0 %v3150
        %4470 = vmatpush1.bf16.msra.mxu0 %v3149
        %4471 = vmatprep.subr.bf16.mxu0 %v3146
        %4472 = vmatpush1.bf16.msra.mxu0 %v3145
        %4473 = vmatprep.subr.bf16.mxu0 %v3142
        %4474 = vmatpush1.bf16.msra.mxu0 %v3141
        %4475 = vmatprep.subr.bf16.mxu0 %v3202
        %4476 = vmatpush2.bf16.msra.mxu0 %v3201
        %4477 = vmatprep.subr.bf16.mxu0 %v3198
        %4478 = vmatpush2.bf16.msra.mxu0 %v3197
        %4479 = vmatprep.subr.bf16.mxu0 %v3194
        %4480 = vmatpush2.bf16.msra.mxu0 %v3193
        %4481 = vmatprep.subr.bf16.mxu0 %v3190
        %4482 = vmatpush2.bf16.msra.mxu0 %v3189
        %4483 = vmatprep.subr.bf16.mxu0 %v3186
        %4484 = vmatpush2.bf16.msra.mxu0 %v3185
        %4485 = vmatprep.subr.bf16.mxu0 %v3182
        %4486 = vmatpush2.bf16.msra.mxu0 %v3181
        %4487 = vmatprep.subr.bf16.mxu0 %v3178
        %4488 = vmatpush2.bf16.msra.mxu0 %v3177
        %4489 = vmatprep.subr.bf16.mxu0 %v3174
        %4490 = vmatpush2.bf16.msra.mxu0 %v3173
        %4491 = vmatprep.mubr.bf16.mxu0 %v572
        %4492 = vmatmul.mubr.bf16.gmra.mxu0 %v571
        %v4493 = vpop.f32.mrf.mxu0
        %v4494 = vadd.f32 %v4381, %v4493
        %v4495 = vpop.f32.mrf.mxu0
        %v4496 = vadd.f32 %v4383, %v4495
        %v4497 = vpop.f32.mrf.mxu0
        %v4498 = vadd.f32 %v4385, %v4497
        %v4499 = vpop.f32.mrf.mxu0
        %v4500 = vadd.f32 %v4387, %v4499
        %4501 = vmatprep.mubr.bf16.mxu0 %v588
        %4502 = vmatmul.mubr.bf16.gmra.mxu0 %v587
        %v4503 = vpop.f32.mrf.mxu0
        %v4504 = vadd.f32 %v4391, %v4503
        %v4505 = vpop.f32.mrf.mxu0
        %v4506 = vadd.f32 %v4393, %v4505
        %v4507 = vpop.f32.mrf.mxu0
        %v4508 = vadd.f32 %v4395, %v4507
        %v4509 = vpop.f32.mrf.mxu0
        %v4510 = vadd.f32 %v4397, %v4509
        %4511 = vmatprep.mubr.bf16.mxu0 %v604
        %4512 = vmatmul.mubr.bf16.gmra.mxu0 %v603
        %v4513 = vpop.f32.mrf.mxu0
        %v4514 = vadd.f32 %v4401, %v4513
        %v4515 = vpop.f32.mrf.mxu0
        %v4516 = vadd.f32 %v4403, %v4515
        %v4517 = vpop.f32.mrf.mxu0
        %v4518 = vadd.f32 %v4405, %v4517
        %v4519 = vpop.f32.mrf.mxu0
        %v4520 = vadd.f32 %v4407, %v4519
        %4521 = vmatprep.mubr.bf16.mxu0 %v620
        %4522 = vmatmul.mubr.bf16.gmra.mxu0 %v619
        %v4523 = vpop.f32.mrf.mxu0
        %v4524 = vadd.f32 %v4411, %v4523
        %v4525 = vpop.f32.mrf.mxu0
        %v4526 = vadd.f32 %v4413, %v4525
        %v4527 = vpop.f32.mrf.mxu0
        %v4528 = vadd.f32 %v4415, %v4527
        %v4529 = vpop.f32.mrf.mxu0
        %v4530 = vadd.f32 %v4417, %v4529
        %4531 = vmatprep.mubr.bf16.mxu0 %v636
        %4532 = vmatmul.mubr.bf16.gmra.mxu0 %v635
        %v4533 = vpop.f32.mrf.mxu0
        %v4534 = vadd.f32 %v4421, %v4533
        %v4535 = vpop.f32.mrf.mxu0
        %v4536 = vadd.f32 %v4423, %v4535
        %v4537 = vpop.f32.mrf.mxu0
        %v4538 = vadd.f32 %v4425, %v4537
        %v4539 = vpop.f32.mrf.mxu0
        %v4540 = vadd.f32 %v4427, %v4539
        %4541 = vmatprep.mubr.bf16.mxu0 %v652
        %4542 = vmatmul.mubr.bf16.gmra.mxu0 %v651
        %v4543 = vpop.f32.mrf.mxu0
        %v4544 = vadd.f32 %v4431, %v4543
        %v4545 = vpop.f32.mrf.mxu0
        %v4546 = vadd.f32 %v4433, %v4545
        %v4547 = vpop.f32.mrf.mxu0
        %v4548 = vadd.f32 %v4435, %v4547
        %v4549 = vpop.f32.mrf.mxu0
        %v4550 = vadd.f32 %v4437, %v4549
        %4551 = vmatprep.mubr.bf16.mxu0 %v668
        %4552 = vmatmul.mubr.bf16.gmra.mxu0 %v667
        %v4553 = vpop.f32.mrf.mxu0
        %v4554 = vadd.f32 %v4441, %v4553
        %v4555 = vpop.f32.mrf.mxu0
        %v4556 = vadd.f32 %v4443, %v4555
        %v4557 = vpop.f32.mrf.mxu0
        %v4558 = vadd.f32 %v4445, %v4557
        %v4559 = vpop.f32.mrf.mxu0
        %v4560 = vadd.f32 %v4447, %v4559
        %4561 = vmatprep.mubr.bf16.mxu0 %v684
        %4562 = vmatmul.mubr.bf16.gmra.mxu0 %v683
        %v4563 = vpop.f32.mrf.mxu0
        %v4564 = vadd.f32 %v4451, %v4563
        %v4565 = vpop.f32.mrf.mxu0
        %v4566 = vadd.f32 %v4453, %v4565
        %v4567 = vpop.f32.mrf.mxu0
        %v4568 = vadd.f32 %v4455, %v4567
        %v4569 = vpop.f32.mrf.mxu0
        %v4570 = vadd.f32 %v4457, %v4569
        %4571 = vdwg.mxu0
        %4572 = vmatprep.subr.bf16.mxu0 %v3234
        %4573 = vmatpush1.bf16.msra.mxu0 %v3233
        %4574 = vmatprep.subr.bf16.mxu0 %v3230
        %4575 = vmatpush1.bf16.msra.mxu0 %v3229
        %4576 = vmatprep.subr.bf16.mxu0 %v3226
        %4577 = vmatpush1.bf16.msra.mxu0 %v3225
        %4578 = vmatprep.subr.bf16.mxu0 %v3222
        %4579 = vmatpush1.bf16.msra.mxu0 %v3221
        %4580 = vmatprep.subr.bf16.mxu0 %v3218
        %4581 = vmatpush1.bf16.msra.mxu0 %v3217
        %4582 = vmatprep.subr.bf16.mxu0 %v3214
        %4583 = vmatpush1.bf16.msra.mxu0 %v3213
        %4584 = vmatprep.subr.bf16.mxu0 %v3210
        %4585 = vmatpush1.bf16.msra.mxu0 %v3209
        %4586 = vmatprep.subr.bf16.mxu0 %v3206
        %4587 = vmatpush1.bf16.msra.mxu0 %v3205
        %4588 = vmatprep.subr.bf16.mxu0 %v3266
        %4589 = vmatpush2.bf16.msra.mxu0 %v3265
        %4590 = vmatprep.subr.bf16.mxu0 %v3262
        %4591 = vmatpush2.bf16.msra.mxu0 %v3261
        %4592 = vmatprep.subr.bf16.mxu0 %v3258
        %4593 = vmatpush2.bf16.msra.mxu0 %v3257
        %4594 = vmatprep.subr.bf16.mxu0 %v3254
        %4595 = vmatpush2.bf16.msra.mxu0 %v3253
        %4596 = vmatprep.subr.bf16.mxu0 %v3250
        %4597 = vmatpush2.bf16.msra.mxu0 %v3249
        %4598 = vmatprep.subr.bf16.mxu0 %v3246
        %4599 = vmatpush2.bf16.msra.mxu0 %v3245
        %4600 = vmatprep.subr.bf16.mxu0 %v3242
        %4601 = vmatpush2.bf16.msra.mxu0 %v3241
        %4602 = vmatprep.subr.bf16.mxu0 %v3238
        %4603 = vmatpush2.bf16.msra.mxu0 %v3237
        %4604 = vmatprep.mubr.bf16.mxu0 %v574
        %4605 = vmatmul.mubr.bf16.gmra.mxu0 %v573
        %v4606 = vpop.f32.mrf.mxu0
        %v4607 = vadd.f32 %v4494, %v4606
        %v4608 = vpop.f32.mrf.mxu0
        %v4609 = vadd.f32 %v4496, %v4608
        %v4610 = vpop.f32.mrf.mxu0
        %v4611 = vadd.f32 %v4498, %v4610
        %v4612 = vpop.f32.mrf.mxu0
        %v4613 = vadd.f32 %v4500, %v4612
        %4614 = vmatprep.mubr.bf16.mxu0 %v590
        %4615 = vmatmul.mubr.bf16.gmra.mxu0 %v589
        %v4616 = vpop.f32.mrf.mxu0
        %v4617 = vadd.f32 %v4504, %v4616
        %v4618 = vpop.f32.mrf.mxu0
        %v4619 = vadd.f32 %v4506, %v4618
        %v4620 = vpop.f32.mrf.mxu0
        %v4621 = vadd.f32 %v4508, %v4620
        %v4622 = vpop.f32.mrf.mxu0
        %v4623 = vadd.f32 %v4510, %v4622
        %4624 = vmatprep.mubr.bf16.mxu0 %v606
        %4625 = vmatmul.mubr.bf16.gmra.mxu0 %v605
        %v4626 = vpop.f32.mrf.mxu0
        %v4627 = vadd.f32 %v4514, %v4626
        %v4628 = vpop.f32.mrf.mxu0
        %v4629 = vadd.f32 %v4516, %v4628
        %v4630 = vpop.f32.mrf.mxu0
        %v4631 = vadd.f32 %v4518, %v4630
        %v4632 = vpop.f32.mrf.mxu0
        %v4633 = vadd.f32 %v4520, %v4632
        %4634 = vmatprep.mubr.bf16.mxu0 %v622
        %4635 = vmatmul.mubr.bf16.gmra.mxu0 %v621
        %v4636 = vpop.f32.mrf.mxu0
        %v4637 = vadd.f32 %v4524, %v4636
        %v4638 = vpop.f32.mrf.mxu0
        %v4639 = vadd.f32 %v4526, %v4638
        %v4640 = vpop.f32.mrf.mxu0
        %v4641 = vadd.f32 %v4528, %v4640
        %v4642 = vpop.f32.mrf.mxu0
        %v4643 = vadd.f32 %v4530, %v4642
        %4644 = vmatprep.mubr.bf16.mxu0 %v638
        %4645 = vmatmul.mubr.bf16.gmra.mxu0 %v637
        %v4646 = vpop.f32.mrf.mxu0
        %v4647 = vadd.f32 %v4534, %v4646
        %v4648 = vpop.f32.mrf.mxu0
        %v4649 = vadd.f32 %v4536, %v4648
        %v4650 = vpop.f32.mrf.mxu0
        %v4651 = vadd.f32 %v4538, %v4650
        %v4652 = vpop.f32.mrf.mxu0
        %v4653 = vadd.f32 %v4540, %v4652
        %4654 = vmatprep.mubr.bf16.mxu0 %v654
        %4655 = vmatmul.mubr.bf16.gmra.mxu0 %v653
        %v4656 = vpop.f32.mrf.mxu0
        %v4657 = vadd.f32 %v4544, %v4656
        %v4658 = vpop.f32.mrf.mxu0
        %v4659 = vadd.f32 %v4546, %v4658
        %v4660 = vpop.f32.mrf.mxu0
        %v4661 = vadd.f32 %v4548, %v4660
        %v4662 = vpop.f32.mrf.mxu0
        %v4663 = vadd.f32 %v4550, %v4662
        %4664 = vmatprep.mubr.bf16.mxu0 %v670
        %4665 = vmatmul.mubr.bf16.gmra.mxu0 %v669
        %v4666 = vpop.f32.mrf.mxu0
        %v4667 = vadd.f32 %v4554, %v4666
        %v4668 = vpop.f32.mrf.mxu0
        %v4669 = vadd.f32 %v4556, %v4668
        %v4670 = vpop.f32.mrf.mxu0
        %v4671 = vadd.f32 %v4558, %v4670
        %v4672 = vpop.f32.mrf.mxu0
        %v4673 = vadd.f32 %v4560, %v4672
        %4674 = vmatprep.mubr.bf16.mxu0 %v686
        %4675 = vmatmul.mubr.bf16.gmra.mxu0 %v685
        %v4676 = vpop.f32.mrf.mxu0
        %v4677 = vadd.f32 %v4564, %v4676
        %v4678 = vpop.f32.mrf.mxu0
        %v4679 = vadd.f32 %v4566, %v4678
        %v4680 = vpop.f32.mrf.mxu0
        %v4681 = vadd.f32 %v4568, %v4680
        %v4682 = vpop.f32.mrf.mxu0
        %v4683 = vadd.f32 %v4570, %v4682
        %4684 = vdwg.mxu0
        %4685 = vmatprep.subr.bf16.mxu0 %v2788
        %4686 = vmatpush1.bf16.msra.mxu0 %v2787
        %4687 = vmatprep.subr.bf16.mxu0 %v2784
        %4688 = vmatpush1.bf16.msra.mxu0 %v2783
        %4689 = vmatprep.subr.bf16.mxu0 %v2780
        %4690 = vmatpush1.bf16.msra.mxu0 %v2779
        %4691 = vmatprep.subr.bf16.mxu0 %v2776
        %4692 = vmatpush1.bf16.msra.mxu0 %v2775
        %4693 = vmatprep.subr.bf16.mxu0 %v2772
        %4694 = vmatpush1.bf16.msra.mxu0 %v2771
        %4695 = vmatprep.subr.bf16.mxu0 %v2768
        %4696 = vmatpush1.bf16.msra.mxu0 %v2767
        %4697 = vmatprep.subr.bf16.mxu0 %v2764
        %4698 = vmatpush1.bf16.msra.mxu0 %v2763
        %4699 = vmatprep.subr.bf16.mxu0 %v2760
        %4700 = vmatpush1.bf16.msra.mxu0 %v2759
        %4701 = vmatprep.subr.bf16.mxu0 %v2820
        %4702 = vmatpush2.bf16.msra.mxu0 %v2819
        %4703 = vmatprep.subr.bf16.mxu0 %v2816
        %4704 = vmatpush2.bf16.msra.mxu0 %v2815
        %4705 = vmatprep.subr.bf16.mxu0 %v2812
        %4706 = vmatpush2.bf16.msra.mxu0 %v2811
        %4707 = vmatprep.subr.bf16.mxu0 %v2808
        %4708 = vmatpush2.bf16.msra.mxu0 %v2807
        %4709 = vmatprep.subr.bf16.mxu0 %v2804
        %4710 = vmatpush2.bf16.msra.mxu0 %v2803
        %4711 = vmatprep.subr.bf16.mxu0 %v2800
        %4712 = vmatpush2.bf16.msra.mxu0 %v2799
        %4713 = vmatprep.subr.bf16.mxu0 %v2796
        %4714 = vmatpush2.bf16.msra.mxu0 %v2795
        %4715 = vmatprep.subr.bf16.mxu0 %v2792
        %4716 = vmatpush2.bf16.msra.mxu0 %v2791
        %4717 = vmatprep.mubr.bf16.mxu0 %v560
        %4718 = vmatmul.mubr.bf16.gmra.mxu0 %v559
        %v4719 = vpop.f32.mrf.mxu0
        %v4720 = vadd.f32 %v1212, %v4719
        %v4721 = vpop.f32.mrf.mxu0
        %v4722 = vadd.f32 %v1216, %v4721
        %v4723 = vpop.f32.mrf.mxu0
        %v4724 = vadd.f32 %v1212, %v4723
        %v4725 = vpop.f32.mrf.mxu0
        %v4726 = vadd.f32 %v1216, %v4725
        %4727 = vmatprep.mubr.bf16.mxu0 %v576
        %4728 = vmatmul.mubr.bf16.gmra.mxu0 %v575
        %v4729 = vpop.f32.mrf.mxu0
        %v4730 = vadd.f32 %v1212, %v4729
        %v4731 = vpop.f32.mrf.mxu0
        %v4732 = vadd.f32 %v1216, %v4731
        %v4733 = vpop.f32.mrf.mxu0
        %v4734 = vadd.f32 %v1212, %v4733
        %v4735 = vpop.f32.mrf.mxu0
        %v4736 = vadd.f32 %v1216, %v4735
        %4737 = vmatprep.mubr.bf16.mxu0 %v592
        %4738 = vmatmul.mubr.bf16.gmra.mxu0 %v591
        %v4739 = vpop.f32.mrf.mxu0
        %v4740 = vadd.f32 %v1212, %v4739
        %v4741 = vpop.f32.mrf.mxu0
        %v4742 = vadd.f32 %v1216, %v4741
        %v4743 = vpop.f32.mrf.mxu0
        %v4744 = vadd.f32 %v1212, %v4743
        %v4745 = vpop.f32.mrf.mxu0
        %v4746 = vadd.f32 %v1216, %v4745
        %4747 = vmatprep.mubr.bf16.mxu0 %v608
        %4748 = vmatmul.mubr.bf16.gmra.mxu0 %v607
        %v4749 = vpop.f32.mrf.mxu0
        %v4750 = vadd.f32 %v1212, %v4749
        %v4751 = vpop.f32.mrf.mxu0
        %v4752 = vadd.f32 %v1216, %v4751
        %v4753 = vpop.f32.mrf.mxu0
        %v4754 = vadd.f32 %v1212, %v4753
        %v4755 = vpop.f32.mrf.mxu0
        %v4756 = vadd.f32 %v1216, %v4755
        %4757 = vmatprep.mubr.bf16.mxu0 %v624
        %4758 = vmatmul.mubr.bf16.gmra.mxu0 %v623
        %v4759 = vpop.f32.mrf.mxu0
        %v4760 = vadd.f32 %v1212, %v4759
        %v4761 = vpop.f32.mrf.mxu0
        %v4762 = vadd.f32 %v1216, %v4761
        %v4763 = vpop.f32.mrf.mxu0
        %v4764 = vadd.f32 %v1212, %v4763
        %v4765 = vpop.f32.mrf.mxu0
        %v4766 = vadd.f32 %v1216, %v4765
        %4767 = vmatprep.mubr.bf16.mxu0 %v640
        %4768 = vmatmul.mubr.bf16.gmra.mxu0 %v639
        %v4769 = vpop.f32.mrf.mxu0
        %v4770 = vadd.f32 %v1212, %v4769
        %v4771 = vpop.f32.mrf.mxu0
        %v4772 = vadd.f32 %v1216, %v4771
        %v4773 = vpop.f32.mrf.mxu0
        %v4774 = vadd.f32 %v1212, %v4773
        %v4775 = vpop.f32.mrf.mxu0
        %v4776 = vadd.f32 %v1216, %v4775
        %4777 = vmatprep.mubr.bf16.mxu0 %v656
        %4778 = vmatmul.mubr.bf16.gmra.mxu0 %v655
        %v4779 = vpop.f32.mrf.mxu0
        %v4780 = vadd.f32 %v1212, %v4779
        %v4781 = vpop.f32.mrf.mxu0
        %v4782 = vadd.f32 %v1216, %v4781
        %v4783 = vpop.f32.mrf.mxu0
        %v4784 = vadd.f32 %v1212, %v4783
        %v4785 = vpop.f32.mrf.mxu0
        %v4786 = vadd.f32 %v1216, %v4785
        %4787 = vmatprep.mubr.bf16.mxu0 %v672
        %4788 = vmatmul.mubr.bf16.gmra.mxu0 %v671
        %v4789 = vpop.f32.mrf.mxu0
        %v4790 = vadd.f32 %v1212, %v4789
        %v4791 = vpop.f32.mrf.mxu0
        %v4792 = vadd.f32 %v1216, %v4791
        %v4793 = vpop.f32.mrf.mxu0
        %v4794 = vadd.f32 %v1212, %v4793
        %v4795 = vpop.f32.mrf.mxu0
        %v4796 = vadd.f32 %v1216, %v4795
        %4797 = vdwg.mxu0
        %4798 = vmatprep.subr.bf16.mxu0 %v2852
        %4799 = vmatpush1.bf16.msra.mxu0 %v2851
        %4800 = vmatprep.subr.bf16.mxu0 %v2848
        %4801 = vmatpush1.bf16.msra.mxu0 %v2847
        %4802 = vmatprep.subr.bf16.mxu0 %v2844
        %4803 = vmatpush1.bf16.msra.mxu0 %v2843
        %4804 = vmatprep.subr.bf16.mxu0 %v2840
        %4805 = vmatpush1.bf16.msra.mxu0 %v2839
        %4806 = vmatprep.subr.bf16.mxu0 %v2836
        %4807 = vmatpush1.bf16.msra.mxu0 %v2835
        %4808 = vmatprep.subr.bf16.mxu0 %v2832
        %4809 = vmatpush1.bf16.msra.mxu0 %v2831
        %4810 = vmatprep.subr.bf16.mxu0 %v2828
        %4811 = vmatpush1.bf16.msra.mxu0 %v2827
        %4812 = vmatprep.subr.bf16.mxu0 %v2824
        %4813 = vmatpush1.bf16.msra.mxu0 %v2823
        %4814 = vmatprep.subr.bf16.mxu0 %v2884
        %4815 = vmatpush2.bf16.msra.mxu0 %v2883
        %4816 = vmatprep.subr.bf16.mxu0 %v2880
        %4817 = vmatpush2.bf16.msra.mxu0 %v2879
        %4818 = vmatprep.subr.bf16.mxu0 %v2876
        %4819 = vmatpush2.bf16.msra.mxu0 %v2875
        %4820 = vmatprep.subr.bf16.mxu0 %v2872
        %4821 = vmatpush2.bf16.msra.mxu0 %v2871
        %4822 = vmatprep.subr.bf16.mxu0 %v2868
        %4823 = vmatpush2.bf16.msra.mxu0 %v2867
        %4824 = vmatprep.subr.bf16.mxu0 %v2864
        %4825 = vmatpush2.bf16.msra.mxu0 %v2863
        %4826 = vmatprep.subr.bf16.mxu0 %v2860
        %4827 = vmatpush2.bf16.msra.mxu0 %v2859
        %4828 = vmatprep.subr.bf16.mxu0 %v2856
        %4829 = vmatpush2.bf16.msra.mxu0 %v2855
        %4830 = vmatprep.mubr.bf16.mxu0 %v562
        %4831 = vmatmul.mubr.bf16.gmra.mxu0 %v561
        %v4832 = vpop.f32.mrf.mxu0
        %v4833 = vadd.f32 %v4720, %v4832
        %v4834 = vpop.f32.mrf.mxu0
        %v4835 = vadd.f32 %v4722, %v4834
        %v4836 = vpop.f32.mrf.mxu0
        %v4837 = vadd.f32 %v4724, %v4836
        %v4838 = vpop.f32.mrf.mxu0
        %v4839 = vadd.f32 %v4726, %v4838
        %4840 = vmatprep.mubr.bf16.mxu0 %v578
        %4841 = vmatmul.mubr.bf16.gmra.mxu0 %v577
        %v4842 = vpop.f32.mrf.mxu0
        %v4843 = vadd.f32 %v4730, %v4842
        %v4844 = vpop.f32.mrf.mxu0
        %v4845 = vadd.f32 %v4732, %v4844
        %v4846 = vpop.f32.mrf.mxu0
        %v4847 = vadd.f32 %v4734, %v4846
        %v4848 = vpop.f32.mrf.mxu0
        %v4849 = vadd.f32 %v4736, %v4848
        %4850 = vmatprep.mubr.bf16.mxu0 %v594
        %4851 = vmatmul.mubr.bf16.gmra.mxu0 %v593
        %v4852 = vpop.f32.mrf.mxu0
        %v4853 = vadd.f32 %v4740, %v4852
        %v4854 = vpop.f32.mrf.mxu0
        %v4855 = vadd.f32 %v4742, %v4854
        %v4856 = vpop.f32.mrf.mxu0
        %v4857 = vadd.f32 %v4744, %v4856
        %v4858 = vpop.f32.mrf.mxu0
        %v4859 = vadd.f32 %v4746, %v4858
        %4860 = vmatprep.mubr.bf16.mxu0 %v610
        %4861 = vmatmul.mubr.bf16.gmra.mxu0 %v609
        %v4862 = vpop.f32.mrf.mxu0
        %v4863 = vadd.f32 %v4750, %v4862
        %v4864 = vpop.f32.mrf.mxu0
        %v4865 = vadd.f32 %v4752, %v4864
        %v4866 = vpop.f32.mrf.mxu0
        %v4867 = vadd.f32 %v4754, %v4866
        %v4868 = vpop.f32.mrf.mxu0
        %v4869 = vadd.f32 %v4756, %v4868
        %4870 = vmatprep.mubr.bf16.mxu0 %v626
        %4871 = vmatmul.mubr.bf16.gmra.mxu0 %v625
        %v4872 = vpop.f32.mrf.mxu0
        %v4873 = vadd.f32 %v4760, %v4872
        %v4874 = vpop.f32.mrf.mxu0
        %v4875 = vadd.f32 %v4762, %v4874
        %v4876 = vpop.f32.mrf.mxu0
        %v4877 = vadd.f32 %v4764, %v4876
        %v4878 = vpop.f32.mrf.mxu0
        %v4879 = vadd.f32 %v4766, %v4878
        %4880 = vmatprep.mubr.bf16.mxu0 %v642
        %4881 = vmatmul.mubr.bf16.gmra.mxu0 %v641
        %v4882 = vpop.f32.mrf.mxu0
        %v4883 = vadd.f32 %v4770, %v4882
        %v4884 = vpop.f32.mrf.mxu0
        %v4885 = vadd.f32 %v4772, %v4884
        %v4886 = vpop.f32.mrf.mxu0
        %v4887 = vadd.f32 %v4774, %v4886
        %v4888 = vpop.f32.mrf.mxu0
        %v4889 = vadd.f32 %v4776, %v4888
        %4890 = vmatprep.mubr.bf16.mxu0 %v658
        %4891 = vmatmul.mubr.bf16.gmra.mxu0 %v657
        %v4892 = vpop.f32.mrf.mxu0
        %v4893 = vadd.f32 %v4780, %v4892
        %v4894 = vpop.f32.mrf.mxu0
        %v4895 = vadd.f32 %v4782, %v4894
        %v4896 = vpop.f32.mrf.mxu0
        %v4897 = vadd.f32 %v4784, %v4896
        %v4898 = vpop.f32.mrf.mxu0
        %v4899 = vadd.f32 %v4786, %v4898
        %4900 = vmatprep.mubr.bf16.mxu0 %v674
        %4901 = vmatmul.mubr.bf16.gmra.mxu0 %v673
        %v4902 = vpop.f32.mrf.mxu0
        %v4903 = vadd.f32 %v4790, %v4902
        %v4904 = vpop.f32.mrf.mxu0
        %v4905 = vadd.f32 %v4792, %v4904
        %v4906 = vpop.f32.mrf.mxu0
        %v4907 = vadd.f32 %v4794, %v4906
        %v4908 = vpop.f32.mrf.mxu0
        %v4909 = vadd.f32 %v4796, %v4908
        %4910 = vdwg.mxu0
        %4911 = vmatprep.subr.bf16.mxu0 %v2916
        %4912 = vmatpush1.bf16.msra.mxu0 %v2915
        %4913 = vmatprep.subr.bf16.mxu0 %v2912
        %4914 = vmatpush1.bf16.msra.mxu0 %v2911
        %4915 = vmatprep.subr.bf16.mxu0 %v2908
        %4916 = vmatpush1.bf16.msra.mxu0 %v2907
        %4917 = vmatprep.subr.bf16.mxu0 %v2904
        %4918 = vmatpush1.bf16.msra.mxu0 %v2903
        %4919 = vmatprep.subr.bf16.mxu0 %v2900
        %4920 = vmatpush1.bf16.msra.mxu0 %v2899
        %4921 = vmatprep.subr.bf16.mxu0 %v2896
        %4922 = vmatpush1.bf16.msra.mxu0 %v2895
        %4923 = vmatprep.subr.bf16.mxu0 %v2892
        %4924 = vmatpush1.bf16.msra.mxu0 %v2891
        %4925 = vmatprep.subr.bf16.mxu0 %v2888
        %4926 = vmatpush1.bf16.msra.mxu0 %v2887
        %4927 = vmatprep.subr.bf16.mxu0 %v2948
        %4928 = vmatpush2.bf16.msra.mxu0 %v2947
        %4929 = vmatprep.subr.bf16.mxu0 %v2944
        %4930 = vmatpush2.bf16.msra.mxu0 %v2943
        %4931 = vmatprep.subr.bf16.mxu0 %v2940
        %4932 = vmatpush2.bf16.msra.mxu0 %v2939
        %4933 = vmatprep.subr.bf16.mxu0 %v2936
        %4934 = vmatpush2.bf16.msra.mxu0 %v2935
        %4935 = vmatprep.subr.bf16.mxu0 %v2932
        %4936 = vmatpush2.bf16.msra.mxu0 %v2931
        %4937 = vmatprep.subr.bf16.mxu0 %v2928
        %4938 = vmatpush2.bf16.msra.mxu0 %v2927
        %4939 = vmatprep.subr.bf16.mxu0 %v2924
        %4940 = vmatpush2.bf16.msra.mxu0 %v2923
        %4941 = vmatprep.subr.bf16.mxu0 %v2920
        %4942 = vmatpush2.bf16.msra.mxu0 %v2919
        %4943 = vmatprep.mubr.bf16.mxu0 %v564
        %4944 = vmatmul.mubr.bf16.gmra.mxu0 %v563
        %v4945 = vpop.f32.mrf.mxu0
        %v4946 = vadd.f32 %v4833, %v4945
        %v4947 = vpop.f32.mrf.mxu0
        %v4948 = vadd.f32 %v4835, %v4947
        %v4949 = vpop.f32.mrf.mxu0
        %v4950 = vadd.f32 %v4837, %v4949
        %v4951 = vpop.f32.mrf.mxu0
        %v4952 = vadd.f32 %v4839, %v4951
        %4953 = vmatprep.mubr.bf16.mxu0 %v580
        %4954 = vmatmul.mubr.bf16.gmra.mxu0 %v579
        %v4955 = vpop.f32.mrf.mxu0
        %v4956 = vadd.f32 %v4843, %v4955
        %v4957 = vpop.f32.mrf.mxu0
        %v4958 = vadd.f32 %v4845, %v4957
        %v4959 = vpop.f32.mrf.mxu0
        %v4960 = vadd.f32 %v4847, %v4959
        %v4961 = vpop.f32.mrf.mxu0
        %v4962 = vadd.f32 %v4849, %v4961
        %4963 = vmatprep.mubr.bf16.mxu0 %v596
        %4964 = vmatmul.mubr.bf16.gmra.mxu0 %v595
        %v4965 = vpop.f32.mrf.mxu0
        %v4966 = vadd.f32 %v4853, %v4965
        %v4967 = vpop.f32.mrf.mxu0
        %v4968 = vadd.f32 %v4855, %v4967
        %v4969 = vpop.f32.mrf.mxu0
        %v4970 = vadd.f32 %v4857, %v4969
        %v4971 = vpop.f32.mrf.mxu0
        %v4972 = vadd.f32 %v4859, %v4971
        %4973 = vmatprep.mubr.bf16.mxu0 %v612
        %4974 = vmatmul.mubr.bf16.gmra.mxu0 %v611
        %v4975 = vpop.f32.mrf.mxu0
        %v4976 = vadd.f32 %v4863, %v4975
        %v4977 = vpop.f32.mrf.mxu0
        %v4978 = vadd.f32 %v4865, %v4977
        %v4979 = vpop.f32.mrf.mxu0
        %v4980 = vadd.f32 %v4867, %v4979
        %v4981 = vpop.f32.mrf.mxu0
        %v4982 = vadd.f32 %v4869, %v4981
        %4983 = vmatprep.mubr.bf16.mxu0 %v628
        %4984 = vmatmul.mubr.bf16.gmra.mxu0 %v627
        %v4985 = vpop.f32.mrf.mxu0
        %v4986 = vadd.f32 %v4873, %v4985
        %v4987 = vpop.f32.mrf.mxu0
        %v4988 = vadd.f32 %v4875, %v4987
        %v4989 = vpop.f32.mrf.mxu0
        %v4990 = vadd.f32 %v4877, %v4989
        %v4991 = vpop.f32.mrf.mxu0
        %v4992 = vadd.f32 %v4879, %v4991
        %4993 = vmatprep.mubr.bf16.mxu0 %v644
        %4994 = vmatmul.mubr.bf16.gmra.mxu0 %v643
        %v4995 = vpop.f32.mrf.mxu0
        %v4996 = vadd.f32 %v4883, %v4995
        %v4997 = vpop.f32.mrf.mxu0
        %v4998 = vadd.f32 %v4885, %v4997
        %v4999 = vpop.f32.mrf.mxu0
        %v5000 = vadd.f32 %v4887, %v4999
        %v5001 = vpop.f32.mrf.mxu0
        %v5002 = vadd.f32 %v4889, %v5001
        %5003 = vmatprep.mubr.bf16.mxu0 %v660
        %5004 = vmatmul.mubr.bf16.gmra.mxu0 %v659
        %v5005 = vpop.f32.mrf.mxu0
        %v5006 = vadd.f32 %v4893, %v5005
        %v5007 = vpop.f32.mrf.mxu0
        %v5008 = vadd.f32 %v4895, %v5007
        %v5009 = vpop.f32.mrf.mxu0
        %v5010 = vadd.f32 %v4897, %v5009
        %v5011 = vpop.f32.mrf.mxu0
        %v5012 = vadd.f32 %v4899, %v5011
        %5013 = vmatprep.mubr.bf16.mxu0 %v676
        %5014 = vmatmul.mubr.bf16.gmra.mxu0 %v675
        %v5015 = vpop.f32.mrf.mxu0
        %v5016 = vadd.f32 %v4903, %v5015
        %v5017 = vpop.f32.mrf.mxu0
        %v5018 = vadd.f32 %v4905, %v5017
        %v5019 = vpop.f32.mrf.mxu0
        %v5020 = vadd.f32 %v4907, %v5019
        %v5021 = vpop.f32.mrf.mxu0
        %v5022 = vadd.f32 %v4909, %v5021
        %5023 = vdwg.mxu0
        %5024 = vmatprep.subr.bf16.mxu0 %v2980
        %5025 = vmatpush1.bf16.msra.mxu0 %v2979
        %5026 = vmatprep.subr.bf16.mxu0 %v2976
        %5027 = vmatpush1.bf16.msra.mxu0 %v2975
        %5028 = vmatprep.subr.bf16.mxu0 %v2972
        %5029 = vmatpush1.bf16.msra.mxu0 %v2971
        %5030 = vmatprep.subr.bf16.mxu0 %v2968
        %5031 = vmatpush1.bf16.msra.mxu0 %v2967
        %5032 = vmatprep.subr.bf16.mxu0 %v2964
        %5033 = vmatpush1.bf16.msra.mxu0 %v2963
        %5034 = vmatprep.subr.bf16.mxu0 %v2960
        %5035 = vmatpush1.bf16.msra.mxu0 %v2959
        %5036 = vmatprep.subr.bf16.mxu0 %v2956
        %5037 = vmatpush1.bf16.msra.mxu0 %v2955
        %5038 = vmatprep.subr.bf16.mxu0 %v2952
        %5039 = vmatpush1.bf16.msra.mxu0 %v2951
        %5040 = vmatprep.subr.bf16.mxu0 %v3012
        %5041 = vmatpush2.bf16.msra.mxu0 %v3011
        %5042 = vmatprep.subr.bf16.mxu0 %v3008
        %5043 = vmatpush2.bf16.msra.mxu0 %v3007
        %5044 = vmatprep.subr.bf16.mxu0 %v3004
        %5045 = vmatpush2.bf16.msra.mxu0 %v3003
        %5046 = vmatprep.subr.bf16.mxu0 %v3000
        %5047 = vmatpush2.bf16.msra.mxu0 %v2999
        %5048 = vmatprep.subr.bf16.mxu0 %v2996
        %5049 = vmatpush2.bf16.msra.mxu0 %v2995
        %5050 = vmatprep.subr.bf16.mxu0 %v2992
        %5051 = vmatpush2.bf16.msra.mxu0 %v2991
        %5052 = vmatprep.subr.bf16.mxu0 %v2988
        %5053 = vmatpush2.bf16.msra.mxu0 %v2987
        %5054 = vmatprep.subr.bf16.mxu0 %v2984
        %5055 = vmatpush2.bf16.msra.mxu0 %v2983
        %5056 = vmatprep.mubr.bf16.mxu0 %v566
        %5057 = vmatmul.mubr.bf16.gmra.mxu0 %v565
        %v5058 = vpop.f32.mrf.mxu0
        %v5059 = vadd.f32 %v4946, %v5058
        %v5060 = vpop.f32.mrf.mxu0
        %v5061 = vadd.f32 %v4948, %v5060
        %v5062 = vpop.f32.mrf.mxu0
        %v5063 = vadd.f32 %v4950, %v5062
        %v5064 = vpop.f32.mrf.mxu0
        %v5065 = vadd.f32 %v4952, %v5064
        %5066 = vmatprep.mubr.bf16.mxu0 %v582
        %5067 = vmatmul.mubr.bf16.gmra.mxu0 %v581
        %v5068 = vpop.f32.mrf.mxu0
        %v5069 = vadd.f32 %v4956, %v5068
        %v5070 = vpop.f32.mrf.mxu0
        %v5071 = vadd.f32 %v4958, %v5070
        %v5072 = vpop.f32.mrf.mxu0
        %v5073 = vadd.f32 %v4960, %v5072
        %v5074 = vpop.f32.mrf.mxu0
        %v5075 = vadd.f32 %v4962, %v5074
        %5076 = vmatprep.mubr.bf16.mxu0 %v598
        %5077 = vmatmul.mubr.bf16.gmra.mxu0 %v597
        %v5078 = vpop.f32.mrf.mxu0
        %v5079 = vadd.f32 %v4966, %v5078
        %v5080 = vpop.f32.mrf.mxu0
        %v5081 = vadd.f32 %v4968, %v5080
        %v5082 = vpop.f32.mrf.mxu0
        %v5083 = vadd.f32 %v4970, %v5082
        %v5084 = vpop.f32.mrf.mxu0
        %v5085 = vadd.f32 %v4972, %v5084
        %5086 = vmatprep.mubr.bf16.mxu0 %v614
        %5087 = vmatmul.mubr.bf16.gmra.mxu0 %v613
        %v5088 = vpop.f32.mrf.mxu0
        %v5089 = vadd.f32 %v4976, %v5088
        %v5090 = vpop.f32.mrf.mxu0
        %v5091 = vadd.f32 %v4978, %v5090
        %v5092 = vpop.f32.mrf.mxu0
        %v5093 = vadd.f32 %v4980, %v5092
        %v5094 = vpop.f32.mrf.mxu0
        %v5095 = vadd.f32 %v4982, %v5094
        %5096 = vmatprep.mubr.bf16.mxu0 %v630
        %5097 = vmatmul.mubr.bf16.gmra.mxu0 %v629
        %v5098 = vpop.f32.mrf.mxu0
        %v5099 = vadd.f32 %v4986, %v5098
        %v5100 = vpop.f32.mrf.mxu0
        %v5101 = vadd.f32 %v4988, %v5100
        %v5102 = vpop.f32.mrf.mxu0
        %v5103 = vadd.f32 %v4990, %v5102
        %v5104 = vpop.f32.mrf.mxu0
        %v5105 = vadd.f32 %v4992, %v5104
        %5106 = vmatprep.mubr.bf16.mxu0 %v646
        %5107 = vmatmul.mubr.bf16.gmra.mxu0 %v645
        %v5108 = vpop.f32.mrf.mxu0
        %v5109 = vadd.f32 %v4996, %v5108
        %v5110 = vpop.f32.mrf.mxu0
        %v5111 = vadd.f32 %v4998, %v5110
        %v5112 = vpop.f32.mrf.mxu0
        %v5113 = vadd.f32 %v5000, %v5112
        %v5114 = vpop.f32.mrf.mxu0
        %v5115 = vadd.f32 %v5002, %v5114
        %5116 = vmatprep.mubr.bf16.mxu0 %v662
        %5117 = vmatmul.mubr.bf16.gmra.mxu0 %v661
        %v5118 = vpop.f32.mrf.mxu0
        %v5119 = vadd.f32 %v5006, %v5118
        %v5120 = vpop.f32.mrf.mxu0
        %v5121 = vadd.f32 %v5008, %v5120
        %v5122 = vpop.f32.mrf.mxu0
        %v5123 = vadd.f32 %v5010, %v5122
        %v5124 = vpop.f32.mrf.mxu0
        %v5125 = vadd.f32 %v5012, %v5124
        %5126 = vmatprep.mubr.bf16.mxu0 %v678
        %5127 = vmatmul.mubr.bf16.gmra.mxu0 %v677
        %v5128 = vpop.f32.mrf.mxu0
        %v5129 = vadd.f32 %v5016, %v5128
        %v5130 = vpop.f32.mrf.mxu0
        %v5131 = vadd.f32 %v5018, %v5130
        %v5132 = vpop.f32.mrf.mxu0
        %v5133 = vadd.f32 %v5020, %v5132
        %v5134 = vpop.f32.mrf.mxu0
        %v5135 = vadd.f32 %v5022, %v5134
        %5136 = vdwg.mxu0
        %5137 = vmatprep.subr.bf16.mxu0 %v3044
        %5138 = vmatpush1.bf16.msra.mxu0 %v3043
        %5139 = vmatprep.subr.bf16.mxu0 %v3040
        %5140 = vmatpush1.bf16.msra.mxu0 %v3039
        %5141 = vmatprep.subr.bf16.mxu0 %v3036
        %5142 = vmatpush1.bf16.msra.mxu0 %v3035
        %5143 = vmatprep.subr.bf16.mxu0 %v3032
        %5144 = vmatpush1.bf16.msra.mxu0 %v3031
        %5145 = vmatprep.subr.bf16.mxu0 %v3028
        %5146 = vmatpush1.bf16.msra.mxu0 %v3027
        %5147 = vmatprep.subr.bf16.mxu0 %v3024
        %5148 = vmatpush1.bf16.msra.mxu0 %v3023
        %5149 = vmatprep.subr.bf16.mxu0 %v3020
        %5150 = vmatpush1.bf16.msra.mxu0 %v3019
        %5151 = vmatprep.subr.bf16.mxu0 %v3016
        %5152 = vmatpush1.bf16.msra.mxu0 %v3015
        %5153 = vmatprep.subr.bf16.mxu0 %v3076
        %5154 = vmatpush2.bf16.msra.mxu0 %v3075
        %5155 = vmatprep.subr.bf16.mxu0 %v3072
        %5156 = vmatpush2.bf16.msra.mxu0 %v3071
        %5157 = vmatprep.subr.bf16.mxu0 %v3068
        %5158 = vmatpush2.bf16.msra.mxu0 %v3067
        %5159 = vmatprep.subr.bf16.mxu0 %v3064
        %5160 = vmatpush2.bf16.msra.mxu0 %v3063
        %5161 = vmatprep.subr.bf16.mxu0 %v3060
        %5162 = vmatpush2.bf16.msra.mxu0 %v3059
        %5163 = vmatprep.subr.bf16.mxu0 %v3056
        %5164 = vmatpush2.bf16.msra.mxu0 %v3055
        %5165 = vmatprep.subr.bf16.mxu0 %v3052
        %5166 = vmatpush2.bf16.msra.mxu0 %v3051
        %5167 = vmatprep.subr.bf16.mxu0 %v3048
        %5168 = vmatpush2.bf16.msra.mxu0 %v3047
        %5169 = vmatprep.mubr.bf16.mxu0 %v568
        %5170 = vmatmul.mubr.bf16.gmra.mxu0 %v567
        %v5171 = vpop.f32.mrf.mxu0
        %v5172 = vadd.f32 %v5059, %v5171
        %v5173 = vpop.f32.mrf.mxu0
        %v5174 = vadd.f32 %v5061, %v5173
        %v5175 = vpop.f32.mrf.mxu0
        %v5176 = vadd.f32 %v5063, %v5175
        %v5177 = vpop.f32.mrf.mxu0
        %v5178 = vadd.f32 %v5065, %v5177
        %5179 = vmatprep.mubr.bf16.mxu0 %v584
        %5180 = vmatmul.mubr.bf16.gmra.mxu0 %v583
        %v5181 = vpop.f32.mrf.mxu0
        %v5182 = vadd.f32 %v5069, %v5181
        %v5183 = vpop.f32.mrf.mxu0
        %v5184 = vadd.f32 %v5071, %v5183
        %v5185 = vpop.f32.mrf.mxu0
        %v5186 = vadd.f32 %v5073, %v5185
        %v5187 = vpop.f32.mrf.mxu0
        %v5188 = vadd.f32 %v5075, %v5187
        %5189 = vmatprep.mubr.bf16.mxu0 %v600
        %5190 = vmatmul.mubr.bf16.gmra.mxu0 %v599
        %v5191 = vpop.f32.mrf.mxu0
        %v5192 = vadd.f32 %v5079, %v5191
        %v5193 = vpop.f32.mrf.mxu0
        %v5194 = vadd.f32 %v5081, %v5193
        %v5195 = vpop.f32.mrf.mxu0
        %v5196 = vadd.f32 %v5083, %v5195
        %v5197 = vpop.f32.mrf.mxu0
        %v5198 = vadd.f32 %v5085, %v5197
        %5199 = vmatprep.mubr.bf16.mxu0 %v616
        %5200 = vmatmul.mubr.bf16.gmra.mxu0 %v615
        %v5201 = vpop.f32.mrf.mxu0
        %v5202 = vadd.f32 %v5089, %v5201
        %v5203 = vpop.f32.mrf.mxu0
        %v5204 = vadd.f32 %v5091, %v5203
        %v5205 = vpop.f32.mrf.mxu0
        %v5206 = vadd.f32 %v5093, %v5205
        %v5207 = vpop.f32.mrf.mxu0
        %v5208 = vadd.f32 %v5095, %v5207
        %5209 = vmatprep.mubr.bf16.mxu0 %v632
        %5210 = vmatmul.mubr.bf16.gmra.mxu0 %v631
        %v5211 = vpop.f32.mrf.mxu0
        %v5212 = vadd.f32 %v5099, %v5211
        %v5213 = vpop.f32.mrf.mxu0
        %v5214 = vadd.f32 %v5101, %v5213
        %v5215 = vpop.f32.mrf.mxu0
        %v5216 = vadd.f32 %v5103, %v5215
        %v5217 = vpop.f32.mrf.mxu0
        %v5218 = vadd.f32 %v5105, %v5217
        %5219 = vmatprep.mubr.bf16.mxu0 %v648
        %5220 = vmatmul.mubr.bf16.gmra.mxu0 %v647
        %v5221 = vpop.f32.mrf.mxu0
        %v5222 = vadd.f32 %v5109, %v5221
        %v5223 = vpop.f32.mrf.mxu0
        %v5224 = vadd.f32 %v5111, %v5223
        %v5225 = vpop.f32.mrf.mxu0
        %v5226 = vadd.f32 %v5113, %v5225
        %v5227 = vpop.f32.mrf.mxu0
        %v5228 = vadd.f32 %v5115, %v5227
        %5229 = vmatprep.mubr.bf16.mxu0 %v664
        %5230 = vmatmul.mubr.bf16.gmra.mxu0 %v663
        %v5231 = vpop.f32.mrf.mxu0
        %v5232 = vadd.f32 %v5119, %v5231
        %v5233 = vpop.f32.mrf.mxu0
        %v5234 = vadd.f32 %v5121, %v5233
        %v5235 = vpop.f32.mrf.mxu0
        %v5236 = vadd.f32 %v5123, %v5235
        %v5237 = vpop.f32.mrf.mxu0
        %v5238 = vadd.f32 %v5125, %v5237
        %5239 = vmatprep.mubr.bf16.mxu0 %v680
        %5240 = vmatmul.mubr.bf16.gmra.mxu0 %v679
        %v5241 = vpop.f32.mrf.mxu0
        %v5242 = vadd.f32 %v5129, %v5241
        %v5243 = vpop.f32.mrf.mxu0
        %v5244 = vadd.f32 %v5131, %v5243
        %v5245 = vpop.f32.mrf.mxu0
        %v5246 = vadd.f32 %v5133, %v5245
        %v5247 = vpop.f32.mrf.mxu0
        %v5248 = vadd.f32 %v5135, %v5247
        %5249 = vdwg.mxu0
        %5250 = vmatprep.subr.bf16.mxu0 %v3108
        %5251 = vmatpush1.bf16.msra.mxu0 %v3107
        %5252 = vmatprep.subr.bf16.mxu0 %v3104
        %5253 = vmatpush1.bf16.msra.mxu0 %v3103
        %5254 = vmatprep.subr.bf16.mxu0 %v3100
        %5255 = vmatpush1.bf16.msra.mxu0 %v3099
        %5256 = vmatprep.subr.bf16.mxu0 %v3096
        %5257 = vmatpush1.bf16.msra.mxu0 %v3095
        %5258 = vmatprep.subr.bf16.mxu0 %v3092
        %5259 = vmatpush1.bf16.msra.mxu0 %v3091
        %5260 = vmatprep.subr.bf16.mxu0 %v3088
        %5261 = vmatpush1.bf16.msra.mxu0 %v3087
        %5262 = vmatprep.subr.bf16.mxu0 %v3084
        %5263 = vmatpush1.bf16.msra.mxu0 %v3083
        %5264 = vmatprep.subr.bf16.mxu0 %v3080
        %5265 = vmatpush1.bf16.msra.mxu0 %v3079
        %5266 = vmatprep.subr.bf16.mxu0 %v3140
        %5267 = vmatpush2.bf16.msra.mxu0 %v3139
        %5268 = vmatprep.subr.bf16.mxu0 %v3136
        %5269 = vmatpush2.bf16.msra.mxu0 %v3135
        %5270 = vmatprep.subr.bf16.mxu0 %v3132
        %5271 = vmatpush2.bf16.msra.mxu0 %v3131
        %5272 = vmatprep.subr.bf16.mxu0 %v3128
        %5273 = vmatpush2.bf16.msra.mxu0 %v3127
        %5274 = vmatprep.subr.bf16.mxu0 %v3124
        %5275 = vmatpush2.bf16.msra.mxu0 %v3123
        %5276 = vmatprep.subr.bf16.mxu0 %v3120
        %5277 = vmatpush2.bf16.msra.mxu0 %v3119
        %5278 = vmatprep.subr.bf16.mxu0 %v3116
        %5279 = vmatpush2.bf16.msra.mxu0 %v3115
        %5280 = vmatprep.subr.bf16.mxu0 %v3112
        %5281 = vmatpush2.bf16.msra.mxu0 %v3111
        %5282 = vmatprep.mubr.bf16.mxu0 %v570
        %5283 = vmatmul.mubr.bf16.gmra.mxu0 %v569
        %v5284 = vpop.f32.mrf.mxu0
        %v5285 = vadd.f32 %v5172, %v5284
        %v5286 = vpop.f32.mrf.mxu0
        %v5287 = vadd.f32 %v5174, %v5286
        %v5288 = vpop.f32.mrf.mxu0
        %v5289 = vadd.f32 %v5176, %v5288
        %v5290 = vpop.f32.mrf.mxu0
        %v5291 = vadd.f32 %v5178, %v5290
        %5292 = vmatprep.mubr.bf16.mxu0 %v586
        %5293 = vmatmul.mubr.bf16.gmra.mxu0 %v585
        %v5294 = vpop.f32.mrf.mxu0
        %v5295 = vadd.f32 %v5182, %v5294
        %v5296 = vpop.f32.mrf.mxu0
        %v5297 = vadd.f32 %v5184, %v5296
        %v5298 = vpop.f32.mrf.mxu0
        %v5299 = vadd.f32 %v5186, %v5298
        %v5300 = vpop.f32.mrf.mxu0
        %v5301 = vadd.f32 %v5188, %v5300
        %5302 = vmatprep.mubr.bf16.mxu0 %v602
        %5303 = vmatmul.mubr.bf16.gmra.mxu0 %v601
        %v5304 = vpop.f32.mrf.mxu0
        %v5305 = vadd.f32 %v5192, %v5304
        %v5306 = vpop.f32.mrf.mxu0
        %v5307 = vadd.f32 %v5194, %v5306
        %v5308 = vpop.f32.mrf.mxu0
        %v5309 = vadd.f32 %v5196, %v5308
        %v5310 = vpop.f32.mrf.mxu0
        %v5311 = vadd.f32 %v5198, %v5310
        %5312 = vmatprep.mubr.bf16.mxu0 %v618
        %5313 = vmatmul.mubr.bf16.gmra.mxu0 %v617
        %v5314 = vpop.f32.mrf.mxu0
        %v5315 = vadd.f32 %v5202, %v5314
        %v5316 = vpop.f32.mrf.mxu0
        %v5317 = vadd.f32 %v5204, %v5316
        %v5318 = vpop.f32.mrf.mxu0
        %v5319 = vadd.f32 %v5206, %v5318
        %v5320 = vpop.f32.mrf.mxu0
        %v5321 = vadd.f32 %v5208, %v5320
        %5322 = vmatprep.mubr.bf16.mxu0 %v634
        %5323 = vmatmul.mubr.bf16.gmra.mxu0 %v633
        %v5324 = vpop.f32.mrf.mxu0
        %v5325 = vadd.f32 %v5212, %v5324
        %v5326 = vpop.f32.mrf.mxu0
        %v5327 = vadd.f32 %v5214, %v5326
        %v5328 = vpop.f32.mrf.mxu0
        %v5329 = vadd.f32 %v5216, %v5328
        %v5330 = vpop.f32.mrf.mxu0
        %v5331 = vadd.f32 %v5218, %v5330
        %5332 = vmatprep.mubr.bf16.mxu0 %v650
        %5333 = vmatmul.mubr.bf16.gmra.mxu0 %v649
        %v5334 = vpop.f32.mrf.mxu0
        %v5335 = vadd.f32 %v5222, %v5334
        %v5336 = vpop.f32.mrf.mxu0
        %v5337 = vadd.f32 %v5224, %v5336
        %v5338 = vpop.f32.mrf.mxu0
        %v5339 = vadd.f32 %v5226, %v5338
        %v5340 = vpop.f32.mrf.mxu0
        %v5341 = vadd.f32 %v5228, %v5340
        %5342 = vmatprep.mubr.bf16.mxu0 %v666
        %5343 = vmatmul.mubr.bf16.gmra.mxu0 %v665
        %v5344 = vpop.f32.mrf.mxu0
        %v5345 = vadd.f32 %v5232, %v5344
        %v5346 = vpop.f32.mrf.mxu0
        %v5347 = vadd.f32 %v5234, %v5346
        %v5348 = vpop.f32.mrf.mxu0
        %v5349 = vadd.f32 %v5236, %v5348
        %v5350 = vpop.f32.mrf.mxu0
        %v5351 = vadd.f32 %v5238, %v5350
        %5352 = vmatprep.mubr.bf16.mxu0 %v682
        %5353 = vmatmul.mubr.bf16.gmra.mxu0 %v681
        %v5354 = vpop.f32.mrf.mxu0
        %v5355 = vadd.f32 %v5242, %v5354
        %v5356 = vpop.f32.mrf.mxu0
        %v5357 = vadd.f32 %v5244, %v5356
        %v5358 = vpop.f32.mrf.mxu0
        %v5359 = vadd.f32 %v5246, %v5358
        %v5360 = vpop.f32.mrf.mxu0
        %v5361 = vadd.f32 %v5248, %v5360
        %5362 = vdwg.mxu0
        %5363 = vmatprep.subr.bf16.mxu0 %v3172
        %5364 = vmatpush1.bf16.msra.mxu0 %v3171
        %5365 = vmatprep.subr.bf16.mxu0 %v3168
        %5366 = vmatpush1.bf16.msra.mxu0 %v3167
        %5367 = vmatprep.subr.bf16.mxu0 %v3164
        %5368 = vmatpush1.bf16.msra.mxu0 %v3163
        %5369 = vmatprep.subr.bf16.mxu0 %v3160
        %5370 = vmatpush1.bf16.msra.mxu0 %v3159
        %5371 = vmatprep.subr.bf16.mxu0 %v3156
        %5372 = vmatpush1.bf16.msra.mxu0 %v3155
        %5373 = vmatprep.subr.bf16.mxu0 %v3152
        %5374 = vmatpush1.bf16.msra.mxu0 %v3151
        %5375 = vmatprep.subr.bf16.mxu0 %v3148
        %5376 = vmatpush1.bf16.msra.mxu0 %v3147
        %5377 = vmatprep.subr.bf16.mxu0 %v3144
        %5378 = vmatpush1.bf16.msra.mxu0 %v3143
        %5379 = vmatprep.subr.bf16.mxu0 %v3204
        %5380 = vmatpush2.bf16.msra.mxu0 %v3203
        %5381 = vmatprep.subr.bf16.mxu0 %v3200
        %5382 = vmatpush2.bf16.msra.mxu0 %v3199
        %5383 = vmatprep.subr.bf16.mxu0 %v3196
        %5384 = vmatpush2.bf16.msra.mxu0 %v3195
        %5385 = vmatprep.subr.bf16.mxu0 %v3192
        %5386 = vmatpush2.bf16.msra.mxu0 %v3191
        %5387 = vmatprep.subr.bf16.mxu0 %v3188
        %5388 = vmatpush2.bf16.msra.mxu0 %v3187
        %5389 = vmatprep.subr.bf16.mxu0 %v3184
        %5390 = vmatpush2.bf16.msra.mxu0 %v3183
        %5391 = vmatprep.subr.bf16.mxu0 %v3180
        %5392 = vmatpush2.bf16.msra.mxu0 %v3179
        %5393 = vmatprep.subr.bf16.mxu0 %v3176
        %5394 = vmatpush2.bf16.msra.mxu0 %v3175
        %5395 = vmatprep.mubr.bf16.mxu0 %v572
        %5396 = vmatmul.mubr.bf16.gmra.mxu0 %v571
        %v5397 = vpop.f32.mrf.mxu0
        %v5398 = vadd.f32 %v5285, %v5397
        %v5399 = vpop.f32.mrf.mxu0
        %v5400 = vadd.f32 %v5287, %v5399
        %v5401 = vpop.f32.mrf.mxu0
        %v5402 = vadd.f32 %v5289, %v5401
        %v5403 = vpop.f32.mrf.mxu0
        %v5404 = vadd.f32 %v5291, %v5403
        %5405 = vmatprep.mubr.bf16.mxu0 %v588
        %5406 = vmatmul.mubr.bf16.gmra.mxu0 %v587
        %v5407 = vpop.f32.mrf.mxu0
        %v5408 = vadd.f32 %v5295, %v5407
        %v5409 = vpop.f32.mrf.mxu0
        %v5410 = vadd.f32 %v5297, %v5409
        %v5411 = vpop.f32.mrf.mxu0
        %v5412 = vadd.f32 %v5299, %v5411
        %v5413 = vpop.f32.mrf.mxu0
        %v5414 = vadd.f32 %v5301, %v5413
        %5415 = vmatprep.mubr.bf16.mxu0 %v604
        %5416 = vmatmul.mubr.bf16.gmra.mxu0 %v603
        %v5417 = vpop.f32.mrf.mxu0
        %v5418 = vadd.f32 %v5305, %v5417
        %v5419 = vpop.f32.mrf.mxu0
        %v5420 = vadd.f32 %v5307, %v5419
        %v5421 = vpop.f32.mrf.mxu0
        %v5422 = vadd.f32 %v5309, %v5421
        %v5423 = vpop.f32.mrf.mxu0
        %v5424 = vadd.f32 %v5311, %v5423
        %5425 = vmatprep.mubr.bf16.mxu0 %v620
        %5426 = vmatmul.mubr.bf16.gmra.mxu0 %v619
        %v5427 = vpop.f32.mrf.mxu0
        %v5428 = vadd.f32 %v5315, %v5427
        %v5429 = vpop.f32.mrf.mxu0
        %v5430 = vadd.f32 %v5317, %v5429
        %v5431 = vpop.f32.mrf.mxu0
        %v5432 = vadd.f32 %v5319, %v5431
        %v5433 = vpop.f32.mrf.mxu0
        %v5434 = vadd.f32 %v5321, %v5433
        %5435 = vmatprep.mubr.bf16.mxu0 %v636
        %5436 = vmatmul.mubr.bf16.gmra.mxu0 %v635
        %v5437 = vpop.f32.mrf.mxu0
        %v5438 = vadd.f32 %v5325, %v5437
        %v5439 = vpop.f32.mrf.mxu0
        %v5440 = vadd.f32 %v5327, %v5439
        %v5441 = vpop.f32.mrf.mxu0
        %v5442 = vadd.f32 %v5329, %v5441
        %v5443 = vpop.f32.mrf.mxu0
        %v5444 = vadd.f32 %v5331, %v5443
        %5445 = vmatprep.mubr.bf16.mxu0 %v652
        %5446 = vmatmul.mubr.bf16.gmra.mxu0 %v651
        %v5447 = vpop.f32.mrf.mxu0
        %v5448 = vadd.f32 %v5335, %v5447
        %v5449 = vpop.f32.mrf.mxu0
        %v5450 = vadd.f32 %v5337, %v5449
        %v5451 = vpop.f32.mrf.mxu0
        %v5452 = vadd.f32 %v5339, %v5451
        %v5453 = vpop.f32.mrf.mxu0
        %v5454 = vadd.f32 %v5341, %v5453
        %5455 = vmatprep.mubr.bf16.mxu0 %v668
        %5456 = vmatmul.mubr.bf16.gmra.mxu0 %v667
        %v5457 = vpop.f32.mrf.mxu0
        %v5458 = vadd.f32 %v5345, %v5457
        %v5459 = vpop.f32.mrf.mxu0
        %v5460 = vadd.f32 %v5347, %v5459
        %v5461 = vpop.f32.mrf.mxu0
        %v5462 = vadd.f32 %v5349, %v5461
        %v5463 = vpop.f32.mrf.mxu0
        %v5464 = vadd.f32 %v5351, %v5463
        %5465 = vmatprep.mubr.bf16.mxu0 %v684
        %5466 = vmatmul.mubr.bf16.gmra.mxu0 %v683
        %v5467 = vpop.f32.mrf.mxu0
        %v5468 = vadd.f32 %v5355, %v5467
        %v5469 = vpop.f32.mrf.mxu0
        %v5470 = vadd.f32 %v5357, %v5469
        %v5471 = vpop.f32.mrf.mxu0
        %v5472 = vadd.f32 %v5359, %v5471
        %v5473 = vpop.f32.mrf.mxu0
        %v5474 = vadd.f32 %v5361, %v5473
        %5475 = vdwg.mxu0
        %5476 = vmatprep.subr.bf16.mxu0 %v3236
        %5477 = vmatpush1.bf16.msra.mxu0 %v3235
        %5478 = vmatprep.subr.bf16.mxu0 %v3232
        %5479 = vmatpush1.bf16.msra.mxu0 %v3231
        %5480 = vmatprep.subr.bf16.mxu0 %v3228
        %5481 = vmatpush1.bf16.msra.mxu0 %v3227
        %5482 = vmatprep.subr.bf16.mxu0 %v3224
        %5483 = vmatpush1.bf16.msra.mxu0 %v3223
        %5484 = vmatprep.subr.bf16.mxu0 %v3220
        %5485 = vmatpush1.bf16.msra.mxu0 %v3219
        %5486 = vmatprep.subr.bf16.mxu0 %v3216
        %5487 = vmatpush1.bf16.msra.mxu0 %v3215
        %5488 = vmatprep.subr.bf16.mxu0 %v3212
        %5489 = vmatpush1.bf16.msra.mxu0 %v3211
        %5490 = vmatprep.subr.bf16.mxu0 %v3208
        %5491 = vmatpush1.bf16.msra.mxu0 %v3207
        %5492 = vmatprep.subr.bf16.mxu0 %v3268
        %5493 = vmatpush2.bf16.msra.mxu0 %v3267
        %5494 = vmatprep.subr.bf16.mxu0 %v3264
        %5495 = vmatpush2.bf16.msra.mxu0 %v3263
        %5496 = vmatprep.subr.bf16.mxu0 %v3260
        %5497 = vmatpush2.bf16.msra.mxu0 %v3259
        %5498 = vmatprep.subr.bf16.mxu0 %v3256
        %5499 = vmatpush2.bf16.msra.mxu0 %v3255
        %5500 = vmatprep.subr.bf16.mxu0 %v3252
        %5501 = vmatpush2.bf16.msra.mxu0 %v3251
        %5502 = vmatprep.subr.bf16.mxu0 %v3248
        %5503 = vmatpush2.bf16.msra.mxu0 %v3247
        %5504 = vmatprep.subr.bf16.mxu0 %v3244
        %5505 = vmatpush2.bf16.msra.mxu0 %v3243
        %5506 = vmatprep.subr.bf16.mxu0 %v3240
        %5507 = vmatpush2.bf16.msra.mxu0 %v3239
        %5508 = vmatprep.mubr.bf16.mxu0 %v574
        %5509 = vmatmul.mubr.bf16.gmra.mxu0 %v573
        %v5510 = vpop.f32.mrf.mxu0
        %v5511 = vadd.f32 %v5398, %v5510
        %v5512 = vpop.f32.mrf.mxu0
        %v5513 = vadd.f32 %v5400, %v5512
        %v5514 = vpop.f32.mrf.mxu0
        %v5515 = vadd.f32 %v5402, %v5514
        %v5516 = vpop.f32.mrf.mxu0
        %v5517 = vadd.f32 %v5404, %v5516
        %5518 = vmatprep.mubr.bf16.mxu0 %v590
        %5519 = vmatmul.mubr.bf16.gmra.mxu0 %v589
        %v5520 = vpop.f32.mrf.mxu0
        %v5521 = vadd.f32 %v5408, %v5520
        %v5522 = vpop.f32.mrf.mxu0
        %v5523 = vadd.f32 %v5410, %v5522
        %v5524 = vpop.f32.mrf.mxu0
        %v5525 = vadd.f32 %v5412, %v5524
        %v5526 = vpop.f32.mrf.mxu0
        %v5527 = vadd.f32 %v5414, %v5526
        %5528 = vmatprep.mubr.bf16.mxu0 %v606
        %5529 = vmatmul.mubr.bf16.gmra.mxu0 %v605
        %v5530 = vpop.f32.mrf.mxu0
        %v5531 = vadd.f32 %v5418, %v5530
        %v5532 = vpop.f32.mrf.mxu0
        %v5533 = vadd.f32 %v5420, %v5532
        %v5534 = vpop.f32.mrf.mxu0
        %v5535 = vadd.f32 %v5422, %v5534
        %v5536 = vpop.f32.mrf.mxu0
        %v5537 = vadd.f32 %v5424, %v5536
        %5538 = vmatprep.mubr.bf16.mxu0 %v622
        %5539 = vmatmul.mubr.bf16.gmra.mxu0 %v621
        %v5540 = vpop.f32.mrf.mxu0
        %v5541 = vadd.f32 %v5428, %v5540
        %v5542 = vpop.f32.mrf.mxu0
        %v5543 = vadd.f32 %v5430, %v5542
        %v5544 = vpop.f32.mrf.mxu0
        %v5545 = vadd.f32 %v5432, %v5544
        %v5546 = vpop.f32.mrf.mxu0
        %v5547 = vadd.f32 %v5434, %v5546
        %5548 = vmatprep.mubr.bf16.mxu0 %v638
        %5549 = vmatmul.mubr.bf16.gmra.mxu0 %v637
        %v5550 = vpop.f32.mrf.mxu0
        %v5551 = vadd.f32 %v5438, %v5550
        %v5552 = vpop.f32.mrf.mxu0
        %v5553 = vadd.f32 %v5440, %v5552
        %v5554 = vpop.f32.mrf.mxu0
        %v5555 = vadd.f32 %v5442, %v5554
        %v5556 = vpop.f32.mrf.mxu0
        %v5557 = vadd.f32 %v5444, %v5556
        %5558 = vmatprep.mubr.bf16.mxu0 %v654
        %5559 = vmatmul.mubr.bf16.gmra.mxu0 %v653
        %v5560 = vpop.f32.mrf.mxu0
        %v5561 = vadd.f32 %v5448, %v5560
        %v5562 = vpop.f32.mrf.mxu0
        %v5563 = vadd.f32 %v5450, %v5562
        %v5564 = vpop.f32.mrf.mxu0
        %v5565 = vadd.f32 %v5452, %v5564
        %v5566 = vpop.f32.mrf.mxu0
        %v5567 = vadd.f32 %v5454, %v5566
        %5568 = vmatprep.mubr.bf16.mxu0 %v670
        %5569 = vmatmul.mubr.bf16.gmra.mxu0 %v669
        %v5570 = vpop.f32.mrf.mxu0
        %v5571 = vadd.f32 %v5458, %v5570
        %v5572 = vpop.f32.mrf.mxu0
        %v5573 = vadd.f32 %v5460, %v5572
        %v5574 = vpop.f32.mrf.mxu0
        %v5575 = vadd.f32 %v5462, %v5574
        %v5576 = vpop.f32.mrf.mxu0
        %v5577 = vadd.f32 %v5464, %v5576
        %5578 = vmatprep.mubr.bf16.mxu0 %v686
        %5579 = vmatmul.mubr.bf16.gmra.mxu0 %v685
        %v5580 = vpop.f32.mrf.mxu0
        %v5581 = vadd.f32 %v5468, %v5580
        %v5582 = vpop.f32.mrf.mxu0
        %v5583 = vadd.f32 %v5470, %v5582
        %v5584 = vpop.f32.mrf.mxu0
        %v5585 = vadd.f32 %v5472, %v5584
        %v5586 = vpop.f32.mrf.mxu0
        %v5587 = vadd.f32 %v5474, %v5586
        %5588 = vdwg.mxu0
        %v5589 = vmax.f32 %v4607, 0.0
        %v5590 = vmax.f32 %v4609, 0.0
        %v5591 = vmax.f32 %v5511, 0.0
        %v5592 = vmax.f32 %v5513, 0.0
        %v5593 = vmax.f32 %v4611, 0.0
        %v5594 = vmax.f32 %v4613, 0.0
        %v5595 = vmax.f32 %v5515, 0.0
        %v5596 = vmax.f32 %v5517, 0.0
        %v5597 = vmax.f32 %v4617, 0.0
        %v5598 = vmax.f32 %v4619, 0.0
        %v5599 = vmax.f32 %v5521, 0.0
        %v5600 = vmax.f32 %v5523, 0.0
        %v5601 = vmax.f32 %v4621, 0.0
        %v5602 = vmax.f32 %v4623, 0.0
        %v5603 = vmax.f32 %v5525, 0.0
        %v5604 = vmax.f32 %v5527, 0.0
        %v5605 = vmax.f32 %v4627, 0.0
        %v5606 = vmax.f32 %v4629, 0.0
        %v5607 = vmax.f32 %v5531, 0.0
        %v5608 = vmax.f32 %v5533, 0.0
        %v5609 = vmax.f32 %v4631, 0.0
        %v5610 = vmax.f32 %v4633, 0.0
        %v5611 = vmax.f32 %v5535, 0.0
        %v5612 = vmax.f32 %v5537, 0.0
        %v5613 = vmax.f32 %v4637, 0.0
        %v5614 = vmax.f32 %v4639, 0.0
        %v5615 = vmax.f32 %v5541, 0.0
        %v5616 = vmax.f32 %v5543, 0.0
        %v5617 = vmax.f32 %v4641, 0.0
        %v5618 = vmax.f32 %v4643, 0.0
        %v5619 = vmax.f32 %v5545, 0.0
        %v5620 = vmax.f32 %v5547, 0.0
        %v5621 = vmax.f32 %v4647, 0.0
        %v5622 = vmax.f32 %v4649, 0.0
        %v5623 = vmax.f32 %v5551, 0.0
        %v5624 = vmax.f32 %v5553, 0.0
        %v5625 = vmax.f32 %v4651, 0.0
        %v5626 = vmax.f32 %v4653, 0.0
        %v5627 = vmax.f32 %v5555, 0.0
        %v5628 = vmax.f32 %v5557, 0.0
        %v5629 = vmax.f32 %v4657, 0.0
        %v5630 = vmax.f32 %v4659, 0.0
        %v5631 = vmax.f32 %v5561, 0.0
        %v5632 = vmax.f32 %v5563, 0.0
        %v5633 = vmax.f32 %v4661, 0.0
        %v5634 = vmax.f32 %v4663, 0.0
        %v5635 = vmax.f32 %v5565, 0.0
        %v5636 = vmax.f32 %v5567, 0.0
        %v5637 = vmax.f32 %v4667, 0.0
        %v5638 = vmax.f32 %v4669, 0.0
        %v5639 = vmax.f32 %v5571, 0.0
        %v5640 = vmax.f32 %v5573, 0.0
        %v5641 = vmax.f32 %v4671, 0.0
        %v5642 = vmax.f32 %v4673, 0.0
        %v5643 = vmax.f32 %v5575, 0.0
        %v5644 = vmax.f32 %v5577, 0.0
        %v5645 = vmax.f32 %v4677, 0.0
        %v5646 = vmax.f32 %v4679, 0.0
        %v5647 = vmax.f32 %v5581, 0.0
        %v5648 = vmax.f32 %v5583, 0.0
        %v5649 = vmax.f32 %v4681, 0.0
        %v5650 = vmax.f32 %v4683, 0.0
        %v5651 = vmax.f32 %v5585, 0.0
        %v5652 = vmax.f32 %v5587, 0.0
        %v5653 = vpack.c.bf16 %v5593, %v5589
        %v5654 = vpack.c.bf16 %v5594, %v5590
        %v5655 = vpack.c.bf16 %v5595, %v5591
        %v5656 = vpack.c.bf16 %v5596, %v5592
        %v5657 = vpack.c.bf16 %v5601, %v5597
        %v5658 = vpack.c.bf16 %v5602, %v5598
        %v5659 = vpack.c.bf16 %v5603, %v5599
        %v5660 = vpack.c.bf16 %v5604, %v5600
        %v5661 = vpack.c.bf16 %v5609, %v5605
        %v5662 = vpack.c.bf16 %v5610, %v5606
        %v5663 = vpack.c.bf16 %v5611, %v5607
        %v5664 = vpack.c.bf16 %v5612, %v5608
        %v5665 = vpack.c.bf16 %v5617, %v5613
        %v5666 = vpack.c.bf16 %v5618, %v5614
        %v5667 = vpack.c.bf16 %v5619, %v5615
        %v5668 = vpack.c.bf16 %v5620, %v5616
        %v5669 = vpack.c.bf16 %v5625, %v5621
        %v5670 = vpack.c.bf16 %v5626, %v5622
        %v5671 = vpack.c.bf16 %v5627, %v5623
        %v5672 = vpack.c.bf16 %v5628, %v5624
        %v5673 = vpack.c.bf16 %v5633, %v5629
        %v5674 = vpack.c.bf16 %v5634, %v5630
        %v5675 = vpack.c.bf16 %v5635, %v5631
        %v5676 = vpack.c.bf16 %v5636, %v5632
        %v5677 = vpack.c.bf16 %v5641, %v5637
        %v5678 = vpack.c.bf16 %v5642, %v5638
        %v5679 = vpack.c.bf16 %v5643, %v5639
        %v5680 = vpack.c.bf16 %v5644, %v5640
        %v5681 = vpack.c.bf16 %v5649, %v5645
        %v5682 = vpack.c.bf16 %v5650, %v5646
        %v5683 = vpack.c.bf16 %v5651, %v5647
        %v5684 = vpack.c.bf16 %v5652, %v5648
        %v5685 = vld [vmem:[#allocation7] sm:$0xf]
        %v5686 = vld [vmem:[#allocation7 + $0x4] sm:$0xf]
        %v5687 = vld [vmem:[#allocation7 + $0x8] sm:$0xf]
        %v5688 = vld [vmem:[#allocation7 + $0xc] sm:$0xf]
        %v5689 = vld [vmem:[#allocation7 + $0x10] sm:$0xf]
        %v5690 = vld [vmem:[#allocation7 + $0x14] sm:$0xf]
        %v5691 = vld [vmem:[#allocation7 + $0x18] sm:$0xf]
        %v5692 = vld [vmem:[#allocation7 + $0x1c] sm:$0xf]
        %v5693 = vld [vmem:[#allocation7 + $0x20] sm:$0xf]
        %v5694 = vld [vmem:[#allocation7 + $0x24] sm:$0xf]
        %v5695 = vld [vmem:[#allocation7 + $0x28] sm:$0xf]
        %v5696 = vld [vmem:[#allocation7 + $0x2c] sm:$0xf]
        %v5697 = vld [vmem:[#allocation7 + $0x30] sm:$0xf]
        %v5698 = vld [vmem:[#allocation7 + $0x34] sm:$0xf]
        %v5699 = vld [vmem:[#allocation7 + $0x38] sm:$0xf]
        %v5700 = vld [vmem:[#allocation7 + $0x3c] sm:$0xf]
        %v5701 = vld [vmem:[#allocation7 + $0x40] sm:$0xf]
        %v5702 = vld [vmem:[#allocation7 + $0x44] sm:$0xf]
        %v5703 = vld [vmem:[#allocation7 + $0x48] sm:$0xf]
        %v5704 = vld [vmem:[#allocation7 + $0x4c] sm:$0xf]
        %v5705 = vld [vmem:[#allocation7 + $0x50] sm:$0xf]
        %v5706 = vld [vmem:[#allocation7 + $0x54] sm:$0xf]
        %v5707 = vld [vmem:[#allocation7 + $0x58] sm:$0xf]
        %v5708 = vld [vmem:[#allocation7 + $0x5c] sm:$0xf]
        %v5709 = vld [vmem:[#allocation7 + $0x60] sm:$0xf]
        %v5710 = vld [vmem:[#allocation7 + $0x64] sm:$0xf]
        %v5711 = vld [vmem:[#allocation7 + $0x68] sm:$0xf]
        %v5712 = vld [vmem:[#allocation7 + $0x6c] sm:$0xf]
        %v5713 = vld [vmem:[#allocation7 + $0x70] sm:$0xf]
        %v5714 = vld [vmem:[#allocation7 + $0x74] sm:$0xf]
        %v5715 = vld [vmem:[#allocation7 + $0x78] sm:$0xf]
        %v5716 = vld [vmem:[#allocation7 + $0x7c] sm:$0xf]
        %v5717 = vld [vmem:[#allocation7 + $0x80] sm:$0xf]
        %v5718 = vld [vmem:[#allocation7 + $0x84] sm:$0xf]
        %v5719 = vld [vmem:[#allocation7 + $0x88] sm:$0xf]
        %v5720 = vld [vmem:[#allocation7 + $0x8c] sm:$0xf]
        %v5721 = vld [vmem:[#allocation7 + $0x90] sm:$0xf]
        %v5722 = vld [vmem:[#allocation7 + $0x94] sm:$0xf]
        %v5723 = vld [vmem:[#allocation7 + $0x98] sm:$0xf]
        %v5724 = vld [vmem:[#allocation7 + $0x9c] sm:$0xf]
        %v5725 = vld [vmem:[#allocation7 + $0xa0] sm:$0xf]
        %v5726 = vld [vmem:[#allocation7 + $0xa4] sm:$0xf]
        %v5727 = vld [vmem:[#allocation7 + $0xa8] sm:$0xf]
        %v5728 = vld [vmem:[#allocation7 + $0xac] sm:$0xf]
        %v5729 = vld [vmem:[#allocation7 + $0xb0] sm:$0xf]
        %v5730 = vld [vmem:[#allocation7 + $0xb4] sm:$0xf]
        %v5731 = vld [vmem:[#allocation7 + $0xb8] sm:$0xf]
        %v5732 = vld [vmem:[#allocation7 + $0xbc] sm:$0xf]
        %v5733 = vld [vmem:[#allocation7 + $0xc0] sm:$0xf]
        %v5734 = vld [vmem:[#allocation7 + $0xc4] sm:$0xf]
        %v5735 = vld [vmem:[#allocation7 + $0xc8] sm:$0xf]
        %v5736 = vld [vmem:[#allocation7 + $0xcc] sm:$0xf]
        %v5737 = vld [vmem:[#allocation7 + $0xd0] sm:$0xf]
        %v5738 = vld [vmem:[#allocation7 + $0xd4] sm:$0xf]
        %v5739 = vld [vmem:[#allocation7 + $0xd8] sm:$0xf]
        %v5740 = vld [vmem:[#allocation7 + $0xdc] sm:$0xf]
        %v5741 = vld [vmem:[#allocation7 + $0xe0] sm:$0xf]
        %v5742 = vld [vmem:[#allocation7 + $0xe4] sm:$0xf]
        %v5743 = vld [vmem:[#allocation7 + $0xe8] sm:$0xf]
        %v5744 = vld [vmem:[#allocation7 + $0xec] sm:$0xf]
        %v5745 = vld [vmem:[#allocation7 + $0xf0] sm:$0xf]
        %v5746 = vld [vmem:[#allocation7 + $0xf4] sm:$0xf]
        %v5747 = vld [vmem:[#allocation7 + $0xf8] sm:$0xf]
        %v5748 = vld [vmem:[#allocation7 + $0xfc] sm:$0xf]
        %v5749 = vld [vmem:[#allocation9] sm:$0x1]
        %v5751 = vlaneseq
        %v5752 = vshrl.u32 %v5751, 7
        %v5753 = vsub.s32 0, %v5752
        %v5754 = vrot.slane %v5749, %v5753
        %v5820 = vunpack.c.l.b16 %v5685
        %v5821 = vunpack.c.l.b16 %v5686
        %v5822 = vunpack.c.l.b16 %v5687
        %v5823 = vunpack.c.l.b16 %v5688
        %v5824 = vunpack.c.l.b16 %v5689
        %v5825 = vunpack.c.l.b16 %v5690
        %v5826 = vunpack.c.l.b16 %v5691
        %v5827 = vunpack.c.l.b16 %v5692
        %v5828 = vunpack.c.l.b16 %v5693
        %v5829 = vunpack.c.l.b16 %v5694
        %v5830 = vunpack.c.l.b16 %v5695
        %v5831 = vunpack.c.l.b16 %v5696
        %v5832 = vunpack.c.l.b16 %v5697
        %v5833 = vunpack.c.l.b16 %v5698
        %v5834 = vunpack.c.l.b16 %v5699
        %v5835 = vunpack.c.l.b16 %v5700
        %v5836 = vunpack.c.l.b16 %v5701
        %v5837 = vunpack.c.l.b16 %v5702
        %v5838 = vunpack.c.l.b16 %v5703
        %v5839 = vunpack.c.l.b16 %v5704
        %v5840 = vunpack.c.l.b16 %v5705
        %v5841 = vunpack.c.l.b16 %v5706
        %v5842 = vunpack.c.l.b16 %v5707
        %v5843 = vunpack.c.l.b16 %v5708
        %v5844 = vunpack.c.l.b16 %v5709
        %v5845 = vunpack.c.l.b16 %v5710
        %v5846 = vunpack.c.l.b16 %v5711
        %v5847 = vunpack.c.l.b16 %v5712
        %v5848 = vunpack.c.l.b16 %v5713
        %v5849 = vunpack.c.l.b16 %v5714
        %v5850 = vunpack.c.l.b16 %v5715
        %v5851 = vunpack.c.l.b16 %v5716
        %v5852 = vunpack.c.l.b16 %v5717
        %v5853 = vunpack.c.l.b16 %v5718
        %v5854 = vunpack.c.l.b16 %v5719
        %v5855 = vunpack.c.l.b16 %v5720
        %v5856 = vunpack.c.l.b16 %v5721
        %v5857 = vunpack.c.l.b16 %v5722
        %v5858 = vunpack.c.l.b16 %v5723
        %v5859 = vunpack.c.l.b16 %v5724
        %v5860 = vunpack.c.l.b16 %v5725
        %v5861 = vunpack.c.l.b16 %v5726
        %v5862 = vunpack.c.l.b16 %v5727
        %v5863 = vunpack.c.l.b16 %v5728
        %v5864 = vunpack.c.l.b16 %v5729
        %v5865 = vunpack.c.l.b16 %v5730
        %v5866 = vunpack.c.l.b16 %v5731
        %v5867 = vunpack.c.l.b16 %v5732
        %v5868 = vunpack.c.l.b16 %v5733
        %v5869 = vunpack.c.l.b16 %v5734
        %v5870 = vunpack.c.l.b16 %v5735
        %v5871 = vunpack.c.l.b16 %v5736
        %v5872 = vunpack.c.l.b16 %v5737
        %v5873 = vunpack.c.l.b16 %v5738
        %v5874 = vunpack.c.l.b16 %v5739
        %v5875 = vunpack.c.l.b16 %v5740
        %v5876 = vunpack.c.l.b16 %v5741
        %v5877 = vunpack.c.l.b16 %v5742
        %v5878 = vunpack.c.l.b16 %v5743
        %v5879 = vunpack.c.l.b16 %v5744
        %v5880 = vunpack.c.l.b16 %v5745
        %v5881 = vunpack.c.l.b16 %v5746
        %v5882 = vunpack.c.l.b16 %v5747
        %v5883 = vunpack.c.l.b16 %v5748
        %v5884 = vpack.c.b16 %v5821, %v5820
        %v5885 = vpack.c.b16 %v5823, %v5822
        %v5886 = vpack.c.b16 %v5825, %v5824
        %v5887 = vpack.c.b16 %v5827, %v5826
        %v5888 = vpack.c.b16 %v5829, %v5828
        %v5889 = vpack.c.b16 %v5831, %v5830
        %v5890 = vpack.c.b16 %v5833, %v5832
        %v5891 = vpack.c.b16 %v5835, %v5834
        %v5892 = vpack.c.b16 %v5837, %v5836
        %v5893 = vpack.c.b16 %v5839, %v5838
        %v5894 = vpack.c.b16 %v5841, %v5840
        %v5895 = vpack.c.b16 %v5843, %v5842
        %v5896 = vpack.c.b16 %v5845, %v5844
        %v5897 = vpack.c.b16 %v5847, %v5846
        %v5898 = vpack.c.b16 %v5849, %v5848
        %v5899 = vpack.c.b16 %v5851, %v5850
        %v5900 = vpack.c.b16 %v5853, %v5852
        %v5901 = vpack.c.b16 %v5855, %v5854
        %v5902 = vpack.c.b16 %v5857, %v5856
        %v5903 = vpack.c.b16 %v5859, %v5858
        %v5904 = vpack.c.b16 %v5861, %v5860
        %v5905 = vpack.c.b16 %v5863, %v5862
        %v5906 = vpack.c.b16 %v5865, %v5864
        %v5907 = vpack.c.b16 %v5867, %v5866
        %v5908 = vpack.c.b16 %v5869, %v5868
        %v5909 = vpack.c.b16 %v5871, %v5870
        %v5910 = vpack.c.b16 %v5873, %v5872
        %v5911 = vpack.c.b16 %v5875, %v5874
        %v5912 = vpack.c.b16 %v5877, %v5876
        %v5913 = vpack.c.b16 %v5879, %v5878
        %v5914 = vpack.c.b16 %v5881, %v5880
        %v5915 = vpack.c.b16 %v5883, %v5882
        %5948 = vmatprep.subr.bf16.mxu0 0
        %5949 = vmatpush1.bf16.msra.mxu0 %v5891
        %5950 = vmatprep.subr.bf16.mxu0 0
        %5951 = vmatpush1.bf16.msra.mxu0 %v5890
        %5952 = vmatprep.subr.bf16.mxu0 0
        %5953 = vmatpush1.bf16.msra.mxu0 %v5889
        %5954 = vmatprep.subr.bf16.mxu0 0
        %5955 = vmatpush1.bf16.msra.mxu0 %v5888
        %5956 = vmatprep.subr.bf16.mxu0 0
        %5957 = vmatpush1.bf16.msra.mxu0 %v5887
        %5958 = vmatprep.subr.bf16.mxu0 0
        %5959 = vmatpush1.bf16.msra.mxu0 %v5886
        %5960 = vmatprep.subr.bf16.mxu0 0
        %5961 = vmatpush1.bf16.msra.mxu0 %v5885
        %5962 = vmatprep.subr.bf16.mxu0 0
        %5963 = vmatpush1.bf16.msra.mxu0 %v5884
        %5964 = vmatprep.subr.bf16.mxu0 0
        %5965 = vmatpush2.bf16.msra.mxu0 %v5899
        %5966 = vmatprep.subr.bf16.mxu0 0
        %5967 = vmatpush2.bf16.msra.mxu0 %v5898
        %5968 = vmatprep.subr.bf16.mxu0 0
        %5969 = vmatpush2.bf16.msra.mxu0 %v5897
        %5970 = vmatprep.subr.bf16.mxu0 0
        %5971 = vmatpush2.bf16.msra.mxu0 %v5896
        %5972 = vmatprep.subr.bf16.mxu0 0
        %5973 = vmatpush2.bf16.msra.mxu0 %v5895
        %5974 = vmatprep.subr.bf16.mxu0 0
        %5975 = vmatpush2.bf16.msra.mxu0 %v5894
        %5976 = vmatprep.subr.bf16.mxu0 0
        %5977 = vmatpush2.bf16.msra.mxu0 %v5893
        %5978 = vmatprep.subr.bf16.mxu0 0
        %5979 = vmatpush2.bf16.msra.mxu0 %v5892
        %5980 = vmatprep.mubr.bf16.mxu0 %v5654
        %5981 = vmatmul.mubr.bf16.gmra.mxu0 %v5653
        %v5982 = vpop.f32.mrf.mxu0
        %v5983 = vadd.f32 %v5754, %v5982
        %v5984 = vpop.f32.mrf.mxu0
        %v5985 = vpop.f32.mrf.mxu0
        %v5986 = vadd.f32 %v5754, %v5985
        %v5987 = vpop.f32.mrf.mxu0
        %5988 = vmatprep.mubr.bf16.mxu0 %v5658
        %5989 = vmatmul.mubr.bf16.gmra.mxu0 %v5657
        %v5990 = vpop.f32.mrf.mxu0
        %v5991 = vadd.f32 %v5754, %v5990
        %v5992 = vpop.f32.mrf.mxu0
        %v5993 = vpop.f32.mrf.mxu0
        %v5994 = vadd.f32 %v5754, %v5993
        %v5995 = vpop.f32.mrf.mxu0
        %5996 = vmatprep.mubr.bf16.mxu0 %v5662
        %5997 = vmatmul.mubr.bf16.gmra.mxu0 %v5661
        %v5998 = vpop.f32.mrf.mxu0
        %v5999 = vadd.f32 %v5754, %v5998
        %v6000 = vpop.f32.mrf.mxu0
        %v6001 = vpop.f32.mrf.mxu0
        %v6002 = vadd.f32 %v5754, %v6001
        %v6003 = vpop.f32.mrf.mxu0
        %6004 = vmatprep.mubr.bf16.mxu0 %v5666
        %6005 = vmatmul.mubr.bf16.gmra.mxu0 %v5665
        %v6006 = vpop.f32.mrf.mxu0
        %v6007 = vadd.f32 %v5754, %v6006
        %v6008 = vpop.f32.mrf.mxu0
        %v6009 = vpop.f32.mrf.mxu0
        %v6010 = vadd.f32 %v5754, %v6009
        %v6011 = vpop.f32.mrf.mxu0
        %6012 = vmatprep.mubr.bf16.mxu0 %v5670
        %6013 = vmatmul.mubr.bf16.gmra.mxu0 %v5669
        %v6014 = vpop.f32.mrf.mxu0
        %v6015 = vadd.f32 %v5754, %v6014
        %v6016 = vpop.f32.mrf.mxu0
        %v6017 = vpop.f32.mrf.mxu0
        %v6018 = vadd.f32 %v5754, %v6017
        %v6019 = vpop.f32.mrf.mxu0
        %6020 = vmatprep.mubr.bf16.mxu0 %v5674
        %6021 = vmatmul.mubr.bf16.gmra.mxu0 %v5673
        %v6022 = vpop.f32.mrf.mxu0
        %v6023 = vadd.f32 %v5754, %v6022
        %v6024 = vpop.f32.mrf.mxu0
        %v6025 = vpop.f32.mrf.mxu0
        %v6026 = vadd.f32 %v5754, %v6025
        %v6027 = vpop.f32.mrf.mxu0
        %6028 = vmatprep.mubr.bf16.mxu0 %v5678
        %6029 = vmatmul.mubr.bf16.gmra.mxu0 %v5677
        %v6030 = vpop.f32.mrf.mxu0
        %v6031 = vadd.f32 %v5754, %v6030
        %v6032 = vpop.f32.mrf.mxu0
        %v6033 = vpop.f32.mrf.mxu0
        %v6034 = vadd.f32 %v5754, %v6033
        %v6035 = vpop.f32.mrf.mxu0
        %6036 = vmatprep.mubr.bf16.mxu0 %v5682
        %6037 = vmatmul.mubr.bf16.gmra.mxu0 %v5681
        %v6038 = vpop.f32.mrf.mxu0
        %v6039 = vadd.f32 %v5754, %v6038
        %v6040 = vpop.f32.mrf.mxu0
        %v6041 = vpop.f32.mrf.mxu0
        %v6042 = vadd.f32 %v5754, %v6041
        %v6043 = vpop.f32.mrf.mxu0
        %6044 = vdwg.mxu0
        %6045 = vmatprep.subr.bf16.mxu0 0
        %6046 = vmatpush1.bf16.msra.mxu0 %v5907
        %6047 = vmatprep.subr.bf16.mxu0 0
        %6048 = vmatpush1.bf16.msra.mxu0 %v5906
        %6049 = vmatprep.subr.bf16.mxu0 0
        %6050 = vmatpush1.bf16.msra.mxu0 %v5905
        %6051 = vmatprep.subr.bf16.mxu0 0
        %6052 = vmatpush1.bf16.msra.mxu0 %v5904
        %6053 = vmatprep.subr.bf16.mxu0 0
        %6054 = vmatpush1.bf16.msra.mxu0 %v5903
        %6055 = vmatprep.subr.bf16.mxu0 0
        %6056 = vmatpush1.bf16.msra.mxu0 %v5902
        %6057 = vmatprep.subr.bf16.mxu0 0
        %6058 = vmatpush1.bf16.msra.mxu0 %v5901
        %6059 = vmatprep.subr.bf16.mxu0 0
        %6060 = vmatpush1.bf16.msra.mxu0 %v5900
        %6061 = vmatprep.subr.bf16.mxu0 0
        %6062 = vmatpush2.bf16.msra.mxu0 %v5915
        %6063 = vmatprep.subr.bf16.mxu0 0
        %6064 = vmatpush2.bf16.msra.mxu0 %v5914
        %6065 = vmatprep.subr.bf16.mxu0 0
        %6066 = vmatpush2.bf16.msra.mxu0 %v5913
        %6067 = vmatprep.subr.bf16.mxu0 0
        %6068 = vmatpush2.bf16.msra.mxu0 %v5912
        %6069 = vmatprep.subr.bf16.mxu0 0
        %6070 = vmatpush2.bf16.msra.mxu0 %v5911
        %6071 = vmatprep.subr.bf16.mxu0 0
        %6072 = vmatpush2.bf16.msra.mxu0 %v5910
        %6073 = vmatprep.subr.bf16.mxu0 0
        %6074 = vmatpush2.bf16.msra.mxu0 %v5909
        %6075 = vmatprep.subr.bf16.mxu0 0
        %6076 = vmatpush2.bf16.msra.mxu0 %v5908
        %6077 = vmatprep.mubr.bf16.mxu0 %v5656
        %6078 = vmatmul.mubr.bf16.gmra.mxu0 %v5655
        %v6079 = vpop.f32.mrf.mxu0
        %v6080 = vadd.f32 %v5983, %v6079
        %v6081 = vpop.f32.mrf.mxu0
        %v6082 = vpop.f32.mrf.mxu0
        %v6083 = vadd.f32 %v5986, %v6082
        %v6084 = vpop.f32.mrf.mxu0
        %6085 = vmatprep.mubr.bf16.mxu0 %v5660
        %6086 = vmatmul.mubr.bf16.gmra.mxu0 %v5659
        %v6087 = vpop.f32.mrf.mxu0
        %v6088 = vadd.f32 %v5991, %v6087
        %v6089 = vpop.f32.mrf.mxu0
        %v6090 = vpop.f32.mrf.mxu0
        %v6091 = vadd.f32 %v5994, %v6090
        %v6092 = vpop.f32.mrf.mxu0
        %6093 = vmatprep.mubr.bf16.mxu0 %v5664
        %6094 = vmatmul.mubr.bf16.gmra.mxu0 %v5663
        %v6095 = vpop.f32.mrf.mxu0
        %v6096 = vadd.f32 %v5999, %v6095
        %v6097 = vpop.f32.mrf.mxu0
        %v6098 = vpop.f32.mrf.mxu0
        %v6099 = vadd.f32 %v6002, %v6098
        %v6100 = vpop.f32.mrf.mxu0
        %6101 = vmatprep.mubr.bf16.mxu0 %v5668
        %6102 = vmatmul.mubr.bf16.gmra.mxu0 %v5667
        %v6103 = vpop.f32.mrf.mxu0
        %v6104 = vadd.f32 %v6007, %v6103
        %v6105 = vpop.f32.mrf.mxu0
        %v6106 = vpop.f32.mrf.mxu0
        %v6107 = vadd.f32 %v6010, %v6106
        %v6108 = vpop.f32.mrf.mxu0
        %6109 = vmatprep.mubr.bf16.mxu0 %v5672
        %6110 = vmatmul.mubr.bf16.gmra.mxu0 %v5671
        %v6111 = vpop.f32.mrf.mxu0
        %v6112 = vadd.f32 %v6015, %v6111
        %v6113 = vpop.f32.mrf.mxu0
        %v6114 = vpop.f32.mrf.mxu0
        %v6115 = vadd.f32 %v6018, %v6114
        %v6116 = vpop.f32.mrf.mxu0
        %6117 = vmatprep.mubr.bf16.mxu0 %v5676
        %6118 = vmatmul.mubr.bf16.gmra.mxu0 %v5675
        %v6119 = vpop.f32.mrf.mxu0
        %v6120 = vadd.f32 %v6023, %v6119
        %v6121 = vpop.f32.mrf.mxu0
        %v6122 = vpop.f32.mrf.mxu0
        %v6123 = vadd.f32 %v6026, %v6122
        %v6124 = vpop.f32.mrf.mxu0
        %6125 = vmatprep.mubr.bf16.mxu0 %v5680
        %6126 = vmatmul.mubr.bf16.gmra.mxu0 %v5679
        %v6127 = vpop.f32.mrf.mxu0
        %v6128 = vadd.f32 %v6031, %v6127
        %v6129 = vpop.f32.mrf.mxu0
        %v6130 = vpop.f32.mrf.mxu0
        %v6131 = vadd.f32 %v6034, %v6130
        %v6132 = vpop.f32.mrf.mxu0
        %6133 = vmatprep.mubr.bf16.mxu0 %v5684
        %6134 = vmatmul.mubr.bf16.gmra.mxu0 %v5683
        %v6135 = vpop.f32.mrf.mxu0
        %v6136 = vadd.f32 %v6039, %v6135
        %v6137 = vpop.f32.mrf.mxu0
        %v6138 = vpop.f32.mrf.mxu0
        %v6139 = vadd.f32 %v6042, %v6138
        %v6140 = vpop.f32.mrf.mxu0
        %6141 = vdwg.mxu0
        %6142 = vst [vmem:[%s300] sm:$0xff] %v6080
        %6143 = vst [vmem:[%s300 + $0x8] sm:$0xff] %v6083
        %6144 = vst [vmem:[%s300 + $0x10] sm:$0xff] %v6088
        %6145 = vst [vmem:[%s300 + $0x18] sm:$0xff] %v6091
        %6146 = vst [vmem:[%s300 + $0x20] sm:$0xff] %v6096
        %6147 = vst [vmem:[%s300 + $0x28] sm:$0xff] %v6099
        %6148 = vst [vmem:[%s300 + $0x30] sm:$0xff] %v6104
        %6149 = vst [vmem:[%s300 + $0x38] sm:$0xff] %v6107
        %6150 = vst [vmem:[%s300 + $0x40] sm:$0xff] %v6112
        %6151 = vst [vmem:[%s300 + $0x48] sm:$0xff] %v6115
        %6152 = vst [vmem:[%s300 + $0x50] sm:$0xff] %v6120
        %6153 = vst [vmem:[%s300 + $0x58] sm:$0xff] %v6123
        %6154 = vst [vmem:[%s300 + $0x60] sm:$0xff] %v6128
        %6155 = vst [vmem:[%s300 + $0x68] sm:$0xff] %v6131
        %6156 = vst [vmem:[%s300 + $0x70] sm:$0xff] %v6136
        %6157 = vst [vmem:[%s300 + $0x78] sm:$0xff] %v6139
        %s6158 = smul.u32 16, %s21
        %p6159 = scmp.lt.s32.totalorder %s6158, 63
        %s6160 = scalar_select %p6159, %s6158, 63
        %s6161 = smul.addr %s6160, 8
        %s6162 = scalar_lea.vmem %s5, %s6161
        // Predicated region
        $region61: #{diversifying_mlp_forward.1} parent=39 // pred_check
          %p6163 = pneg %p149
        $region62: #{diversifying_mlp_forward.1} parent=39 // pred_check_branch
          %6165 = sbr.rel (%p6163) target = $region64
        $region63: #{diversifying_mlp_forward.1} parent=39 // pred_region
          %s6166 = smul.u32 16, %s21
        $region64: #{diversifying_mlp_forward.1} parent=39 // pred_fallthru
          _
      $region40: #{diversifying_mlp_forward.1} parent=5 // pred_fallthru
        _
      %p6167 = scmp.le.s32.totalorder 2, %s16
      // Predicated region
      $region65: #{diversifying_mlp_forward.1} parent=5 // pred_check
        %p6168 = pneg %p6167
      $region66: #{diversifying_mlp_forward.1} parent=5 // pred_check_branch
        %6170 = sbr.rel (%p6168) target = $region68
      $region67: #{diversifying_mlp_forward.1} parent=5 // pred_region
        %s6171 = ssub.s32 %s16, 2
        // Predicated region
        $region69: #{diversifying_mlp_forward.1} parent=67 // pred_check
          %p6172 = pneg %p155
        $region70: #{diversifying_mlp_forward.1} parent=67 // pred_check_branch
          %6174 = sbr.rel (%p6172) target = $region72
        $region71: #{diversifying_mlp_forward.1} parent=67 // pred_region
          %s6175 = smul.u32 16, %s22
          %p6176 = scmp.lt.s32.totalorder %s6175, 63
          %s6177 = scalar_select %p6176, %s6175, 63
          %s6178 = smul.addr %s6177, 8
          %s6179 = scalar_lea.vmem %s5, %s6178
        $region72: #{diversifying_mlp_forward.1} parent=67 // pred_fallthru
          _
      $region68: #{diversifying_mlp_forward.1} parent=5 // pred_fallthru
        _
    $region6: #{diversifying_mlp_forward.1} parent=1 // loop_footer
      %s20 = sadd.s32 1, %s16
    $region7: #{diversifying_mlp_forward.1} parent=1 // loop_footer_branch
      %15 = sbr.rel target = $region3
    $region8: #{diversifying_mlp_forward.1} parent=1 // loop_exit
      _
    %6180 = vsyncpa [#allocation3], 1
    %s6181 = scalar_lea.sflag [#allocation3], 1
    %6182 = vsyncpa %s6181, 1
    %6183 = vsyncpa [#allocation5], 1
    %6184 = vsyncpa [#allocation8], 1

</llo_original>
